<compile_context>
chip_gen: v7x
topology: tpu7x:2x2x1
jax: 0.10.0
libtpu: 0.0.40
codegen_flags: <defaults>
</compile_context>

<pallas_src>
import math

import jax
import jax.numpy as jnp
from jax import lax
from jax.experimental import pallas as pl
from jax.experimental.pallas import tpu as pltpu


def _make_kernel(S, D, H, DFF, eps, dff_chunk, compute_dtype):
    DK = D // H
    inv_sqrt_dk = 1.0 / math.sqrt(DK)
    cdt = compute_dtype

    def kernel(x_ref, mask_ref, wqkv_ref, bqkv_ref, wo_ref, bo_ref,
               w1_ref, b1_ref, w2_ref, b2_ref, out_ref, ctx_ref, ff_ref):
        x_f32 = x_ref[...].astype(jnp.float32)                      # (S, D)

        # Additive attention-mask bias, computed ONCE per grid step (hoisted out of the
        # head loop): 0 where attended, -1e9 where masked.  (1, S), broadcast over queries.
        bias = jnp.where(mask_ref[...] == 0.0,
                         jnp.float32(-1e9), jnp.float32(0.0))

        def layer_norm(v):
            # torch.std semantics (unbiased, divisor D-1).  Exact divide -- the perf review
            # flagged the approximate reciprocal here as the main accuracy risk.
            mean = jnp.mean(v, axis=-1, keepdims=True)
            var = jnp.sum((v - mean) * (v - mean), axis=-1, keepdims=True) * (1.0 / (D - 1))
            return (v - mean) / (jnp.sqrt(var) + eps)

        # ---- sublayer 0: multi-head self-attention on LayerNorm(x) ----
        ln1 = layer_norm(x_f32).astype(cdt)
        qkv = jnp.dot(ln1, wqkv_ref[...], preferred_element_type=jnp.float32) + bqkv_ref[...]
        qkv = qkv.astype(cdt)                                        # (S, 3D) fused Q|K|V

        for h in range(H):
            lo = h * DK
            q_h = qkv[:, lo:lo + DK]                                 # (S, DK)
            k_h = qkv[:, D + lo:D + lo + DK]
            v_h = qkv[:, 2 * D + lo:2 * D + lo + DK]
            # q @ k^T without an explicit transpose (contract last dims on the MXU).
            s = lax.dot_general(q_h, k_h, (((1,), (1,)), ((), ())),
                                preferred_element_type=jnp.float32)
            s = s * inv_sqrt_dk + bias                               # (S, S) f32
            m = jnp.max(s, axis=-1, keepdims=True)
            e = jnp.exp(s - m)
            # Approximate reciprocal is fine here: only scales the softmax weights.
            p = e * pl.reciprocal(jnp.sum(e, axis=-1, keepdims=True), approx=True)
            head = jnp.dot(p.astype(cdt), v_h, preferred_element_type=jnp.float32)  # (S, DK)
            # Park this head at its lane offset -> ONE wide output projection afterwards
            # instead of H narrow DK-wide contractions (poor MXU utilization on v6e/v7x).
            ctx_ref[:, lo:lo + DK] = head

        attn = (jnp.dot(ctx_ref[...].astype(cdt), wo_ref[...],
                        preferred_element_type=jnp.float32) + bo_ref[...])
        x1 = x_f32 + attn                                            # residual (dropout = identity)

        # ---- sublayer 1: position-wise FFN on LayerNorm(x1), tiled over DFF ----
        ln2 = layer_norm(x1).astype(cdt)
        ff_ref[...] = jnp.zeros_like(ff_ref)
        for c0 in range(0, DFF, dff_chunk):
            c1 = c0 + dff_chunk
            h1 = (jnp.dot(ln2, w1_ref[:, c0:c1], preferred_element_type=jnp.float32)
                  + b1_ref[:, c0:c1])
            h1 = jnp.maximum(h1, 0.0).astype(cdt)                    # relu in f32, cast at dot
            ff_ref[...] += jnp.dot(h1, w2_ref[c0:c1, :], preferred_element_type=jnp.float32)

        out_ref[...] = (x1 + ff_ref[...] + b2_ref[...]).astype(out_ref.dtype)

    return kernel


def _vmem_limit_bytes():
    # Raise the scoped VMEM limit to ~75% of physical (96 MiB on v5e/v6e, 48 MiB on v7x).
    try:
        cap = pltpu.get_tpu_info().vmem_capacity_bytes
        return int(cap) * 3 // 4
    except Exception:
        return None


def _pick_dff_chunk(dff, requested):
    # Non-ragged, 128-aligned chunks (perf review); otherwise fall back to a single chunk.
    if dff <= requested:
        return dff
    for c in (requested, 1024, 512, 256, 128):
        if c <= dff and c % 128 == 0 and dff % c == 0:
            return c
    return dff


def encoder_layer(x, mask, params, *, heads, eps=1e-6, dff_chunk=512,
                  compute_dtype=jnp.bfloat16, single_buffer_weights=True):
    B, S, D = x.shape
    DFF = params["w1"].shape[1]
    out_dtype = x.dtype
    cdt = jnp.dtype(compute_dtype) if compute_dtype is not None else jnp.dtype(x.dtype)

    # Pack Q|K|V weights in the wrapper so the kernel runs one fused projection matmul.
    # Matmul operands (weights) are stored in the compute dtype (bf16 by default);
    # biases stay f32 because they are added to f32 accumulators.
    wqkv = jnp.concatenate([params["wq"], params["wk"], params["wv"]], axis=1).astype(cdt)
    bqkv = jnp.concatenate([params["bq"], params["bk"], params["bv"]], axis=1).astype(jnp.float32)
    wo, bo = params["wo"].astype(cdt), params["bo"].astype(jnp.float32)
    w1, b1 = params["w1"].astype(cdt), params["b1"].astype(jnp.float32)
    w2, b2 = params["w2"].astype(cdt), params["b2"].astype(jnp.float32)

    chunk = _pick_dff_chunk(DFF, dff_chunk)
    kernel = _make_kernel(S, D, heads, DFF, eps, chunk, cdt)

    # Advisory cost estimate so XLA can schedule the wrapper's concatenate/casts around us.
    flops = 2 * B * S * (4 * D * D + 2 * S * D + 2 * D * DFF)
    transcendentals = B * heads * S * S
    bytes_accessed = int(
        B * S * D * jnp.dtype(x.dtype).itemsize            # x in
        + B * S * D * jnp.dtype(out_dtype).itemsize        # out
        + B * S * 4                                         # mask (f32)
        + (wqkv.size + wo.size + w1.size + w2.size) * cdt.itemsize
        + (bqkv.size + bo.size + b1.size + b2.size) * 4)
    cost = pl.CostEstimate(flops=flops, transcendentals=transcendentals,
                           bytes_accessed=bytes_accessed)

    def _call(weight_pipeline_mode):
        def wspec(r, c):
            # Invariant weights: constant index_map; single-buffer when supported.
            if weight_pipeline_mode is None:
                return pl.BlockSpec((r, c), lambda b: (0, 0))
            return pl.BlockSpec((r, c), lambda b: (0, 0),
                                pipeline_mode=weight_pipeline_mode)

        grid_spec = pltpu.PrefetchScalarGridSpec(
            num_scalar_prefetch=0,
            grid=(B,),
            in_specs=[
                pl.BlockSpec((None, S, D), lambda b: (b, 0, 0)),   # x    -> kernel sees (S, D)
                pl.BlockSpec((None, 1, S), lambda b: (b, 0, 0)),   # mask -> kernel sees (1, S)
                wspec(D, 3 * D), wspec(1, 3 * D),                  # wqkv, bqkv
                wspec(D, D), wspec(1, D),                          # wo, bo
                wspec(D, DFF), wspec(1, DFF),                      # w1, b1
                wspec(DFF, D), wspec(1, D),                        # w2, b2
            ],
            out_specs=pl.BlockSpec((None, S, D), lambda b: (b, 0, 0)),
            scratch_shapes=[pltpu.VMEM((S, D), jnp.float32),       # per-head context slab
                            pltpu.VMEM((S, D), jnp.float32)],      # FFN accumulator
        )

        cp_kwargs = dict(dimension_semantics=("parallel",))
        vlim = _vmem_limit_bytes()
        if vlim is not None:
            cp_kwargs["vmem_limit_bytes"] = vlim

        return pl.pallas_call(
            kernel,
            out_shape=jax.ShapeDtypeStruct((B, S, D), out_dtype),
            grid_spec=grid_spec,
            compiler_params=pltpu.CompilerParams(**cp_kwargs),
            cost_estimate=cost,
        )(x, mask.astype(jnp.float32), wqkv, bqkv, wo, bo, w1, b1, w2, b2)

    if single_buffer_weights:
        try:
            return _call(pl.Buffered(1))
        except Exception:
            pass  # Buffered(1) not supported on this JAX build -> default double-buffering.
    return _call(None)


# -------- pure-JAX reference (same math, exact division) for a sanity check --------
def encoder_layer_ref(x, mask, params, *, heads, eps=1e-6):
    B, S, D = x.shape
    DK = D // heads

    def layer_norm(v):
        mean = jnp.mean(v, axis=-1, keepdims=True)
        var = jnp.sum((v - mean) ** 2, axis=-1, keepdims=True) / (D - 1)
        return (v - mean) / (jnp.sqrt(var) + eps)

    ln1 = layer_norm(x)
    q = ln1 @ params["wq"] + params["bq"]
    k = ln1 @ params["wk"] + params["bk"]
    v = ln1 @ params["wv"] + params["bv"]
    q = q.reshape(B, S, heads, DK).transpose(0, 2, 1, 3)
    k = k.reshape(B, S, heads, DK).transpose(0, 2, 1, 3)
    v = v.reshape(B, S, heads, DK).transpose(0, 2, 1, 3)
    scores = jnp.einsum("bhqd,bhkd->bhqk", q, k) / math.sqrt(DK)
    scores = jnp.where(mask[:, None, :, :] == 0, -1e9, scores)
    p = jax.nn.softmax(scores, axis=-1)
    attn = jnp.einsum("bhqk,bhkd->bhqd", p, v).transpose(0, 2, 1, 3).reshape(B, S, D)
    attn = attn @ params["wo"] + params["bo"]
    x1 = x + attn
    ln2 = layer_norm(x1)
    ff = jnp.maximum(ln2 @ params["w1"] + params["b1"], 0.0) @ params["w2"] + params["b2"]
    return x1 + ff


if __name__ == "__main__":
    B, S, D, H, DFF = 2, 8, 32, 4, 64
    key = jax.random.PRNGKey(0)
    ks = jax.random.split(key, 16)

    def lin(kw, kb, fan_in, fan_out):
        bound = 1.0 / math.sqrt(fan_in)
        w = jax.random.uniform(kw, (fan_in, fan_out), jnp.float32, -bound, bound)
        b = jax.random.uniform(kb, (1, fan_out), jnp.float32, -bound, bound)
        return w, b

    wq, bq = lin(ks[0], ks[1], D, D)
    wk, bk = lin(ks[2], ks[3], D, D)
    wv, bv = lin(ks[4], ks[5], D, D)
    wo, bo = lin(ks[6], ks[7], D, D)
    w1, b1 = lin(ks[8], ks[9], D, DFF)
    w2, b2 = lin(ks[10], ks[11], DFF, D)
    params = dict(wq=wq, bq=bq, wk=wk, bk=bk, wv=wv, bv=bv, wo=wo, bo=bo,
                  w1=w1, b1=b1, w2=w2, b2=b2)

    x = jax.random.normal(ks[12], (B, S, D), jnp.float32)
    mask = jnp.ones((B, 1, S), jnp.float32)
    mask = mask.at[1, 0, 6:].set(0.0)   # pad out last two key positions of batch 1

    ref = encoder_layer_ref(x, mask, params, heads=H)

    # 1) exact path (f32 MXU operands): LayerNorm is exact, only softmax denom is approx.
    out_f32 = jax.block_until_ready(
        encoder_layer(x, mask, params, heads=H, compute_dtype=jnp.float32))
    assert out_f32.shape == (B, S, D)
    assert jnp.allclose(out_f32, ref, atol=5e-3, rtol=5e-3), "f32 kernel mismatch vs reference"

    # 2) bf16 MXU-operand path (default, per perf review): f32 accumulation preserved.
    out_bf16 = jax.block_until_ready(
        encoder_layer(x, mask, params, heads=H, compute_dtype=jnp.bfloat16))
    assert out_bf16.shape == (B, S, D)
    assert jnp.allclose(out_bf16, ref, atol=7e-2, rtol=7e-2), "bf16 kernel mismatch vs reference"

    print("KERNEL_OK")
</pallas_src>

<mosaic_0001>
module attributes {stable_mosaic.version = 11 : i64} {
  func.func @kernel(%arg0: i32, %arg1: memref<1x8x32xf32, #tpu.memory_space<vmem>>, %arg2: memref<1x1x8xf32, #tpu.memory_space<vmem>>, %arg3: memref<32x96xf32, #tpu.memory_space<vmem>>, %arg4: memref<1x96xf32, #tpu.memory_space<vmem>>, %arg5: memref<32x32xf32, #tpu.memory_space<vmem>>, %arg6: memref<1x32xf32, #tpu.memory_space<vmem>>, %arg7: memref<32x64xf32, #tpu.memory_space<vmem>>, %arg8: memref<1x64xf32, #tpu.memory_space<vmem>>, %arg9: memref<64x32xf32, #tpu.memory_space<vmem>>, %arg10: memref<1x32xf32, #tpu.memory_space<vmem>>, %arg11: memref<1x8x32xf32, #tpu.memory_space<vmem>>, %arg12: memref<8x32xf32, #tpu.memory_space<vmem>>, %arg13: memref<8x32xf32, #tpu.memory_space<vmem>>) attributes {dimension_semantics = [#tpu.dimension_semantics<parallel>], iteration_bounds = array<i64: 2>, scalar_prefetch = 0 : i64, scratch_operands = 2 : i64, tpu.core_type = #tpu.core_type<tc>, window_params = [{transform_indices = @transform_0, window_bounds = array<i64: 1, 8, 32>}, {transform_indices = @transform_1, window_bounds = array<i64: 1, 1, 8>}, {pipeline_mode = #tpu.pipeline_mode<synchronous>, transform_indices = @transform_2, window_bounds = array<i64: 32, 96>}, {pipeline_mode = #tpu.pipeline_mode<synchronous>, transform_indices = @transform_3, window_bounds = array<i64: 1, 96>}, {pipeline_mode = #tpu.pipeline_mode<synchronous>, transform_indices = @transform_4, window_bounds = array<i64: 32, 32>}, {pipeline_mode = #tpu.pipeline_mode<synchronous>, transform_indices = @transform_5, window_bounds = array<i64: 1, 32>}, {pipeline_mode = #tpu.pipeline_mode<synchronous>, transform_indices = @transform_6, window_bounds = array<i64: 32, 64>}, {pipeline_mode = #tpu.pipeline_mode<synchronous>, transform_indices = @transform_7, window_bounds = array<i64: 1, 64>}, {pipeline_mode = #tpu.pipeline_mode<synchronous>, transform_indices = @transform_8, window_bounds = array<i64: 64, 32>}, {pipeline_mode = #tpu.pipeline_mode<synchronous>, transform_indices = @transform_9, window_bounds = array<i64: 1, 32>}, {transform_indices = @transform_10, window_bounds = array<i64: 1, 8, 32>}]} {
    %c0 = arith.constant 0 : index
    %c0_0 = arith.constant 0 : index
    %c0_1 = arith.constant 0 : index
    %0 = vector.load %arg1[%c0, %c0_0, %c0_1] : memref<1x8x32xf32, #tpu.memory_space<vmem>>, vector<1x8x32xf32>
    %1 = vector.shape_cast %0 : vector<1x8x32xf32> to vector<8x32xf32>
    %c0_2 = arith.constant 0 : index
    %c0_3 = arith.constant 0 : index
    %c0_4 = arith.constant 0 : index
    %2 = vector.load %arg2[%c0_2, %c0_3, %c0_4] : memref<1x1x8xf32, #tpu.memory_space<vmem>>, vector<1x1x8xf32>
    %3 = vector.shape_cast %2 : vector<1x1x8xf32> to vector<1x8xf32>
    %cst = arith.constant 0.000000e+00 : f32
    %4 = vector.broadcast %cst : f32 to vector<1x8xf32>
    %5 = arith.cmpf oeq, %3, %4 : vector<1x8xf32>
    %cst_5 = arith.constant -1.000000e+09 : f32
    %cst_6 = arith.constant 0.000000e+00 : f32
    %6 = vector.broadcast %cst_5 : f32 to vector<1x8xf32>
    %7 = vector.broadcast %cst_6 : f32 to vector<1x8xf32>
    %8 = arith.select %5, %6, %7 : vector<1x8xi1>, vector<1x8xf32>
    %cst_7 = arith.constant dense<0.000000e+00> : vector<8xf32>
    %9 = vector.multi_reduction <add>, %1, %cst_7 [1] : vector<8x32xf32> to vector<8xf32>
    %10 = vector.shape_cast %9 : vector<8xf32> to vector<8x1xf32>
    %cst_8 = arith.constant 3.200000e+01 : f32
    %11 = vector.broadcast %cst_8 : f32 to vector<8x1xf32>
    %12 = arith.divf %10, %11 : vector<8x1xf32>
    %13 = vector.broadcast %12 : vector<8x1xf32> to vector<8x32xf32>
    %14 = arith.subf %1, %13 : vector<8x32xf32>
    %15 = vector.broadcast %12 : vector<8x1xf32> to vector<8x32xf32>
    %16 = arith.subf %1, %15 : vector<8x32xf32>
    %17 = arith.mulf %14, %16 : vector<8x32xf32>
    %cst_9 = arith.constant dense<0.000000e+00> : vector<8xf32>
    %18 = vector.multi_reduction <add>, %17, %cst_9 [1] : vector<8x32xf32> to vector<8xf32>
    %19 = vector.shape_cast %18 : vector<8xf32> to vector<8x1xf32>
    %cst_10 = arith.constant 0.0322580636 : f32
    %20 = vector.broadcast %cst_10 : f32 to vector<8x1xf32>
    %21 = arith.mulf %19, %20 : vector<8x1xf32>
    %22 = vector.broadcast %12 : vector<8x1xf32> to vector<8x32xf32>
    %23 = arith.subf %1, %22 : vector<8x32xf32>
    %24 = math.sqrt %21 : vector<8x1xf32>
    %cst_11 = arith.constant 9.99999997E-7 : f32
    %25 = vector.broadcast %cst_11 : f32 to vector<8x1xf32>
    %26 = arith.addf %24, %25 : vector<8x1xf32>
    %27 = vector.broadcast %26 : vector<8x1xf32> to vector<8x32xf32>
    %28 = arith.divf %23, %27 : vector<8x32xf32>
    %c0_12 = arith.constant 0 : index
    %c0_13 = arith.constant 0 : index
    %29 = vector.load %arg3[%c0_12, %c0_13] : memref<32x96xf32, #tpu.memory_space<vmem>>, vector<32x96xf32>
    %cst_14 = arith.constant dense<0.000000e+00> : vector<8x96xf32>
    %30 = tpu.matmul %28, %29, %cst_14 {dimension_numbers = #tpu.dot_dimension_numbers<[1], [0], [0], [1], [0, 0, 1, 1], [], []>} : vector<8x32xf32>, vector<32x96xf32>, vector<8x96xf32> -> vector<8x96xf32>
    %c0_15 = arith.constant 0 : index
    %c0_16 = arith.constant 0 : index
    %31 = vector.load %arg4[%c0_15, %c0_16] : memref<1x96xf32, #tpu.memory_space<vmem>>, vector<1x96xf32>
    %32 = vector.broadcast %31 : vector<1x96xf32> to vector<8x96xf32>
    %33 = arith.addf %30, %32 : vector<8x96xf32>
    %34 = vector.extract_strided_slice %33 {offsets = [0, 0], sizes = [8, 8], strides = [1, 1]} : vector<8x96xf32> to vector<8x8xf32>
    %35 = vector.extract_strided_slice %33 {offsets = [0, 32], sizes = [8, 8], strides = [1, 1]} : vector<8x96xf32> to vector<8x8xf32>
    %36 = vector.extract_strided_slice %33 {offsets = [0, 64], sizes = [8, 8], strides = [1, 1]} : vector<8x96xf32> to vector<8x8xf32>
    %cst_17 = arith.constant dense<0.000000e+00> : vector<8x8xf32>
    %37 = tpu.matmul %34, %35, %cst_17 {dimension_numbers = #tpu.dot_dimension_numbers<[1], [1], [0], [0], [0, 0, 1, 0], [], []>} : vector<8x8xf32>, vector<8x8xf32>, vector<8x8xf32> -> vector<8x8xf32>
    %cst_18 = arith.constant 0.353553385 : f32
    %38 = vector.broadcast %cst_18 : f32 to vector<8x8xf32>
    %39 = arith.mulf %37, %38 : vector<8x8xf32>
    %40 = vector.broadcast %8 : vector<1x8xf32> to vector<8x8xf32>
    %41 = arith.addf %39, %40 : vector<8x8xf32>
    %cst_19 = arith.constant dense<0xFF800000> : vector<8xf32>
    %42 = vector.multi_reduction <maximumf>, %41, %cst_19 [1] : vector<8x8xf32> to vector<8xf32>
    %43 = vector.shape_cast %42 : vector<8xf32> to vector<8x1xf32>
    %44 = vector.broadcast %43 : vector<8x1xf32> to vector<8x8xf32>
    %45 = arith.subf %41, %44 : vector<8x8xf32>
    %46 = math.exp %45 : vector<8x8xf32>
    %cst_20 = arith.constant dense<0.000000e+00> : vector<8xf32>
    %47 = vector.multi_reduction <add>, %46, %cst_20 [1] : vector<8x8xf32> to vector<8xf32>
    %48 = vector.shape_cast %47 : vector<8xf32> to vector<8x1xf32>
    %49 = tpu.reciprocal %48 {approx = true} : vector<8x1xf32> -> vector<8x1xf32>
    %50 = vector.broadcast %49 : vector<8x1xf32> to vector<8x8xf32>
    %51 = arith.mulf %46, %50 : vector<8x8xf32>
    %cst_21 = arith.constant dense<0.000000e+00> : vector<8x8xf32>
    %52 = tpu.matmul %51, %36, %cst_21 {dimension_numbers = #tpu.dot_dimension_numbers<[1], [0], [0], [1], [0, 0, 1, 1], [], []>} : vector<8x8xf32>, vector<8x8xf32>, vector<8x8xf32> -> vector<8x8xf32>
    %c0_22 = arith.constant 0 : index
    %c0_23 = arith.constant 0 : index
    %53 = vector.load %arg12[%c0_22, %c0_23] : memref<8x32xf32, #tpu.memory_space<vmem>>, vector<8x8xf32>
    tpu.vector_store %arg12[%c0_22, %c0_23], %52 {strides = array<i32>} : memref<8x32xf32, #tpu.memory_space<vmem>>, vector<8x8xf32>,
    %54 = vector.extract_strided_slice %33 {offsets = [0, 8], sizes = [8, 8], strides = [1, 1]} : vector<8x96xf32> to vector<8x8xf32>
    %55 = vector.extract_strided_slice %33 {offsets = [0, 40], sizes = [8, 8], strides = [1, 1]} : vector<8x96xf32> to vector<8x8xf32>
    %56 = vector.extract_strided_slice %33 {offsets = [0, 72], sizes = [8, 8], strides = [1, 1]} : vector<8x96xf32> to vector<8x8xf32>
    %cst_24 = arith.constant dense<0.000000e+00> : vector<8x8xf32>
    %57 = tpu.matmul %54, %55, %cst_24 {dimension_numbers = #tpu.dot_dimension_numbers<[1], [1], [0], [0], [0, 0, 1, 0], [], []>} : vector<8x8xf32>, vector<8x8xf32>, vector<8x8xf32> -> vector<8x8xf32>
    %cst_25 = arith.constant 0.353553385 : f32
    %58 = vector.broadcast %cst_25 : f32 to vector<8x8xf32>
    %59 = arith.mulf %57, %58 : vector<8x8xf32>
    %60 = vector.broadcast %8 : vector<1x8xf32> to vector<8x8xf32>
    %61 = arith.addf %59, %60 : vector<8x8xf32>
    %cst_26 = arith.constant dense<0xFF800000> : vector<8xf32>
    %62 = vector.multi_reduction <maximumf>, %61, %cst_26 [1] : vector<8x8xf32> to vector<8xf32>
    %63 = vector.shape_cast %62 : vector<8xf32> to vector<8x1xf32>
    %64 = vector.broadcast %63 : vector<8x1xf32> to vector<8x8xf32>
    %65 = arith.subf %61, %64 : vector<8x8xf32>
    %66 = math.exp %65 : vector<8x8xf32>
    %cst_27 = arith.constant dense<0.000000e+00> : vector<8xf32>
    %67 = vector.multi_reduction <add>, %66, %cst_27 [1] : vector<8x8xf32> to vector<8xf32>
    %68 = vector.shape_cast %67 : vector<8xf32> to vector<8x1xf32>
    %69 = tpu.reciprocal %68 {approx = true} : vector<8x1xf32> -> vector<8x1xf32>
    %70 = vector.broadcast %69 : vector<8x1xf32> to vector<8x8xf32>
    %71 = arith.mulf %66, %70 : vector<8x8xf32>
    %cst_28 = arith.constant dense<0.000000e+00> : vector<8x8xf32>
    %72 = tpu.matmul %71, %56, %cst_28 {dimension_numbers = #tpu.dot_dimension_numbers<[1], [0], [0], [1], [0, 0, 1, 1], [], []>} : vector<8x8xf32>, vector<8x8xf32>, vector<8x8xf32> -> vector<8x8xf32>
    %c0_29 = arith.constant 0 : index
    %c8 = arith.constant 8 : index
    %73 = vector.load %arg12[%c0_29, %c8] : memref<8x32xf32, #tpu.memory_space<vmem>>, vector<8x8xf32>
    tpu.vector_store %arg12[%c0_29, %c8], %72 {strides = array<i32>} : memref<8x32xf32, #tpu.memory_space<vmem>>, vector<8x8xf32>,
    %74 = vector.extract_strided_slice %33 {offsets = [0, 16], sizes = [8, 8], strides = [1, 1]} : vector<8x96xf32> to vector<8x8xf32>
    %75 = vector.extract_strided_slice %33 {offsets = [0, 48], sizes = [8, 8], strides = [1, 1]} : vector<8x96xf32> to vector<8x8xf32>
    %76 = vector.extract_strided_slice %33 {offsets = [0, 80], sizes = [8, 8], strides = [1, 1]} : vector<8x96xf32> to vector<8x8xf32>
    %cst_30 = arith.constant dense<0.000000e+00> : vector<8x8xf32>
    %77 = tpu.matmul %74, %75, %cst_30 {dimension_numbers = #tpu.dot_dimension_numbers<[1], [1], [0], [0], [0, 0, 1, 0], [], []>} : vector<8x8xf32>, vector<8x8xf32>, vector<8x8xf32> -> vector<8x8xf32>
    %cst_31 = arith.constant 0.353553385 : f32
    %78 = vector.broadcast %cst_31 : f32 to vector<8x8xf32>
    %79 = arith.mulf %77, %78 : vector<8x8xf32>
    %80 = vector.broadcast %8 : vector<1x8xf32> to vector<8x8xf32>
    %81 = arith.addf %79, %80 : vector<8x8xf32>
    %cst_32 = arith.constant dense<0xFF800000> : vector<8xf32>
    %82 = vector.multi_reduction <maximumf>, %81, %cst_32 [1] : vector<8x8xf32> to vector<8xf32>
    %83 = vector.shape_cast %82 : vector<8xf32> to vector<8x1xf32>
    %84 = vector.broadcast %83 : vector<8x1xf32> to vector<8x8xf32>
    %85 = arith.subf %81, %84 : vector<8x8xf32>
    %86 = math.exp %85 : vector<8x8xf32>
    %cst_33 = arith.constant dense<0.000000e+00> : vector<8xf32>
    %87 = vector.multi_reduction <add>, %86, %cst_33 [1] : vector<8x8xf32> to vector<8xf32>
    %88 = vector.shape_cast %87 : vector<8xf32> to vector<8x1xf32>
    %89 = tpu.reciprocal %88 {approx = true} : vector<8x1xf32> -> vector<8x1xf32>
    %90 = vector.broadcast %89 : vector<8x1xf32> to vector<8x8xf32>
    %91 = arith.mulf %86, %90 : vector<8x8xf32>
    %cst_34 = arith.constant dense<0.000000e+00> : vector<8x8xf32>
    %92 = tpu.matmul %91, %76, %cst_34 {dimension_numbers = #tpu.dot_dimension_numbers<[1], [0], [0], [1], [0, 0, 1, 1], [], []>} : vector<8x8xf32>, vector<8x8xf32>, vector<8x8xf32> -> vector<8x8xf32>
    %c0_35 = arith.constant 0 : index
    %c16 = arith.constant 16 : index
    %93 = vector.load %arg12[%c0_35, %c16] : memref<8x32xf32, #tpu.memory_space<vmem>>, vector<8x8xf32>
    tpu.vector_store %arg12[%c0_35, %c16], %92 {strides = array<i32>} : memref<8x32xf32, #tpu.memory_space<vmem>>, vector<8x8xf32>,
    %94 = vector.extract_strided_slice %33 {offsets = [0, 24], sizes = [8, 8], strides = [1, 1]} : vector<8x96xf32> to vector<8x8xf32>
    %95 = vector.extract_strided_slice %33 {offsets = [0, 56], sizes = [8, 8], strides = [1, 1]} : vector<8x96xf32> to vector<8x8xf32>
    %96 = vector.extract_strided_slice %33 {offsets = [0, 88], sizes = [8, 8], strides = [1, 1]} : vector<8x96xf32> to vector<8x8xf32>
    %cst_36 = arith.constant dense<0.000000e+00> : vector<8x8xf32>
    %97 = tpu.matmul %94, %95, %cst_36 {dimension_numbers = #tpu.dot_dimension_numbers<[1], [1], [0], [0], [0, 0, 1, 0], [], []>} : vector<8x8xf32>, vector<8x8xf32>, vector<8x8xf32> -> vector<8x8xf32>
    %cst_37 = arith.constant 0.353553385 : f32
    %98 = vector.broadcast %cst_37 : f32 to vector<8x8xf32>
    %99 = arith.mulf %97, %98 : vector<8x8xf32>
    %100 = vector.broadcast %8 : vector<1x8xf32> to vector<8x8xf32>
    %101 = arith.addf %99, %100 : vector<8x8xf32>
    %cst_38 = arith.constant dense<0xFF800000> : vector<8xf32>
    %102 = vector.multi_reduction <maximumf>, %101, %cst_38 [1] : vector<8x8xf32> to vector<8xf32>
    %103 = vector.shape_cast %102 : vector<8xf32> to vector<8x1xf32>
    %104 = vector.broadcast %103 : vector<8x1xf32> to vector<8x8xf32>
    %105 = arith.subf %101, %104 : vector<8x8xf32>
    %106 = math.exp %105 : vector<8x8xf32>
    %cst_39 = arith.constant dense<0.000000e+00> : vector<8xf32>
    %107 = vector.multi_reduction <add>, %106, %cst_39 [1] : vector<8x8xf32> to vector<8xf32>
    %108 = vector.shape_cast %107 : vector<8xf32> to vector<8x1xf32>
    %109 = tpu.reciprocal %108 {approx = true} : vector<8x1xf32> -> vector<8x1xf32>
    %110 = vector.broadcast %109 : vector<8x1xf32> to vector<8x8xf32>
    %111 = arith.mulf %106, %110 : vector<8x8xf32>
    %cst_40 = arith.constant dense<0.000000e+00> : vector<8x8xf32>
    %112 = tpu.matmul %111, %96, %cst_40 {dimension_numbers = #tpu.dot_dimension_numbers<[1], [0], [0], [1], [0, 0, 1, 1], [], []>} : vector<8x8xf32>, vector<8x8xf32>, vector<8x8xf32> -> vector<8x8xf32>
    %c0_41 = arith.constant 0 : index
    %c24 = arith.constant 24 : index
    %113 = vector.load %arg12[%c0_41, %c24] : memref<8x32xf32, #tpu.memory_space<vmem>>, vector<8x8xf32>
    tpu.vector_store %arg12[%c0_41, %c24], %112 {strides = array<i32>} : memref<8x32xf32, #tpu.memory_space<vmem>>, vector<8x8xf32>,
    %c0_42 = arith.constant 0 : index
    %c0_43 = arith.constant 0 : index
    %114 = vector.load %arg12[%c0_42, %c0_43] : memref<8x32xf32, #tpu.memory_space<vmem>>, vector<8x32xf32>
    %c0_44 = arith.constant 0 : index
    %c0_45 = arith.constant 0 : index
    %115 = vector.load %arg5[%c0_44, %c0_45] : memref<32x32xf32, #tpu.memory_space<vmem>>, vector<32x32xf32>
    %cst_46 = arith.constant dense<0.000000e+00> : vector<8x32xf32>
    %116 = tpu.matmul %114, %115, %cst_46 {dimension_numbers = #tpu.dot_dimension_numbers<[1], [0], [0], [1], [0, 0, 1, 1], [], []>} : vector<8x32xf32>, vector<32x32xf32>, vector<8x32xf32> -> vector<8x32xf32>
    %c0_47 = arith.constant 0 : index
    %c0_48 = arith.constant 0 : index
    %117 = vector.load %arg6[%c0_47, %c0_48] : memref<1x32xf32, #tpu.memory_space<vmem>>, vector<1x32xf32>
    %118 = vector.broadcast %117 : vector<1x32xf32> to vector<8x32xf32>
    %119 = arith.addf %116, %118 : vector<8x32xf32>
    %120 = arith.addf %1, %119 : vector<8x32xf32>
    %cst_49 = arith.constant dense<0.000000e+00> : vector<8xf32>
    %121 = vector.multi_reduction <add>, %120, %cst_49 [1] : vector<8x32xf32> to vector<8xf32>
    %122 = vector.shape_cast %121 : vector<8xf32> to vector<8x1xf32>
    %cst_50 = arith.constant 3.200000e+01 : f32
    %123 = vector.broadcast %cst_50 : f32 to vector<8x1xf32>
    %124 = arith.divf %122, %123 : vector<8x1xf32>
    %125 = vector.broadcast %124 : vector<8x1xf32> to vector<8x32xf32>
    %126 = arith.subf %120, %125 : vector<8x32xf32>
    %127 = vector.broadcast %124 : vector<8x1xf32> to vector<8x32xf32>
    %128 = arith.subf %120, %127 : vector<8x32xf32>
    %129 = arith.mulf %126, %128 : vector<8x32xf32>
    %cst_51 = arith.constant dense<0.000000e+00> : vector<8xf32>
    %130 = vector.multi_reduction <add>, %129, %cst_51 [1] : vector<8x32xf32> to vector<8xf32>
    %131 = vector.shape_cast %130 : vector<8xf32> to vector<8x1xf32>
    %cst_52 = arith.constant 0.0322580636 : f32
    %132 = vector.broadcast %cst_52 : f32 to vector<8x1xf32>
    %133 = arith.mulf %131, %132 : vector<8x1xf32>
    %134 = vector.broadcast %124 : vector<8x1xf32> to vector<8x32xf32>
    %135 = arith.subf %120, %134 : vector<8x32xf32>
    %136 = math.sqrt %133 : vector<8x1xf32>
    %cst_53 = arith.constant 9.99999997E-7 : f32
    %137 = vector.broadcast %cst_53 : f32 to vector<8x1xf32>
    %138 = arith.addf %136, %137 : vector<8x1xf32>
    %139 = vector.broadcast %138 : vector<8x1xf32> to vector<8x32xf32>
    %140 = arith.divf %135, %139 : vector<8x32xf32>
    %cst_54 = arith.constant 0.000000e+00 : f32
    %141 = vector.broadcast %cst_54 : f32 to vector<8x32xf32>
    %c0_55 = arith.constant 0 : index
    %c0_56 = arith.constant 0 : index
    %142 = vector.load %arg13[%c0_55, %c0_56] : memref<8x32xf32, #tpu.memory_space<vmem>>, vector<8x32xf32>
    tpu.vector_store %arg13[%c0_55, %c0_56], %141 {strides = array<i32>} : memref<8x32xf32, #tpu.memory_space<vmem>>, vector<8x32xf32>,
    %c0_57 = arith.constant 0 : index
    %c0_58 = arith.constant 0 : index
    %143 = vector.load %arg7[%c0_57, %c0_58] : memref<32x64xf32, #tpu.memory_space<vmem>>, vector<32x64xf32>
    %cst_59 = arith.constant dense<0.000000e+00> : vector<8x64xf32>
    %144 = tpu.matmul %140, %143, %cst_59 {dimension_numbers = #tpu.dot_dimension_numbers<[1], [0], [0], [1], [0, 0, 1, 1], [], []>} : vector<8x32xf32>, vector<32x64xf32>, vector<8x64xf32> -> vector<8x64xf32>
    %c0_60 = arith.constant 0 : index
    %c0_61 = arith.constant 0 : index
    %145 = vector.load %arg8[%c0_60, %c0_61] : memref<1x64xf32, #tpu.memory_space<vmem>>, vector<1x64xf32>
    %146 = vector.broadcast %145 : vector<1x64xf32> to vector<8x64xf32>
    %147 = arith.addf %144, %146 : vector<8x64xf32>
    %cst_62 = arith.constant 0.000000e+00 : f32
    %148 = vector.broadcast %cst_62 : f32 to vector<8x64xf32>
    %149 = arith.maximumf %147, %148 : vector<8x64xf32>
    %c0_63 = arith.constant 0 : index
    %c0_64 = arith.constant 0 : index
    %150 = vector.load %arg13[%c0_63, %c0_64] : memref<8x32xf32, #tpu.memory_space<vmem>>, vector<8x32xf32>
    %c0_65 = arith.constant 0 : index
    %c0_66 = arith.constant 0 : index
    %151 = vector.load %arg9[%c0_65, %c0_66] : memref<64x32xf32, #tpu.memory_space<vmem>>, vector<64x32xf32>
    %cst_67 = arith.constant dense<0.000000e+00> : vector<8x32xf32>
    %152 = tpu.matmul %149, %151, %cst_67 {dimension_numbers = #tpu.dot_dimension_numbers<[1], [0], [0], [1], [0, 0, 1, 1], [], []>} : vector<8x64xf32>, vector<64x32xf32>, vector<8x32xf32> -> vector<8x32xf32>
    %153 = arith.addf %150, %152 : vector<8x32xf32>
    %c0_68 = arith.constant 0 : index
    %c0_69 = arith.constant 0 : index
    %154 = vector.load %arg13[%c0_68, %c0_69] : memref<8x32xf32, #tpu.memory_space<vmem>>, vector<8x32xf32>
    tpu.vector_store %arg13[%c0_68, %c0_69], %153 {strides = array<i32>} : memref<8x32xf32, #tpu.memory_space<vmem>>, vector<8x32xf32>,
    %c0_70 = arith.constant 0 : index
    %c0_71 = arith.constant 0 : index
    %155 = vector.load %arg13[%c0_70, %c0_71] : memref<8x32xf32, #tpu.memory_space<vmem>>, vector<8x32xf32>
    %156 = arith.addf %120, %155 : vector<8x32xf32>
    %c0_72 = arith.constant 0 : index
    %c0_73 = arith.constant 0 : index
    %157 = vector.load %arg10[%c0_72, %c0_73] : memref<1x32xf32, #tpu.memory_space<vmem>>, vector<1x32xf32>
    %158 = vector.broadcast %157 : vector<1x32xf32> to vector<8x32xf32>
    %159 = arith.addf %156, %158 : vector<8x32xf32>
    %c0_74 = arith.constant 0 : index
    %c0_75 = arith.constant 0 : index
    %c0_76 = arith.constant 0 : index
    %160 = vector.load %arg11[%c0_74, %c0_75, %c0_76] : memref<1x8x32xf32, #tpu.memory_space<vmem>>, vector<1x8x32xf32>
    %161 = vector.shape_cast %160 : vector<1x8x32xf32> to vector<8x32xf32>
    %162 = vector.shape_cast %159 : vector<8x32xf32> to vector<1x8x32xf32>
    tpu.vector_store %arg11[%c0_74, %c0_75, %c0_76], %162 {strides = array<i32>} : memref<1x8x32xf32, #tpu.memory_space<vmem>>, vector<1x8x32xf32>,
    return
  }
  func.func @transform_0(%arg0: i32) -> (i32, i32, i32) {
    %c0_i32 = arith.constant 0 : i32
    %c0_i32_0 = arith.constant 0 : i32
    %c0_i32_1 = arith.constant 0 : i32
    return %arg0, %c0_i32, %c0_i32_0 : i32, i32, i32
  }
  func.func @transform_1(%arg0: i32) -> (i32, i32, i32) {
    %c0_i32 = arith.constant 0 : i32
    %c0_i32_0 = arith.constant 0 : i32
    %c0_i32_1 = arith.constant 0 : i32
    return %arg0, %c0_i32, %c0_i32_0 : i32, i32, i32
  }
  func.func @transform_2(%arg0: i32) -> (i32, i32) {
    %c0_i32 = arith.constant 0 : i32
    %c0_i32_0 = arith.constant 0 : i32
    %c0_i32_1 = arith.constant 0 : i32
    return %c0_i32, %c0_i32_0 : i32, i32
  }
  func.func @transform_3(%arg0: i32) -> (i32, i32) {
    %c0_i32 = arith.constant 0 : i32
    %c0_i32_0 = arith.constant 0 : i32
    %c0_i32_1 = arith.constant 0 : i32
    return %c0_i32, %c0_i32_0 : i32, i32
  }
  func.func @transform_4(%arg0: i32) -> (i32, i32) {
    %c0_i32 = arith.constant 0 : i32
    %c0_i32_0 = arith.constant 0 : i32
    %c0_i32_1 = arith.constant 0 : i32
    return %c0_i32, %c0_i32_0 : i32, i32
  }
  func.func @transform_5(%arg0: i32) -> (i32, i32) {
    %c0_i32 = arith.constant 0 : i32
    %c0_i32_0 = arith.constant 0 : i32
    %c0_i32_1 = arith.constant 0 : i32
    return %c0_i32, %c0_i32_0 : i32, i32
  }
  func.func @transform_6(%arg0: i32) -> (i32, i32) {
    %c0_i32 = arith.constant 0 : i32
    %c0_i32_0 = arith.constant 0 : i32
    %c0_i32_1 = arith.constant 0 : i32
    return %c0_i32, %c0_i32_0 : i32, i32
  }
  func.func @transform_7(%arg0: i32) -> (i32, i32) {
    %c0_i32 = arith.constant 0 : i32
    %c0_i32_0 = arith.constant 0 : i32
    %c0_i32_1 = arith.constant 0 : i32
    return %c0_i32, %c0_i32_0 : i32, i32
  }
  func.func @transform_8(%arg0: i32) -> (i32, i32) {
    %c0_i32 = arith.constant 0 : i32
    %c0_i32_0 = arith.constant 0 : i32
    %c0_i32_1 = arith.constant 0 : i32
    return %c0_i32, %c0_i32_0 : i32, i32
  }
  func.func @transform_9(%arg0: i32) -> (i32, i32) {
    %c0_i32 = arith.constant 0 : i32
    %c0_i32_0 = arith.constant 0 : i32
    %c0_i32_1 = arith.constant 0 : i32
    return %c0_i32, %c0_i32_0 : i32, i32
  }
  func.func @transform_10(%arg0: i32) -> (i32, i32, i32) {
    %c0_i32 = arith.constant 0 : i32
    %c0_i32_0 = arith.constant 0 : i32
    %c0_i32_1 = arith.constant 0 : i32
    return %arg0, %c0_i32, %c0_i32_0 : i32, i32, i32
  }
}

module attributes {stable_mosaic.version = 11 : i64} {
  func.func @kernel(%arg0: i32, %arg1: memref<1x8x32xf32, #tpu.memory_space<vmem>>, %arg2: memref<1x1x8xf32, #tpu.memory_space<vmem>>, %arg3: memref<32x96xf32, #tpu.memory_space<vmem>>, %arg4: memref<1x96xf32, #tpu.memory_space<vmem>>, %arg5: memref<32x32xf32, #tpu.memory_space<vmem>>, %arg6: memref<1x32xf32, #tpu.memory_space<vmem>>, %arg7: memref<32x64xf32, #tpu.memory_space<vmem>>, %arg8: memref<1x64xf32, #tpu.memory_space<vmem>>, %arg9: memref<64x32xf32, #tpu.memory_space<vmem>>, %arg10: memref<1x32xf32, #tpu.memory_space<vmem>>, %arg11: memref<1x8x32xf32, #tpu.memory_space<vmem>>, %arg12: memref<8x32xf32, #tpu.memory_space<vmem>>, %arg13: memref<8x32xf32, #tpu.memory_space<vmem>>) attributes {dimension_semantics = [#tpu.dimension_semantics<parallel>], iteration_bounds = array<i64: 2>, scalar_prefetch = 0 : i64, scratch_operands = 2 : i64, tpu.core_type = #tpu.core_type<tc>, window_params = [{transform_indices = @transform_0, window_bounds = array<i64: 1, 8, 32>}, {transform_indices = @transform_1, window_bounds = array<i64: 1, 1, 8>}, {pipeline_mode = #tpu.pipeline_mode<synchronous>, transform_indices = @transform_2, window_bounds = array<i64: 32, 96>}, {pipeline_mode = #tpu.pipeline_mode<synchronous>, transform_indices = @transform_3, window_bounds = array<i64: 1, 96>}, {pipeline_mode = #tpu.pipeline_mode<synchronous>, transform_indices = @transform_4, window_bounds = array<i64: 32, 32>}, {pipeline_mode = #tpu.pipeline_mode<synchronous>, transform_indices = @transform_5, window_bounds = array<i64: 1, 32>}, {pipeline_mode = #tpu.pipeline_mode<synchronous>, transform_indices = @transform_6, window_bounds = array<i64: 32, 64>}, {pipeline_mode = #tpu.pipeline_mode<synchronous>, transform_indices = @transform_7, window_bounds = array<i64: 1, 64>}, {pipeline_mode = #tpu.pipeline_mode<synchronous>, transform_indices = @transform_8, window_bounds = array<i64: 64, 32>}, {pipeline_mode = #tpu.pipeline_mode<synchronous>, transform_indices = @transform_9, window_bounds = array<i64: 1, 32>}, {transform_indices = @transform_10, window_bounds = array<i64: 1, 8, 32>}]} {
    %c0 = arith.constant 0 : index
    %c0_0 = arith.constant 0 : index
    %c0_1 = arith.constant 0 : index
    %0 = vector.load %arg1[%c0, %c0_0, %c0_1] : memref<1x8x32xf32, #tpu.memory_space<vmem>>, vector<1x8x32xf32>
    %1 = vector.shape_cast %0 : vector<1x8x32xf32> to vector<8x32xf32>
    %c0_2 = arith.constant 0 : index
    %c0_3 = arith.constant 0 : index
    %c0_4 = arith.constant 0 : index
    %2 = vector.load %arg2[%c0_2, %c0_3, %c0_4] : memref<1x1x8xf32, #tpu.memory_space<vmem>>, vector<1x1x8xf32>
    %3 = vector.shape_cast %2 : vector<1x1x8xf32> to vector<1x8xf32>
    %cst = arith.constant 0.000000e+00 : f32
    %4 = vector.broadcast %cst : f32 to vector<1x8xf32>
    %5 = arith.cmpf oeq, %3, %4 : vector<1x8xf32>
    %cst_5 = arith.constant -1.000000e+09 : f32
    %cst_6 = arith.constant 0.000000e+00 : f32
    %6 = vector.broadcast %cst_5 : f32 to vector<1x8xf32>
    %7 = vector.broadcast %cst_6 : f32 to vector<1x8xf32>
    %8 = arith.select %5, %6, %7 : vector<1x8xi1>, vector<1x8xf32>
    %cst_7 = arith.constant dense<0.000000e+00> : vector<8xf32>
    %9 = vector.multi_reduction <add>, %1, %cst_7 [1] : vector<8x32xf32> to vector<8xf32>
    %10 = vector.shape_cast %9 : vector<8xf32> to vector<8x1xf32>
    %cst_8 = arith.constant 3.200000e+01 : f32
    %11 = vector.broadcast %cst_8 : f32 to vector<8x1xf32>
    %12 = arith.divf %10, %11 : vector<8x1xf32>
    %13 = vector.broadcast %12 : vector<8x1xf32> to vector<8x32xf32>
    %14 = arith.subf %1, %13 : vector<8x32xf32>
    %15 = vector.broadcast %12 : vector<8x1xf32> to vector<8x32xf32>
    %16 = arith.subf %1, %15 : vector<8x32xf32>
    %17 = arith.mulf %14, %16 : vector<8x32xf32>
    %cst_9 = arith.constant dense<0.000000e+00> : vector<8xf32>
    %18 = vector.multi_reduction <add>, %17, %cst_9 [1] : vector<8x32xf32> to vector<8xf32>
    %19 = vector.shape_cast %18 : vector<8xf32> to vector<8x1xf32>
    %cst_10 = arith.constant 0.0322580636 : f32
    %20 = vector.broadcast %cst_10 : f32 to vector<8x1xf32>
    %21 = arith.mulf %19, %20 : vector<8x1xf32>
    %22 = vector.broadcast %12 : vector<8x1xf32> to vector<8x32xf32>
    %23 = arith.subf %1, %22 : vector<8x32xf32>
    %24 = math.sqrt %21 : vector<8x1xf32>
    %cst_11 = arith.constant 9.99999997E-7 : f32
    %25 = vector.broadcast %cst_11 : f32 to vector<8x1xf32>
    %26 = arith.addf %24, %25 : vector<8x1xf32>
    %27 = vector.broadcast %26 : vector<8x1xf32> to vector<8x32xf32>
    %28 = arith.divf %23, %27 : vector<8x32xf32>
    %c0_12 = arith.constant 0 : index
    %c0_13 = arith.constant 0 : index
    %29 = vector.load %arg3[%c0_12, %c0_13] : memref<32x96xf32, #tpu.memory_space<vmem>>, vector<32x96xf32>
    %cst_14 = arith.constant dense<0.000000e+00> : vector<8x96xf32>
    %30 = tpu.matmul %28, %29, %cst_14 {dimension_numbers = #tpu.dot_dimension_numbers<[1], [0], [0], [1], [0, 0, 1, 1], [], []>} : vector<8x32xf32>, vector<32x96xf32>, vector<8x96xf32> -> vector<8x96xf32>
    %c0_15 = arith.constant 0 : index
    %c0_16 = arith.constant 0 : index
    %31 = vector.load %arg4[%c0_15, %c0_16] : memref<1x96xf32, #tpu.memory_space<vmem>>, vector<1x96xf32>
    %32 = vector.broadcast %31 : vector<1x96xf32> to vector<8x96xf32>
    %33 = arith.addf %30, %32 : vector<8x96xf32>
    %34 = vector.extract_strided_slice %33 {offsets = [0, 0], sizes = [8, 8], strides = [1, 1]} : vector<8x96xf32> to vector<8x8xf32>
    %35 = vector.extract_strided_slice %33 {offsets = [0, 32], sizes = [8, 8], strides = [1, 1]} : vector<8x96xf32> to vector<8x8xf32>
    %36 = vector.extract_strided_slice %33 {offsets = [0, 64], sizes = [8, 8], strides = [1, 1]} : vector<8x96xf32> to vector<8x8xf32>
    %cst_17 = arith.constant dense<0.000000e+00> : vector<8x8xf32>
    %37 = tpu.matmul %34, %35, %cst_17 {dimension_numbers = #tpu.dot_dimension_numbers<[1], [1], [0], [0], [0, 0, 1, 0], [], []>} : vector<8x8xf32>, vector<8x8xf32>, vector<8x8xf32> -> vector<8x8xf32>
    %cst_18 = arith.constant 0.353553385 : f32
    %38 = vector.broadcast %cst_18 : f32 to vector<8x8xf32>
    %39 = arith.mulf %37, %38 : vector<8x8xf32>
    %40 = vector.broadcast %8 : vector<1x8xf32> to vector<8x8xf32>
    %41 = arith.addf %39, %40 : vector<8x8xf32>
    %cst_19 = arith.constant dense<0xFF800000> : vector<8xf32>
    %42 = vector.multi_reduction <maximumf>, %41, %cst_19 [1] : vector<8x8xf32> to vector<8xf32>
    %43 = vector.shape_cast %42 : vector<8xf32> to vector<8x1xf32>
    %44 = vector.broadcast %43 : vector<8x1xf32> to vector<8x8xf32>
    %45 = arith.subf %41, %44 : vector<8x8xf32>
    %46 = math.exp %45 : vector<8x8xf32>
    %cst_20 = arith.constant dense<0.000000e+00> : vector<8xf32>
    %47 = vector.multi_reduction <add>, %46, %cst_20 [1] : vector<8x8xf32> to vector<8xf32>
    %48 = vector.shape_cast %47 : vector<8xf32> to vector<8x1xf32>
    %49 = tpu.reciprocal %48 {approx = true} : vector<8x1xf32> -> vector<8x1xf32>
    %50 = vector.broadcast %49 : vector<8x1xf32> to vector<8x8xf32>
    %51 = arith.mulf %46, %50 : vector<8x8xf32>
    %cst_21 = arith.constant dense<0.000000e+00> : vector<8x8xf32>
    %52 = tpu.matmul %51, %36, %cst_21 {dimension_numbers = #tpu.dot_dimension_numbers<[1], [0], [0], [1], [0, 0, 1, 1], [], []>} : vector<8x8xf32>, vector<8x8xf32>, vector<8x8xf32> -> vector<8x8xf32>
    %c0_22 = arith.constant 0 : index
    %c0_23 = arith.constant 0 : index
    %53 = vector.load %arg12[%c0_22, %c0_23] : memref<8x32xf32, #tpu.memory_space<vmem>>, vector<8x8xf32>
    tpu.vector_store %arg12[%c0_22, %c0_23], %52 {strides = array<i32>} : memref<8x32xf32, #tpu.memory_space<vmem>>, vector<8x8xf32>,
    %54 = vector.extract_strided_slice %33 {offsets = [0, 8], sizes = [8, 8], strides = [1, 1]} : vector<8x96xf32> to vector<8x8xf32>
    %55 = vector.extract_strided_slice %33 {offsets = [0, 40], sizes = [8, 8], strides = [1, 1]} : vector<8x96xf32> to vector<8x8xf32>
    %56 = vector.extract_strided_slice %33 {offsets = [0, 72], sizes = [8, 8], strides = [1, 1]} : vector<8x96xf32> to vector<8x8xf32>
    %cst_24 = arith.constant dense<0.000000e+00> : vector<8x8xf32>
    %57 = tpu.matmul %54, %55, %cst_24 {dimension_numbers = #tpu.dot_dimension_numbers<[1], [1], [0], [0], [0, 0, 1, 0], [], []>} : vector<8x8xf32>, vector<8x8xf32>, vector<8x8xf32> -> vector<8x8xf32>
    %cst_25 = arith.constant 0.353553385 : f32
    %58 = vector.broadcast %cst_25 : f32 to vector<8x8xf32>
    %59 = arith.mulf %57, %58 : vector<8x8xf32>
    %60 = vector.broadcast %8 : vector<1x8xf32> to vector<8x8xf32>
    %61 = arith.addf %59, %60 : vector<8x8xf32>
    %cst_26 = arith.constant dense<0xFF800000> : vector<8xf32>
    %62 = vector.multi_reduction <maximumf>, %61, %cst_26 [1] : vector<8x8xf32> to vector<8xf32>
    %63 = vector.shape_cast %62 : vector<8xf32> to vector<8x1xf32>
    %64 = vector.broadcast %63 : vector<8x1xf32> to vector<8x8xf32>
    %65 = arith.subf %61, %64 : vector<8x8xf32>
    %66 = math.exp %65 : vector<8x8xf32>
    %cst_27 = arith.constant dense<0.000000e+00> : vector<8xf32>
    %67 = vector.multi_reduction <add>, %66, %cst_27 [1] : vector<8x8xf32> to vector<8xf32>
    %68 = vector.shape_cast %67 : vector<8xf32> to vector<8x1xf32>
    %69 = tpu.reciprocal %68 {approx = true} : vector<8x1xf32> -> vector<8x1xf32>
    %70 = vector.broadcast %69 : vector<8x1xf32> to vector<8x8xf32>
    %71 = arith.mulf %66, %70 : vector<8x8xf32>
    %cst_28 = arith.constant dense<0.000000e+00> : vector<8x8xf32>
    %72 = tpu.matmul %71, %56, %cst_28 {dimension_numbers = #tpu.dot_dimension_numbers<[1], [0], [0], [1], [0, 0, 1, 1], [], []>} : vector<8x8xf32>, vector<8x8xf32>, vector<8x8xf32> -> vector<8x8xf32>
    %c0_29 = arith.constant 0 : index
    %c8 = arith.constant 8 : index
    %73 = vector.load %arg12[%c0_29, %c8] : memref<8x32xf32, #tpu.memory_space<vmem>>, vector<8x8xf32>
    tpu.vector_store %arg12[%c0_29, %c8], %72 {strides = array<i32>} : memref<8x32xf32, #tpu.memory_space<vmem>>, vector<8x8xf32>,
    %74 = vector.extract_strided_slice %33 {offsets = [0, 16], sizes = [8, 8], strides = [1, 1]} : vector<8x96xf32> to vector<8x8xf32>
    %75 = vector.extract_strided_slice %33 {offsets = [0, 48], sizes = [8, 8], strides = [1, 1]} : vector<8x96xf32> to vector<8x8xf32>
    %76 = vector.extract_strided_slice %33 {offsets = [0, 80], sizes = [8, 8], strides = [1, 1]} : vector<8x96xf32> to vector<8x8xf32>
    %cst_30 = arith.constant dense<0.000000e+00> : vector<8x8xf32>
    %77 = tpu.matmul %74, %75, %cst_30 {dimension_numbers = #tpu.dot_dimension_numbers<[1], [1], [0], [0], [0, 0, 1, 0], [], []>} : vector<8x8xf32>, vector<8x8xf32>, vector<8x8xf32> -> vector<8x8xf32>
    %cst_31 = arith.constant 0.353553385 : f32
    %78 = vector.broadcast %cst_31 : f32 to vector<8x8xf32>
    %79 = arith.mulf %77, %78 : vector<8x8xf32>
    %80 = vector.broadcast %8 : vector<1x8xf32> to vector<8x8xf32>
    %81 = arith.addf %79, %80 : vector<8x8xf32>
    %cst_32 = arith.constant dense<0xFF800000> : vector<8xf32>
    %82 = vector.multi_reduction <maximumf>, %81, %cst_32 [1] : vector<8x8xf32> to vector<8xf32>
    %83 = vector.shape_cast %82 : vector<8xf32> to vector<8x1xf32>
    %84 = vector.broadcast %83 : vector<8x1xf32> to vector<8x8xf32>
    %85 = arith.subf %81, %84 : vector<8x8xf32>
    %86 = math.exp %85 : vector<8x8xf32>
    %cst_33 = arith.constant dense<0.000000e+00> : vector<8xf32>
    %87 = vector.multi_reduction <add>, %86, %cst_33 [1] : vector<8x8xf32> to vector<8xf32>
    %88 = vector.shape_cast %87 : vector<8xf32> to vector<8x1xf32>
    %89 = tpu.reciprocal %88 {approx = true} : vector<8x1xf32> -> vector<8x1xf32>
    %90 = vector.broadcast %89 : vector<8x1xf32> to vector<8x8xf32>
    %91 = arith.mulf %86, %90 : vector<8x8xf32>
    %cst_34 = arith.constant dense<0.000000e+00> : vector<8x8xf32>
    %92 = tpu.matmul %91, %76, %cst_34 {dimension_numbers = #tpu.dot_dimension_numbers<[1], [0], [0], [1], [0, 0, 1, 1], [], []>} : vector<8x8xf32>, vector<8x8xf32>, vector<8x8xf32> -> vector<8x8xf32>
    %c0_35 = arith.constant 0 : index
    %c16 = arith.constant 16 : index
    %93 = vector.load %arg12[%c0_35, %c16] : memref<8x32xf32, #tpu.memory_space<vmem>>, vector<8x8xf32>
    tpu.vector_store %arg12[%c0_35, %c16], %92 {strides = array<i32>} : memref<8x32xf32, #tpu.memory_space<vmem>>, vector<8x8xf32>,
    %94 = vector.extract_strided_slice %33 {offsets = [0, 24], sizes = [8, 8], strides = [1, 1]} : vector<8x96xf32> to vector<8x8xf32>
    %95 = vector.extract_strided_slice %33 {offsets = [0, 56], sizes = [8, 8], strides = [1, 1]} : vector<8x96xf32> to vector<8x8xf32>
    %96 = vector.extract_strided_slice %33 {offsets = [0, 88], sizes = [8, 8], strides = [1, 1]} : vector<8x96xf32> to vector<8x8xf32>
    %cst_36 = arith.constant dense<0.000000e+00> : vector<8x8xf32>
    %97 = tpu.matmul %94, %95, %cst_36 {dimension_numbers = #tpu.dot_dimension_numbers<[1], [1], [0], [0], [0, 0, 1, 0], [], []>} : vector<8x8xf32>, vector<8x8xf32>, vector<8x8xf32> -> vector<8x8xf32>
    %cst_37 = arith.constant 0.353553385 : f32
    %98 = vector.broadcast %cst_37 : f32 to vector<8x8xf32>
    %99 = arith.mulf %97, %98 : vector<8x8xf32>
    %100 = vector.broadcast %8 : vector<1x8xf32> to vector<8x8xf32>
    %101 = arith.addf %99, %100 : vector<8x8xf32>
    %cst_38 = arith.constant dense<0xFF800000> : vector<8xf32>
    %102 = vector.multi_reduction <maximumf>, %101, %cst_38 [1] : vector<8x8xf32> to vector<8xf32>
    %103 = vector.shape_cast %102 : vector<8xf32> to vector<8x1xf32>
    %104 = vector.broadcast %103 : vector<8x1xf32> to vector<8x8xf32>
    %105 = arith.subf %101, %104 : vector<8x8xf32>
    %106 = math.exp %105 : vector<8x8xf32>
    %cst_39 = arith.constant dense<0.000000e+00> : vector<8xf32>
    %107 = vector.multi_reduction <add>, %106, %cst_39 [1] : vector<8x8xf32> to vector<8xf32>
    %108 = vector.shape_cast %107 : vector<8xf32> to vector<8x1xf32>
    %109 = tpu.reciprocal %108 {approx = true} : vector<8x1xf32> -> vector<8x1xf32>
    %110 = vector.broadcast %109 : vector<8x1xf32> to vector<8x8xf32>
    %111 = arith.mulf %106, %110 : vector<8x8xf32>
    %cst_40 = arith.constant dense<0.000000e+00> : vector<8x8xf32>
    %112 = tpu.matmul %111, %96, %cst_40 {dimension_numbers = #tpu.dot_dimension_numbers<[1], [0], [0], [1], [0, 0, 1, 1], [], []>} : vector<8x8xf32>, vector<8x8xf32>, vector<8x8xf32> -> vector<8x8xf32>
    %c0_41 = arith.constant 0 : index
    %c24 = arith.constant 24 : index
    %113 = vector.load %arg12[%c0_41, %c24] : memref<8x32xf32, #tpu.memory_space<vmem>>, vector<8x8xf32>
    tpu.vector_store %arg12[%c0_41, %c24], %112 {strides = array<i32>} : memref<8x32xf32, #tpu.memory_space<vmem>>, vector<8x8xf32>,
    %c0_42 = arith.constant 0 : index
    %c0_43 = arith.constant 0 : index
    %114 = vector.load %arg12[%c0_42, %c0_43] : memref<8x32xf32, #tpu.memory_space<vmem>>, vector<8x32xf32>
    %c0_44 = arith.constant 0 : index
    %c0_45 = arith.constant 0 : index
    %115 = vector.load %arg5[%c0_44, %c0_45] : memref<32x32xf32, #tpu.memory_space<vmem>>, vector<32x32xf32>
    %cst_46 = arith.constant dense<0.000000e+00> : vector<8x32xf32>
    %116 = tpu.matmul %114, %115, %cst_46 {dimension_numbers = #tpu.dot_dimension_numbers<[1], [0], [0], [1], [0, 0, 1, 1], [], []>} : vector<8x32xf32>, vector<32x32xf32>, vector<8x32xf32> -> vector<8x32xf32>
    %c0_47 = arith.constant 0 : index
    %c0_48 = arith.constant 0 : index
    %117 = vector.load %arg6[%c0_47, %c0_48] : memref<1x32xf32, #tpu.memory_space<vmem>>, vector<1x32xf32>
    %118 = vector.broadcast %117 : vector<1x32xf32> to vector<8x32xf32>
    %119 = arith.addf %116, %118 : vector<8x32xf32>
    %120 = arith.addf %1, %119 : vector<8x32xf32>
    %cst_49 = arith.constant dense<0.000000e+00> : vector<8xf32>
    %121 = vector.multi_reduction <add>, %120, %cst_49 [1] : vector<8x32xf32> to vector<8xf32>
    %122 = vector.shape_cast %121 : vector<8xf32> to vector<8x1xf32>
    %cst_50 = arith.constant 3.200000e+01 : f32
    %123 = vector.broadcast %cst_50 : f32 to vector<8x1xf32>
    %124 = arith.divf %122, %123 : vector<8x1xf32>
    %125 = vector.broadcast %124 : vector<8x1xf32> to vector<8x32xf32>
    %126 = arith.subf %120, %125 : vector<8x32xf32>
    %127 = vector.broadcast %124 : vector<8x1xf32> to vector<8x32xf32>
    %128 = arith.subf %120, %127 : vector<8x32xf32>
    %129 = arith.mulf %126, %128 : vector<8x32xf32>
    %cst_51 = arith.constant dense<0.000000e+00> : vector<8xf32>
    %130 = vector.multi_reduction <add>, %129, %cst_51 [1] : vector<8x32xf32> to vector<8xf32>
    %131 = vector.shape_cast %130 : vector<8xf32> to vector<8x1xf32>
    %cst_52 = arith.constant 0.0322580636 : f32
    %132 = vector.broadcast %cst_52 : f32 to vector<8x1xf32>
    %133 = arith.mulf %131, %132 : vector<8x1xf32>
    %134 = vector.broadcast %124 : vector<8x1xf32> to vector<8x32xf32>
    %135 = arith.subf %120, %134 : vector<8x32xf32>
    %136 = math.sqrt %133 : vector<8x1xf32>
    %cst_53 = arith.constant 9.99999997E-7 : f32
    %137 = vector.broadcast %cst_53 : f32 to vector<8x1xf32>
    %138 = arith.addf %136, %137 : vector<8x1xf32>
    %139 = vector.broadcast %138 : vector<8x1xf32> to vector<8x32xf32>
    %140 = arith.divf %135, %139 : vector<8x32xf32>
    %cst_54 = arith.constant 0.000000e+00 : f32
    %141 = vector.broadcast %cst_54 : f32 to vector<8x32xf32>
    %c0_55 = arith.constant 0 : index
    %c0_56 = arith.constant 0 : index
    %142 = vector.load %arg13[%c0_55, %c0_56] : memref<8x32xf32, #tpu.memory_space<vmem>>, vector<8x32xf32>
    tpu.vector_store %arg13[%c0_55, %c0_56], %141 {strides = array<i32>} : memref<8x32xf32, #tpu.memory_space<vmem>>, vector<8x32xf32>,
    %c0_57 = arith.constant 0 : index
    %c0_58 = arith.constant 0 : index
    %143 = vector.load %arg7[%c0_57, %c0_58] : memref<32x64xf32, #tpu.memory_space<vmem>>, vector<32x64xf32>
    %cst_59 = arith.constant dense<0.000000e+00> : vector<8x64xf32>
    %144 = tpu.matmul %140, %143, %cst_59 {dimension_numbers = #tpu.dot_dimension_numbers<[1], [0], [0], [1], [0, 0, 1, 1], [], []>} : vector<8x32xf32>, vector<32x64xf32>, vector<8x64xf32> -> vector<8x64xf32>
    %c0_60 = arith.constant 0 : index
    %c0_61 = arith.constant 0 : index
    %145 = vector.load %arg8[%c0_60, %c0_61] : memref<1x64xf32, #tpu.memory_space<vmem>>, vector<1x64xf32>
    %146 = vector.broadcast %145 : vector<1x64xf32> to vector<8x64xf32>
    %147 = arith.addf %144, %146 : vector<8x64xf32>
    %cst_62 = arith.constant 0.000000e+00 : f32
    %148 = vector.broadcast %cst_62 : f32 to vector<8x64xf32>
    %149 = arith.maximumf %147, %148 : vector<8x64xf32>
    %c0_63 = arith.constant 0 : index
    %c0_64 = arith.constant 0 : index
    %150 = vector.load %arg13[%c0_63, %c0_64] : memref<8x32xf32, #tpu.memory_space<vmem>>, vector<8x32xf32>
    %c0_65 = arith.constant 0 : index
    %c0_66 = arith.constant 0 : index
    %151 = vector.load %arg9[%c0_65, %c0_66] : memref<64x32xf32, #tpu.memory_space<vmem>>, vector<64x32xf32>
    %cst_67 = arith.constant dense<0.000000e+00> : vector<8x32xf32>
    %152 = tpu.matmul %149, %151, %cst_67 {dimension_numbers = #tpu.dot_dimension_numbers<[1], [0], [0], [1], [0, 0, 1, 1], [], []>} : vector<8x64xf32>, vector<64x32xf32>, vector<8x32xf32> -> vector<8x32xf32>
    %153 = arith.addf %150, %152 : vector<8x32xf32>
    %c0_68 = arith.constant 0 : index
    %c0_69 = arith.constant 0 : index
    %154 = vector.load %arg13[%c0_68, %c0_69] : memref<8x32xf32, #tpu.memory_space<vmem>>, vector<8x32xf32>
    tpu.vector_store %arg13[%c0_68, %c0_69], %153 {strides = array<i32>} : memref<8x32xf32, #tpu.memory_space<vmem>>, vector<8x32xf32>,
    %c0_70 = arith.constant 0 : index
    %c0_71 = arith.constant 0 : index
    %155 = vector.load %arg13[%c0_70, %c0_71] : memref<8x32xf32, #tpu.memory_space<vmem>>, vector<8x32xf32>
    %156 = arith.addf %120, %155 : vector<8x32xf32>
    %c0_72 = arith.constant 0 : index
    %c0_73 = arith.constant 0 : index
    %157 = vector.load %arg10[%c0_72, %c0_73] : memref<1x32xf32, #tpu.memory_space<vmem>>, vector<1x32xf32>
    %158 = vector.broadcast %157 : vector<1x32xf32> to vector<8x32xf32>
    %159 = arith.addf %156, %158 : vector<8x32xf32>
    %c0_74 = arith.constant 0 : index
    %c0_75 = arith.constant 0 : index
    %c0_76 = arith.constant 0 : index
    %160 = vector.load %arg11[%c0_74, %c0_75, %c0_76] : memref<1x8x32xf32, #tpu.memory_space<vmem>>, vector<1x8x32xf32>
    %161 = vector.shape_cast %160 : vector<1x8x32xf32> to vector<8x32xf32>
    %162 = vector.shape_cast %159 : vector<8x32xf32> to vector<1x8x32xf32>
    tpu.vector_store %arg11[%c0_74, %c0_75, %c0_76], %162 {strides = array<i32>} : memref<1x8x32xf32, #tpu.memory_space<vmem>>, vector<1x8x32xf32>,
    return
  }
  func.func @transform_0(%arg0: i32) -> (i32, i32, i32) {
    %c0_i32 = arith.constant 0 : i32
    %c0_i32_0 = arith.constant 0 : i32
    %c0_i32_1 = arith.constant 0 : i32
    return %arg0, %c0_i32, %c0_i32_0 : i32, i32, i32
  }
  func.func @transform_1(%arg0: i32) -> (i32, i32, i32) {
    %c0_i32 = arith.constant 0 : i32
    %c0_i32_0 = arith.constant 0 : i32
    %c0_i32_1 = arith.constant 0 : i32
    return %arg0, %c0_i32, %c0_i32_0 : i32, i32, i32
  }
  func.func @transform_2(%arg0: i32) -> (i32, i32) {
    %c0_i32 = arith.constant 0 : i32
    %c0_i32_0 = arith.constant 0 : i32
    %c0_i32_1 = arith.constant 0 : i32
    return %c0_i32, %c0_i32_0 : i32, i32
  }
  func.func @transform_3(%arg0: i32) -> (i32, i32) {
    %c0_i32 = arith.constant 0 : i32
    %c0_i32_0 = arith.constant 0 : i32
    %c0_i32_1 = arith.constant 0 : i32
    return %c0_i32, %c0_i32_0 : i32, i32
  }
  func.func @transform_4(%arg0: i32) -> (i32, i32) {
    %c0_i32 = arith.constant 0 : i32
    %c0_i32_0 = arith.constant 0 : i32
    %c0_i32_1 = arith.constant 0 : i32
    return %c0_i32, %c0_i32_0 : i32, i32
  }
  func.func @transform_5(%arg0: i32) -> (i32, i32) {
    %c0_i32 = arith.constant 0 : i32
    %c0_i32_0 = arith.constant 0 : i32
    %c0_i32_1 = arith.constant 0 : i32
    return %c0_i32, %c0_i32_0 : i32, i32
  }
  func.func @transform_6(%arg0: i32) -> (i32, i32) {
    %c0_i32 = arith.constant 0 : i32
    %c0_i32_0 = arith.constant 0 : i32
    %c0_i32_1 = arith.constant 0 : i32
    return %c0_i32, %c0_i32_0 : i32, i32
  }
  func.func @transform_7(%arg0: i32) -> (i32, i32) {
    %c0_i32 = arith.constant 0 : i32
    %c0_i32_0 = arith.constant 0 : i32
    %c0_i32_1 = arith.constant 0 : i32
    return %c0_i32, %c0_i32_0 : i32, i32
  }
  func.func @transform_8(%arg0: i32) -> (i32, i32) {
    %c0_i32 = arith.constant 0 : i32
    %c0_i32_0 = arith.constant 0 : i32
    %c0_i32_1 = arith.constant 0 : i32
    return %c0_i32, %c0_i32_0 : i32, i32
  }
  func.func @transform_9(%arg0: i32) -> (i32, i32) {
    %c0_i32 = arith.constant 0 : i32
    %c0_i32_0 = arith.constant 0 : i32
    %c0_i32_1 = arith.constant 0 : i32
    return %c0_i32, %c0_i32_0 : i32, i32
  }
  func.func @transform_10(%arg0: i32) -> (i32, i32, i32) {
    %c0_i32 = arith.constant 0 : i32
    %c0_i32_0 = arith.constant 0 : i32
    %c0_i32_1 = arith.constant 0 : i32
    return %arg0, %c0_i32, %c0_i32_0 : i32, i32, i32
  }
}

</mosaic_0001>

<llo_original>
// kernel: tpu_custom_call.1
$region0: #{tpu_custom_call.1}
  #allocation0 [shape = 'u32[]', space=smem, size = 0x4, offset = 0x4, fixed_abs, tag = 'smem constant byte address 0x4 - core index']
  #allocation1 [shape = 'u32[144,128]{1,0:T(1,128)}', space=vmem, size = 0x12000, scoped, tag = 'internal scratch']
  #allocation2 [shape = 'f32[8,32]{1,0:T(8,128)}', space=vmem, size = 0x1000, scoped, tag = 'scratch operand']
  #allocation3 [shape = 'f32[8,32]{1,0:T(8,128)}', space=vmem, size = 0x1000, scoped, tag = 'scratch operand']
  %s0 = inlined_call_operand.hbm [shape: f32[2,8,32], index: 0, kind: input, shape index: {}]
  %s1 = inlined_call_operand.vmem [shape: f32[2,1,8], index: 1, kind: input, shape index: {}]
  %s2 = inlined_call_operand.vmem [shape: f32[32,96], index: 2, kind: input, shape index: {}]
  %s3 = inlined_call_operand.vmem [shape: f32[1,96], index: 3, kind: input, shape index: {}]
  %s4 = inlined_call_operand.vmem [shape: f32[32,32], index: 4, kind: input, shape index: {}]
  %s5 = inlined_call_operand.vmem [shape: f32[1,32], index: 5, kind: input, shape index: {}]
  %s6 = inlined_call_operand.vmem [shape: f32[32,64], index: 6, kind: input, shape index: {}]
  %s7 = inlined_call_operand.vmem [shape: f32[1,64], index: 7, kind: input, shape index: {}]
  %s8 = inlined_call_operand.vmem [shape: f32[64,32], index: 8, kind: input, shape index: {}]
  %s9 = inlined_call_operand.vmem [shape: f32[1,32], index: 9, kind: input, shape index: {}]
  %s10 = inlined_call_operand.hbm [shape: f32[2,8,32], index: 10, kind: output, shape index: {}]
  %s11 = sld [smem:[#allocation0]]
  $region77: #{tpu_custom_call.1} parent=0
    _
  %s13 = ssub.s32 1, %s11
  %s14 = scalar_select 0, %s13, %s11
  $region1: #{tpu_custom_call.1} parent=0
    #allocation4 [shape = 'u8[8192]{0}', space=vmem, size = 0x2000, scoped, tag = 'input window, operand 0']
    #allocation5 [shape = 's32[2]{0}', space=sflag, size = 0x8, scoped, tag = 'scoped memory for tpu_custom_call.1']
    #allocation6 [shape = 's32[2]{0}', space=sflag, size = 0x8, scoped, tag = 'scoped memory for tpu_custom_call.1']
    #allocation7 [shape = 'u8[8192]{0}', space=vmem, size = 0x2000, scoped, tag = 'output window, operand 0']
    %15 = vsyncpa [#allocation5], 0
    %s16 = scalar_lea.sflag [#allocation5], 1
    %17 = vsyncpa %s16, 0
    %18 = vsyncpa [#allocation6], 0
    %s19 = scalar_lea.sflag [#allocation6], 1
    %20 = vsyncpa %s19, 0
    loop: start=0, step=1, limit=4
    $region2: #{tpu_custom_call.1} parent=1 // loop_pre_header
      _
    $region3: #{tpu_custom_call.1} parent=1 // loop_header
      %s22 = sphi 0, %s26
      %p23 = scmp.ge.s32.totalorder %s22, 4
      %s32 = sphi 0, %s34
      %s35 = sphi 0, %s32
      %s36 = sphi 0, %s35
      %s52 = sphi 0, %s36
      %s58 = sphi 0, %s60
      %s61 = sphi 0, %s58
      %s62 = sphi 0, %s61
      %s78 = sphi 0, %s62
      %s82 = sphi 0, %s82
      %s84 = sphi 0, %s82
      %s85 = sphi 0, %s84
      %s99 = sphi 0, %s85
      %s103 = sphi 0, %s103
      %s105 = sphi 0, %s103
      %s106 = sphi 0, %s105
      %s120 = sphi 0, %s106
      %s124 = sphi 0, %s124
      %s126 = sphi 0, %s124
      %s127 = sphi 0, %s126
      %s141 = sphi 0, %s127
      %s145 = sphi 0, %s145
      %s147 = sphi 0, %s145
      %s148 = sphi 0, %s147
      %s162 = sphi 0, %s148
      %s166 = sphi 0, %s166
      %s168 = sphi 0, %s166
      %s169 = sphi 0, %s168
      %s183 = sphi 0, %s169
      %s187 = sphi 0, %s187
      %s189 = sphi 0, %s187
      %s190 = sphi 0, %s189
      %s204 = sphi 0, %s190
      %s208 = sphi 0, %s208
      %s210 = sphi 0, %s208
      %s211 = sphi 0, %s210
      %s225 = sphi 0, %s211
      %s229 = sphi 0, %s229
      %s231 = sphi 0, %s229
      %s232 = sphi 0, %s231
      %s246 = sphi 0, %s232
      %s252 = sphi 0, %s254
      %s255 = sphi 0, %s252
      %s256 = sphi 0, %s255
      %s272 = sphi 0, %s256
    $region4: #{tpu_custom_call.1} parent=1 // loop_header_branch
      %25 = sbr.rel (%p23) target = $region8
    $region5: #{tpu_custom_call.1} parent=1 // loop_body
      %s27 = ssub.s32 %s22, 1
      %s28 = ssub.s32 %s22, 2
      %s29 = sadd.s32 %s22, 1
      %s30 = ssub.s32 %s22, %s29
      %p31 = scmp.eq.s32.totalorder %s30, 0
      %s33 = sadd.s32 %s32, 1
      %s34 = scalar_select %p31, %s32, %s33
      %p37 = pneg %p31
      %p38 = scmp.eq.s32.totalorder %s22, 1
      %p39 = por %p37, %p38
      %p40 = scmp.ne.s32.totalorder %s32, %s35
      %p41 = scmp.eq.s32.totalorder %s22, 0
      %p42 = por %p40, %p41
      %p43 = scmp.ne.s32.totalorder %s32, %s35
      %p44 = scmp.eq.s32.totalorder %s27, 1
      %p45 = por %p43, %p44
      %p46 = scmp.ne.s32.totalorder %s35, %s36
      %p47 = scmp.eq.s32.totalorder %s27, 0
      %p48 = por %p46, %p47
      %p49 = scmp.ne.s32.totalorder %s35, %s36
      %p50 = scmp.eq.s32.totalorder %s28, 1
      %p51 = por %p49, %p50
      %p53 = scmp.ne.s32.totalorder %s36, %s52
      %p54 = scmp.eq.s32.totalorder %s28, 0
      %p55 = por %p53, %p54
      %s56 = ssub.s32 %s22, %s29
      %p57 = scmp.eq.s32.totalorder %s56, 0
      %s59 = sadd.s32 %s58, 1
      %s60 = scalar_select %p57, %s58, %s59
      %p63 = pneg %p57
      %p64 = scmp.eq.s32.totalorder %s22, 1
      %p65 = por %p63, %p64
      %p66 = scmp.ne.s32.totalorder %s58, %s61
      %p67 = scmp.eq.s32.totalorder %s22, 0
      %p68 = por %p66, %p67
      %p69 = scmp.ne.s32.totalorder %s58, %s61
      %p70 = scmp.eq.s32.totalorder %s27, 1
      %p71 = por %p69, %p70
      %p72 = scmp.ne.s32.totalorder %s61, %s62
      %p73 = scmp.eq.s32.totalorder %s27, 0
      %p74 = por %p72, %p73
      %p75 = scmp.ne.s32.totalorder %s61, %s62
      %p76 = scmp.eq.s32.totalorder %s28, 1
      %p77 = por %p75, %p76
      %p79 = scmp.ne.s32.totalorder %s62, %s78
      %p80 = scmp.eq.s32.totalorder %s28, 0
      %p81 = por %p79, %p80
      %s83 = sadd.s32 %s82, 1
      %p86 = scmp.eq.s32.totalorder %s22, 1
      %p87 = scmp.ne.s32.totalorder %s82, %s84
      %p88 = scmp.eq.s32.totalorder %s22, 0
      %p89 = por %p87, %p88
      %p90 = scmp.ne.s32.totalorder %s82, %s84
      %p91 = scmp.eq.s32.totalorder %s27, 1
      %p92 = por %p90, %p91
      %p93 = scmp.ne.s32.totalorder %s84, %s85
      %p94 = scmp.eq.s32.totalorder %s27, 0
      %p95 = por %p93, %p94
      %p96 = scmp.ne.s32.totalorder %s84, %s85
      %p97 = scmp.eq.s32.totalorder %s28, 1
      %p98 = por %p96, %p97
      %p100 = scmp.ne.s32.totalorder %s85, %s99
      %p101 = scmp.eq.s32.totalorder %s28, 0
      %p102 = por %p100, %p101
      %s104 = sadd.s32 %s103, 1
      %p107 = scmp.eq.s32.totalorder %s22, 1
      %p108 = scmp.ne.s32.totalorder %s103, %s105
      %p109 = scmp.eq.s32.totalorder %s22, 0
      %p110 = por %p108, %p109
      %p111 = scmp.ne.s32.totalorder %s103, %s105
      %p112 = scmp.eq.s32.totalorder %s27, 1
      %p113 = por %p111, %p112
      %p114 = scmp.ne.s32.totalorder %s105, %s106
      %p115 = scmp.eq.s32.totalorder %s27, 0
      %p116 = por %p114, %p115
      %p117 = scmp.ne.s32.totalorder %s105, %s106
      %p118 = scmp.eq.s32.totalorder %s28, 1
      %p119 = por %p117, %p118
      %p121 = scmp.ne.s32.totalorder %s106, %s120
      %p122 = scmp.eq.s32.totalorder %s28, 0
      %p123 = por %p121, %p122
      %s125 = sadd.s32 %s124, 1
      %p128 = scmp.eq.s32.totalorder %s22, 1
      %p129 = scmp.ne.s32.totalorder %s124, %s126
      %p130 = scmp.eq.s32.totalorder %s22, 0
      %p131 = por %p129, %p130
      %p132 = scmp.ne.s32.totalorder %s124, %s126
      %p133 = scmp.eq.s32.totalorder %s27, 1
      %p134 = por %p132, %p133
      %p135 = scmp.ne.s32.totalorder %s126, %s127
      %p136 = scmp.eq.s32.totalorder %s27, 0
      %p137 = por %p135, %p136
      %p138 = scmp.ne.s32.totalorder %s126, %s127
      %p139 = scmp.eq.s32.totalorder %s28, 1
      %p140 = por %p138, %p139
      %p142 = scmp.ne.s32.totalorder %s127, %s141
      %p143 = scmp.eq.s32.totalorder %s28, 0
      %p144 = por %p142, %p143
      %s146 = sadd.s32 %s145, 1
      %p149 = scmp.eq.s32.totalorder %s22, 1
      %p150 = scmp.ne.s32.totalorder %s145, %s147
      %p151 = scmp.eq.s32.totalorder %s22, 0
      %p152 = por %p150, %p151
      %p153 = scmp.ne.s32.totalorder %s145, %s147
      %p154 = scmp.eq.s32.totalorder %s27, 1
      %p155 = por %p153, %p154
      %p156 = scmp.ne.s32.totalorder %s147, %s148
      %p157 = scmp.eq.s32.totalorder %s27, 0
      %p158 = por %p156, %p157
      %p159 = scmp.ne.s32.totalorder %s147, %s148
      %p160 = scmp.eq.s32.totalorder %s28, 1
      %p161 = por %p159, %p160
      %p163 = scmp.ne.s32.totalorder %s148, %s162
      %p164 = scmp.eq.s32.totalorder %s28, 0
      %p165 = por %p163, %p164
      %s167 = sadd.s32 %s166, 1
      %p170 = scmp.eq.s32.totalorder %s22, 1
      %p171 = scmp.ne.s32.totalorder %s166, %s168
      %p172 = scmp.eq.s32.totalorder %s22, 0
      %p173 = por %p171, %p172
      %p174 = scmp.ne.s32.totalorder %s166, %s168
      %p175 = scmp.eq.s32.totalorder %s27, 1
      %p176 = por %p174, %p175
      %p177 = scmp.ne.s32.totalorder %s168, %s169
      %p178 = scmp.eq.s32.totalorder %s27, 0
      %p179 = por %p177, %p178
      %p180 = scmp.ne.s32.totalorder %s168, %s169
      %p181 = scmp.eq.s32.totalorder %s28, 1
      %p182 = por %p180, %p181
      %p184 = scmp.ne.s32.totalorder %s169, %s183
      %p185 = scmp.eq.s32.totalorder %s28, 0
      %p186 = por %p184, %p185
      %s188 = sadd.s32 %s187, 1
      %p191 = scmp.eq.s32.totalorder %s22, 1
      %p192 = scmp.ne.s32.totalorder %s187, %s189
      %p193 = scmp.eq.s32.totalorder %s22, 0
      %p194 = por %p192, %p193
      %p195 = scmp.ne.s32.totalorder %s187, %s189
      %p196 = scmp.eq.s32.totalorder %s27, 1
      %p197 = por %p195, %p196
      %p198 = scmp.ne.s32.totalorder %s189, %s190
      %p199 = scmp.eq.s32.totalorder %s27, 0
      %p200 = por %p198, %p199
      %p201 = scmp.ne.s32.totalorder %s189, %s190
      %p202 = scmp.eq.s32.totalorder %s28, 1
      %p203 = por %p201, %p202
      %p205 = scmp.ne.s32.totalorder %s190, %s204
      %p206 = scmp.eq.s32.totalorder %s28, 0
      %p207 = por %p205, %p206
      %s209 = sadd.s32 %s208, 1
      %p212 = scmp.eq.s32.totalorder %s22, 1
      %p213 = scmp.ne.s32.totalorder %s208, %s210
      %p214 = scmp.eq.s32.totalorder %s22, 0
      %p215 = por %p213, %p214
      %p216 = scmp.ne.s32.totalorder %s208, %s210
      %p217 = scmp.eq.s32.totalorder %s27, 1
      %p218 = por %p216, %p217
      %p219 = scmp.ne.s32.totalorder %s210, %s211
      %p220 = scmp.eq.s32.totalorder %s27, 0
      %p221 = por %p219, %p220
      %p222 = scmp.ne.s32.totalorder %s210, %s211
      %p223 = scmp.eq.s32.totalorder %s28, 1
      %p224 = por %p222, %p223
      %p226 = scmp.ne.s32.totalorder %s211, %s225
      %p227 = scmp.eq.s32.totalorder %s28, 0
      %p228 = por %p226, %p227
      %s230 = sadd.s32 %s229, 1
      %p233 = scmp.eq.s32.totalorder %s22, 1
      %p234 = scmp.ne.s32.totalorder %s229, %s231
      %p235 = scmp.eq.s32.totalorder %s22, 0
      %p236 = por %p234, %p235
      %p237 = scmp.ne.s32.totalorder %s229, %s231
      %p238 = scmp.eq.s32.totalorder %s27, 1
      %p239 = por %p237, %p238
      %p240 = scmp.ne.s32.totalorder %s231, %s232
      %p241 = scmp.eq.s32.totalorder %s27, 0
      %p242 = por %p240, %p241
      %p243 = scmp.ne.s32.totalorder %s231, %s232
      %p244 = scmp.eq.s32.totalorder %s28, 1
      %p245 = por %p243, %p244
      %p247 = scmp.ne.s32.totalorder %s232, %s246
      %p248 = scmp.eq.s32.totalorder %s28, 0
      %p249 = por %p247, %p248
      %s250 = ssub.s32 %s22, %s29
      %p251 = scmp.eq.s32.totalorder %s250, 0
      %s253 = sadd.s32 %s252, 1
      %s254 = scalar_select %p251, %s252, %s253
      %p257 = pneg %p251
      %p258 = scmp.eq.s32.totalorder %s22, 1
      %p259 = por %p257, %p258
      %p260 = scmp.ne.s32.totalorder %s252, %s255
      %p261 = scmp.eq.s32.totalorder %s22, 0
      %p262 = por %p260, %p261
      %p263 = scmp.ne.s32.totalorder %s252, %s255
      %p264 = scmp.eq.s32.totalorder %s27, 1
      %p265 = por %p263, %p264
      %p266 = scmp.ne.s32.totalorder %s255, %s256
      %p267 = scmp.eq.s32.totalorder %s27, 0
      %p268 = por %p266, %p267
      %p269 = scmp.ne.s32.totalorder %s255, %s256
      %p270 = scmp.eq.s32.totalorder %s28, 1
      %p271 = por %p269, %p270
      %p273 = scmp.ne.s32.totalorder %s256, %s272
      %p274 = scmp.eq.s32.totalorder %s28, 0
      %p275 = por %p273, %p274
      %p276 = scmp.le.s32.totalorder 1, %s22
      %p277 = scmp.lt.s32.totalorder %s22, 3
      %p278 = pnand %p276, %p277
      %p279 = pneg %p278
      // Predicated region
      $region9: #{tpu_custom_call.1} parent=5 // pred_check
        _
      $region10: #{tpu_custom_call.1} parent=5 // pred_check_branch
        %281 = sbr.rel (%p278) target = $region12
      $region11: #{tpu_custom_call.1} parent=5 // pred_region
        %s282 = ssub.s32 %s22, 1
        // Predicated region
        $region13: #{tpu_custom_call.1} parent=11 // pred_check
          %p283 = pneg %p95
        $region14: #{tpu_custom_call.1} parent=11 // pred_check_branch
          %285 = sbr.rel (%p283) target = $region16
        $region15: #{tpu_custom_call.1} parent=11 // pred_region
          _
        $region16: #{tpu_custom_call.1} parent=11 // pred_fallthru
          _
        // Predicated region
        $region17: #{tpu_custom_call.1} parent=11 // pred_check
          %p286 = pneg %p116
        $region18: #{tpu_custom_call.1} parent=11 // pred_check_branch
          %288 = sbr.rel (%p286) target = $region20
        $region19: #{tpu_custom_call.1} parent=11 // pred_region
          _
        $region20: #{tpu_custom_call.1} parent=11 // pred_fallthru
          _
        // Predicated region
        $region21: #{tpu_custom_call.1} parent=11 // pred_check
          %p289 = pneg %p137
        $region22: #{tpu_custom_call.1} parent=11 // pred_check_branch
          %291 = sbr.rel (%p289) target = $region24
        $region23: #{tpu_custom_call.1} parent=11 // pred_region
          _
        $region24: #{tpu_custom_call.1} parent=11 // pred_fallthru
          _
        // Predicated region
        $region25: #{tpu_custom_call.1} parent=11 // pred_check
          %p292 = pneg %p158
        $region26: #{tpu_custom_call.1} parent=11 // pred_check_branch
          %294 = sbr.rel (%p292) target = $region28
        $region27: #{tpu_custom_call.1} parent=11 // pred_region
          _
        $region28: #{tpu_custom_call.1} parent=11 // pred_fallthru
          _
        // Predicated region
        $region29: #{tpu_custom_call.1} parent=11 // pred_check
          %p295 = pneg %p179
        $region30: #{tpu_custom_call.1} parent=11 // pred_check_branch
          %297 = sbr.rel (%p295) target = $region32
        $region31: #{tpu_custom_call.1} parent=11 // pred_region
          _
        $region32: #{tpu_custom_call.1} parent=11 // pred_fallthru
          _
        // Predicated region
        $region33: #{tpu_custom_call.1} parent=11 // pred_check
          %p298 = pneg %p200
        $region34: #{tpu_custom_call.1} parent=11 // pred_check_branch
          %300 = sbr.rel (%p298) target = $region36
        $region35: #{tpu_custom_call.1} parent=11 // pred_region
          _
        $region36: #{tpu_custom_call.1} parent=11 // pred_fallthru
          _
        // Predicated region
        $region37: #{tpu_custom_call.1} parent=11 // pred_check
          %p301 = pneg %p221
        $region38: #{tpu_custom_call.1} parent=11 // pred_check_branch
          %303 = sbr.rel (%p301) target = $region40
        $region39: #{tpu_custom_call.1} parent=11 // pred_region
          _
        $region40: #{tpu_custom_call.1} parent=11 // pred_fallthru
          _
        // Predicated region
        $region41: #{tpu_custom_call.1} parent=11 // pred_check
          %p304 = pneg %p242
        $region42: #{tpu_custom_call.1} parent=11 // pred_check_branch
          %306 = sbr.rel (%p304) target = $region44
        $region43: #{tpu_custom_call.1} parent=11 // pred_region
          _
        $region44: #{tpu_custom_call.1} parent=11 // pred_fallthru
          _
      $region12: #{tpu_custom_call.1} parent=5 // pred_fallthru
        _
      %p307 = scmp.lt.s32.totalorder %s22, 2
      // Predicated region
      $region45: #{tpu_custom_call.1} parent=5 // pred_check
        %p308 = pneg %p307
      $region46: #{tpu_custom_call.1} parent=5 // pred_check_branch
        %310 = sbr.rel (%p308) target = $region48
      $region47: #{tpu_custom_call.1} parent=5 // pred_region
        // Predicated region
        $region49: #{tpu_custom_call.1} parent=47 // pred_check
          %p311 = pneg %p42
        $region50: #{tpu_custom_call.1} parent=47 // pred_check_branch
          %313 = sbr.rel (%p311) target = $region52
        $region51: #{tpu_custom_call.1} parent=47 // pred_region
          %s314 = sand.u32 %s32, 1
          %s315 = scalar_lea.sflag [#allocation5], %s314
          %s316 = sand.u32 %s32, 1
          %s317 = smul.addr %s316, 8
          %s318 = scalar_lea.vmem [#allocation4], %s317
          %s320 = ssub.s32 128, 128
          %321 = vsyncadd %s315, %s320
          %s322 = smul.addr %s22, 128
          %s323 = scalar_lea.hbm %s0, %s322
          %s325 = sshll.u32 %s318, 4
          %s326 = int_to_ptr.vmem [resolvable:$true] %s325
          %328 = dma.hbm_to_vmem [thread:$0]  %s323, 128, %s326, %s315
        $region52: #{tpu_custom_call.1} parent=47 // pred_fallthru
          _
        // Predicated region
        $region53: #{tpu_custom_call.1} parent=47 // pred_check
          %p329 = pneg %p68
        $region54: #{tpu_custom_call.1} parent=47 // pred_check_branch
          %331 = sbr.rel (%p329) target = $region56
        $region55: #{tpu_custom_call.1} parent=47 // pred_region
          %p332 = scmp.lt.s32.totalorder %s22, 1
          %s333 = scalar_select %p332, %s22, 1
          %s334 = scalar_lea.vmem %s1, %s333
        $region56: #{tpu_custom_call.1} parent=47 // pred_fallthru
          _
      $region48: #{tpu_custom_call.1} parent=5 // pred_fallthru
        _
      %p335 = scmp.le.s32.totalorder 1, %s22
      %p336 = scmp.lt.s32.totalorder %s22, 3
      %p337 = pnand %p335, %p336
      %p338 = pneg %p337
      // Predicated region
      $region57: #{tpu_custom_call.1} parent=5 // pred_check
        _
      $region58: #{tpu_custom_call.1} parent=5 // pred_check_branch
        %340 = sbr.rel (%p337) target = $region60
      $region59: #{tpu_custom_call.1} parent=5 // pred_region
        %s341 = ssub.s32 %s22, 1
        %s342 = sand.u32 %s35, 1
        %s343 = scalar_lea.sflag [#allocation5], %s342
        %s344 = sand.u32 %s35, 1
        %s345 = smul.addr %s344, 8
        %s346 = scalar_lea.vmem [#allocation4], %s345
        // Predicated region
        $region61: #{tpu_custom_call.1} parent=59 // pred_check
          %p347 = pneg %p48
        $region62: #{tpu_custom_call.1} parent=59 // pred_check_branch
          %349 = sbr.rel (%p347) target = $region64
        $region63: #{tpu_custom_call.1} parent=59 // pred_region
          %350 = dma.done %s343, 128
        $region64: #{tpu_custom_call.1} parent=59 // pred_fallthru
          _
        %s351 = sand.u32 %s35, 1
        %s352 = scalar_lea.sflag [#allocation5], %s351
        %s353 = sand.u32 %s35, 1
        %s354 = smul.addr %s353, 8
        %s355 = scalar_lea.vmem [#allocation4], %s354
        %p356 = pneg %p48
        %p357 = pneg %p45
        %p358 = scmp.lt.s32.totalorder %s27, 1
        %s359 = scalar_select %p358, %s27, 1
        %s360 = scalar_lea.vmem %s1, %s359
        %p361 = pneg %p74
        %p362 = pneg %p71
        %p363 = pneg %p95
        %p364 = pneg %p92
        %p365 = pneg %p116
        %p366 = pneg %p113
        %p367 = pneg %p137
        %p368 = pneg %p134
        %p369 = pneg %p158
        %p370 = pneg %p155
        %p371 = pneg %p179
        %p372 = pneg %p176
        %p373 = pneg %p200
        %p374 = pneg %p197
        %p375 = pneg %p221
        %p376 = pneg %p218
        %p377 = pneg %p242
        %p378 = pneg %p239
        %p379 = pneg %p268
        %p380 = pneg %p265
        %s381 = sand.u32 %s255, 1
        %s382 = scalar_lea.sflag [#allocation6], %s381
        %s383 = sand.u32 %s255, 1
        %s384 = smul.addr %s383, 8
        %s385 = scalar_lea.vmem [#allocation7], %s384
        %p386 = scmp.lt.s32.totalorder %s27, 1
        %s387 = scalar_select %p386, %s27, 1
        %s388 = scalar_lea.vmem %s1, %s387
        %v389 = vld [vmem:[%s346] sm:$0xff]
        %v390 = vld [vmem:[%s388] sm:$0x1]
        %vm391 = vcmp.eq.f32.partialorder %v390, 0.0
        %v392 = vsel %vm391, -1e+09, 0.0
        %vm393 = vcmask 261120
        %v394 = vsel %vm393, %v389, 0.0
        %395 = vadd.xlane.f32.xlu0 %v394
        %v396 = vpop.xlane.xlu0 %395
        %v397 = vrcp.pop 32.0
        %v398 = vmul.f32 %v396, %v397
        %v399 = vsub.f32 %v389, %v398
        %v400 = vmul.f32 %v399, %v399
        %v401 = vsel %vm393, %v400, 0.0
        %402 = vadd.xlane.f32.xlu0 %v401
        %v403 = vpop.xlane.xlu0 %402
        %v404 = vmul.f32 %v403, 0.032258064
        %v405 = vrsqrt.pop %v404
        %v406 = vmul.f32 %v404, %v405
        %vm407 = vcmp.eq.f32.partialorder %v404, inf
        %v408 = vsel %vm407, %v404, %v406
        %vm409 = vcmp.eq.f32.partialorder %v404, 0.0
        %v410 = vand.u32 %v404, 2147483648
        %v411 = vsel %vm409, %v410, %v408
        %v412 = vadd.f32 %v411, 1e-06
        %v413 = vrcp.pop %v412
        %v414 = vmul.f32 %v399, %v413
        %v415 = vld [vmem:[%s2] sm:$0xff]
        %v416 = vld [vmem:[%s2 + $0x8] sm:$0xff]
        %v417 = vld [vmem:[%s2 + $0x10] sm:$0xff]
        %v418 = vld [vmem:[%s2 + $0x18] sm:$0xff]
        %v419 = vld [vmem:[%s3] sm:$0x1]
        %v421 = vlaneseq
        %v422 = vshrl.u32 %v421, 7
        %v423 = vsub.s32 0, %v422
        %v424 = vrot.slane %v419, %v423
        %v427 = vsel %vm393, %v414, 0
        %429 = vmatprep.subr.mxu0 0.0
        %430 = vmatpush1.msra.mxu0 %v415
        %431 = vmatprep.subr.mxu0 0.0
        %432 = vmatpush1.msra.mxu0 %v416
        %433 = vmatprep.subr.mxu0 0.0
        %434 = vmatpush1.msra.mxu0 %v417
        %435 = vmatprep.subr.mxu0 0.0
        %436 = vmatpush1.msra.mxu0 %v418
        %437 = vmatprep.subr.mxu0 0.0
        %438 = vmatpush1.msra.mxu0 0.0
        %439 = vmatprep.subr.mxu0 0.0
        %440 = vmatpush1.msra.mxu0 0.0
        %441 = vmatprep.subr.mxu0 0.0
        %442 = vmatpush1.msra.mxu0 0.0
        %443 = vmatprep.subr.mxu0 0.0
        %444 = vmatpush1.msra.mxu0 0.0
        %445 = vmatprep.subr.mxu0 0.0
        %446 = vmatpush1.msra.mxu0 0.0
        %447 = vmatprep.subr.mxu0 0.0
        %448 = vmatpush1.msra.mxu0 0.0
        %449 = vmatprep.subr.mxu0 0.0
        %450 = vmatpush1.msra.mxu0 0.0
        %451 = vmatprep.subr.mxu0 0.0
        %452 = vmatpush1.msra.mxu0 0.0
        %453 = vmatprep.subr.mxu0 0.0
        %454 = vmatpush1.msra.mxu0 0.0
        %455 = vmatprep.subr.mxu0 0.0
        %456 = vmatpush1.msra.mxu0 0.0
        %457 = vmatprep.subr.mxu0 0.0
        %458 = vmatpush1.msra.mxu0 0.0
        %459 = vmatprep.subr.mxu0 0.0
        %460 = vmatpush1.msra.mxu0 0.0
        %461 = vmatprep.subr.mxu0 0.0
        %462 = vmatpush1.msra.mxu0 0.0
        %463 = vmatprep.subr.mxu0 0.0
        %464 = vmatpush1.msra.mxu0 0.0
        %465 = vmatprep.subr.mxu0 0.0
        %466 = vmatpush1.msra.mxu0 0.0
        %467 = vmatprep.subr.mxu0 0.0
        %468 = vmatpush1.msra.mxu0 0.0
        %469 = vmatprep.subr.mxu0 0.0
        %470 = vmatpush1.msra.mxu0 0.0
        %471 = vmatprep.subr.mxu0 0.0
        %472 = vmatpush1.msra.mxu0 0.0
        %473 = vmatprep.subr.mxu0 0.0
        %474 = vmatpush1.msra.mxu0 0.0
        %475 = vmatprep.subr.mxu0 0.0
        %476 = vmatpush1.msra.mxu0 0.0
        %477 = vmatprep.subr.mxu0 0.0
        %478 = vmatpush1.msra.mxu0 0.0
        %479 = vmatprep.subr.mxu0 0.0
        %480 = vmatpush1.msra.mxu0 0.0
        %481 = vmatprep.subr.mxu0 0.0
        %482 = vmatpush1.msra.mxu0 0.0
        %483 = vmatprep.subr.mxu0 0.0
        %484 = vmatpush1.msra.mxu0 0.0
        %485 = vmatprep.subr.mxu0 0.0
        %486 = vmatpush1.msra.mxu0 0.0
        %487 = vmatprep.subr.mxu0 0.0
        %488 = vmatpush1.msra.mxu0 0.0
        %489 = vmatprep.subr.mxu0 0.0
        %490 = vmatpush1.msra.mxu0 0.0
        %491 = vmatprep.subr.mxu0 0.0
        %492 = vmatpush1.msra.mxu0 0.0
        %493 = vmatprep.mubr.f32.mxu0 0.0
        %494 = vmatmul.mubr.f32.gmra.mrb[0].mxu0 %v427
        %v495 = vpop.f32.mrb[0].mxu0
        %v496 = vadd.f32 %v424, %v495
        %v497 = vpop.f32.mrb[0].mxu0
        %498 = vdwg.mxu0
        %500 = vrot.lane.b32.xlu0 %v496, 96
        %v501 = vpop.permute.xlu0 %500
        %vm502 = vcmask 64512
        %v503 = vsel %vm502, %v496, 0
        %v505 = vsel %vm502, %v501, 0
        %507 = vmatprep.subr.mxu0 0.0
        %508 = vmatpush1.xpose.msra.mxu0 %v505
        %509 = vmatprep.subr.mxu0 0.0
        %510 = vmatpush1.xpose.msra.mxu0 0.0
        %511 = vmatprep.subr.mxu0 0.0
        %512 = vmatpush1.xpose.msra.mxu0 0.0
        %513 = vmatprep.subr.mxu0 0.0
        %514 = vmatpush1.xpose.msra.mxu0 0.0
        %515 = vmatprep.subr.mxu0 0.0
        %516 = vmatpush1.xpose.msra.mxu0 0.0
        %517 = vmatprep.subr.mxu0 0.0
        %518 = vmatpush1.xpose.msra.mxu0 0.0
        %519 = vmatprep.subr.mxu0 0.0
        %520 = vmatpush1.xpose.msra.mxu0 0.0
        %521 = vmatprep.subr.mxu0 0.0
        %522 = vmatpush1.xpose.msra.mxu0 0.0
        %523 = vmatprep.subr.mxu0 0.0
        %524 = vmatpush1.xpose.msra.mxu0 0.0
        %525 = vmatprep.subr.mxu0 0.0
        %526 = vmatpush1.xpose.msra.mxu0 0.0
        %527 = vmatprep.subr.mxu0 0.0
        %528 = vmatpush1.xpose.msra.mxu0 0.0
        %529 = vmatprep.subr.mxu0 0.0
        %530 = vmatpush1.xpose.msra.mxu0 0.0
        %531 = vmatprep.subr.mxu0 0.0
        %532 = vmatpush1.xpose.msra.mxu0 0.0
        %533 = vmatprep.subr.mxu0 0.0
        %534 = vmatpush1.xpose.msra.mxu0 0.0
        %535 = vmatprep.subr.mxu0 0.0
        %536 = vmatpush1.xpose.msra.mxu0 0.0
        %537 = vmatprep.subr.mxu0 0.0
        %538 = vmatpush1.xpose.msra.mxu0 0.0
        %539 = vmatprep.subr.mxu0 0.0
        %540 = vmatpush1.xpose.msra.mxu0 0.0
        %541 = vmatprep.subr.mxu0 0.0
        %542 = vmatpush1.xpose.msra.mxu0 0.0
        %543 = vmatprep.subr.mxu0 0.0
        %544 = vmatpush1.xpose.msra.mxu0 0.0
        %545 = vmatprep.subr.mxu0 0.0
        %546 = vmatpush1.xpose.msra.mxu0 0.0
        %547 = vmatprep.subr.mxu0 0.0
        %548 = vmatpush1.xpose.msra.mxu0 0.0
        %549 = vmatprep.subr.mxu0 0.0
        %550 = vmatpush1.xpose.msra.mxu0 0.0
        %551 = vmatprep.subr.mxu0 0.0
        %552 = vmatpush1.xpose.msra.mxu0 0.0
        %553 = vmatprep.subr.mxu0 0.0
        %554 = vmatpush1.xpose.msra.mxu0 0.0
        %555 = vmatprep.subr.mxu0 0.0
        %556 = vmatpush1.xpose.msra.mxu0 0.0
        %557 = vmatprep.subr.mxu0 0.0
        %558 = vmatpush1.xpose.msra.mxu0 0.0
        %559 = vmatprep.subr.mxu0 0.0
        %560 = vmatpush1.xpose.msra.mxu0 0.0
        %561 = vmatprep.subr.mxu0 0.0
        %562 = vmatpush1.xpose.msra.mxu0 0.0
        %563 = vmatprep.subr.mxu0 0.0
        %564 = vmatpush1.xpose.msra.mxu0 0.0
        %565 = vmatprep.subr.mxu0 0.0
        %566 = vmatpush1.xpose.msra.mxu0 0.0
        %567 = vmatprep.subr.mxu0 0.0
        %568 = vmatpush1.xpose.msra.mxu0 0.0
        %569 = vmatprep.subr.mxu0 0.0
        %570 = vmatpush1.xpose.msra.mxu0 0.0
        %571 = vmatprep.mubr.f32.mxu0 0.0
        %572 = vmatmul.mubr.f32.gmra.mrb[0].mxu0 %v503
        %v573 = vpop.f32.mrb[0].mxu0
        %v574 = vadd.f32 0.0, %v573
        %v575 = vpop.f32.mrb[0].mxu0
        %576 = vdwg.mxu0
        %v577 = vmul.f32 %v574, 0.35355338
        %v579 = vlaneseq
        %v580 = vshrl.u32 %v579, 7
        %v581 = vsub.s32 0, %v580
        %v582 = vrot.slane %v392, %v581
        %v584 = vadd.f32 %v577, %v582
        %v585 = vsel %vm502, %v584, -inf
        %586 = vmax.xlane.f32.xlu0 %v585
        %v587 = vpop.xlane.xlu0 %586
        %v588 = vsub.f32 %v584, %v587
        %v589 = vmul.f32 %v588, 1.442695
        %v590 = vpow.pop %v589
        %v591 = vsel %vm502, %v590, 0.0
        %592 = vadd.xlane.f32.xlu0 %v591
        %v593 = vpop.xlane.xlu0 %592
        %v594 = vrcp.pop %v593
        %v595 = vmul.f32 %v590, %v594
        %596 = vrot.lane.b32.xlu0 %v496, 64
        %v597 = vpop.permute.xlu0 %596
        %v600 = vsel %vm502, %v595, 0
        %602 = vmatprep.subr.mxu0 0.0
        %603 = vmatpush1.msra.mxu0 %v597
        %604 = vmatprep.subr.mxu0 0.0
        %605 = vmatpush1.msra.mxu0 0.0
        %606 = vmatprep.subr.mxu0 0.0
        %607 = vmatpush1.msra.mxu0 0.0
        %608 = vmatprep.subr.mxu0 0.0
        %609 = vmatpush1.msra.mxu0 0.0
        %610 = vmatprep.subr.mxu0 0.0
        %611 = vmatpush1.msra.mxu0 0.0
        %612 = vmatprep.subr.mxu0 0.0
        %613 = vmatpush1.msra.mxu0 0.0
        %614 = vmatprep.subr.mxu0 0.0
        %615 = vmatpush1.msra.mxu0 0.0
        %616 = vmatprep.subr.mxu0 0.0
        %617 = vmatpush1.msra.mxu0 0.0
        %618 = vmatprep.subr.mxu0 0.0
        %619 = vmatpush1.msra.mxu0 0.0
        %620 = vmatprep.subr.mxu0 0.0
        %621 = vmatpush1.msra.mxu0 0.0
        %622 = vmatprep.subr.mxu0 0.0
        %623 = vmatpush1.msra.mxu0 0.0
        %624 = vmatprep.subr.mxu0 0.0
        %625 = vmatpush1.msra.mxu0 0.0
        %626 = vmatprep.subr.mxu0 0.0
        %627 = vmatpush1.msra.mxu0 0.0
        %628 = vmatprep.subr.mxu0 0.0
        %629 = vmatpush1.msra.mxu0 0.0
        %630 = vmatprep.subr.mxu0 0.0
        %631 = vmatpush1.msra.mxu0 0.0
        %632 = vmatprep.subr.mxu0 0.0
        %633 = vmatpush1.msra.mxu0 0.0
        %634 = vmatprep.subr.mxu0 0.0
        %635 = vmatpush1.msra.mxu0 0.0
        %636 = vmatprep.subr.mxu0 0.0
        %637 = vmatpush1.msra.mxu0 0.0
        %638 = vmatprep.subr.mxu0 0.0
        %639 = vmatpush1.msra.mxu0 0.0
        %640 = vmatprep.subr.mxu0 0.0
        %641 = vmatpush1.msra.mxu0 0.0
        %642 = vmatprep.subr.mxu0 0.0
        %643 = vmatpush1.msra.mxu0 0.0
        %644 = vmatprep.subr.mxu0 0.0
        %645 = vmatpush1.msra.mxu0 0.0
        %646 = vmatprep.subr.mxu0 0.0
        %647 = vmatpush1.msra.mxu0 0.0
        %648 = vmatprep.subr.mxu0 0.0
        %649 = vmatpush1.msra.mxu0 0.0
        %650 = vmatprep.subr.mxu0 0.0
        %651 = vmatpush1.msra.mxu0 0.0
        %652 = vmatprep.subr.mxu0 0.0
        %653 = vmatpush1.msra.mxu0 0.0
        %654 = vmatprep.subr.mxu0 0.0
        %655 = vmatpush1.msra.mxu0 0.0
        %656 = vmatprep.subr.mxu0 0.0
        %657 = vmatpush1.msra.mxu0 0.0
        %658 = vmatprep.subr.mxu0 0.0
        %659 = vmatpush1.msra.mxu0 0.0
        %660 = vmatprep.subr.mxu0 0.0
        %661 = vmatpush1.msra.mxu0 0.0
        %662 = vmatprep.subr.mxu0 0.0
        %663 = vmatpush1.msra.mxu0 0.0
        %664 = vmatprep.subr.mxu0 0.0
        %665 = vmatpush1.msra.mxu0 0.0
        %666 = vmatprep.mubr.f32.mxu0 0.0
        %667 = vmatmul.mubr.f32.gmra.mrb[0].mxu0 %v600
        %v668 = vpop.f32.mrb[0].mxu0
        %v669 = vadd.f32 0.0, %v668
        %v670 = vpop.f32.mrb[0].mxu0
        %671 = vdwg.mxu0
        %672 = vst.msk [vmem:[#allocation2] sm:$0xff] %vm502, %v669
        %673 = vrot.lane.b32.xlu0 %v496, 120
        %v674 = vpop.permute.xlu0 %673
        %675 = vrot.lane.b32.xlu0 %v496, 88
        %v676 = vpop.permute.xlu0 %675
        %v677 = vsel %vm502, %v674, 0
        %v679 = vsel %vm502, %v676, 0
        %681 = vmatprep.subr.mxu0 0.0
        %682 = vmatpush1.xpose.msra.mxu0 %v679
        %683 = vmatprep.subr.mxu0 0.0
        %684 = vmatpush1.xpose.msra.mxu0 0.0
        %685 = vmatprep.subr.mxu0 0.0
        %686 = vmatpush1.xpose.msra.mxu0 0.0
        %687 = vmatprep.subr.mxu0 0.0
        %688 = vmatpush1.xpose.msra.mxu0 0.0
        %689 = vmatprep.subr.mxu0 0.0
        %690 = vmatpush1.xpose.msra.mxu0 0.0
        %691 = vmatprep.subr.mxu0 0.0
        %692 = vmatpush1.xpose.msra.mxu0 0.0
        %693 = vmatprep.subr.mxu0 0.0
        %694 = vmatpush1.xpose.msra.mxu0 0.0
        %695 = vmatprep.subr.mxu0 0.0
        %696 = vmatpush1.xpose.msra.mxu0 0.0
        %697 = vmatprep.subr.mxu0 0.0
        %698 = vmatpush1.xpose.msra.mxu0 0.0
        %699 = vmatprep.subr.mxu0 0.0
        %700 = vmatpush1.xpose.msra.mxu0 0.0
        %701 = vmatprep.subr.mxu0 0.0
        %702 = vmatpush1.xpose.msra.mxu0 0.0
        %703 = vmatprep.subr.mxu0 0.0
        %704 = vmatpush1.xpose.msra.mxu0 0.0
        %705 = vmatprep.subr.mxu0 0.0
        %706 = vmatpush1.xpose.msra.mxu0 0.0
        %707 = vmatprep.subr.mxu0 0.0
        %708 = vmatpush1.xpose.msra.mxu0 0.0
        %709 = vmatprep.subr.mxu0 0.0
        %710 = vmatpush1.xpose.msra.mxu0 0.0
        %711 = vmatprep.subr.mxu0 0.0
        %712 = vmatpush1.xpose.msra.mxu0 0.0
        %713 = vmatprep.subr.mxu0 0.0
        %714 = vmatpush1.xpose.msra.mxu0 0.0
        %715 = vmatprep.subr.mxu0 0.0
        %716 = vmatpush1.xpose.msra.mxu0 0.0
        %717 = vmatprep.subr.mxu0 0.0
        %718 = vmatpush1.xpose.msra.mxu0 0.0
        %719 = vmatprep.subr.mxu0 0.0
        %720 = vmatpush1.xpose.msra.mxu0 0.0
        %721 = vmatprep.subr.mxu0 0.0
        %722 = vmatpush1.xpose.msra.mxu0 0.0
        %723 = vmatprep.subr.mxu0 0.0
        %724 = vmatpush1.xpose.msra.mxu0 0.0
        %725 = vmatprep.subr.mxu0 0.0
        %726 = vmatpush1.xpose.msra.mxu0 0.0
        %727 = vmatprep.subr.mxu0 0.0
        %728 = vmatpush1.xpose.msra.mxu0 0.0
        %729 = vmatprep.subr.mxu0 0.0
        %730 = vmatpush1.xpose.msra.mxu0 0.0
        %731 = vmatprep.subr.mxu0 0.0
        %732 = vmatpush1.xpose.msra.mxu0 0.0
        %733 = vmatprep.subr.mxu0 0.0
        %734 = vmatpush1.xpose.msra.mxu0 0.0
        %735 = vmatprep.subr.mxu0 0.0
        %736 = vmatpush1.xpose.msra.mxu0 0.0
        %737 = vmatprep.subr.mxu0 0.0
        %738 = vmatpush1.xpose.msra.mxu0 0.0
        %739 = vmatprep.subr.mxu0 0.0
        %740 = vmatpush1.xpose.msra.mxu0 0.0
        %741 = vmatprep.subr.mxu0 0.0
        %742 = vmatpush1.xpose.msra.mxu0 0.0
        %743 = vmatprep.subr.mxu0 0.0
        %744 = vmatpush1.xpose.msra.mxu0 0.0
        %745 = vmatprep.mubr.f32.mxu0 0.0
        %746 = vmatmul.mubr.f32.gmra.mrb[0].mxu0 %v677
        %v747 = vpop.f32.mrb[0].mxu0
        %v748 = vadd.f32 0.0, %v747
        %v749 = vpop.f32.mrb[0].mxu0
        %750 = vdwg.mxu0
        %v751 = vmul.f32 %v748, 0.35355338
        %v752 = vadd.f32 %v751, %v582
        %v753 = vsel %vm502, %v752, -inf
        %754 = vmax.xlane.f32.xlu0 %v753
        %v755 = vpop.xlane.xlu0 %754
        %v756 = vsub.f32 %v752, %v755
        %v757 = vmul.f32 %v756, 1.442695
        %v758 = vpow.pop %v757
        %v759 = vsel %vm502, %v758, 0.0
        %760 = vadd.xlane.f32.xlu0 %v759
        %v761 = vpop.xlane.xlu0 %760
        %v762 = vrcp.pop %v761
        %v763 = vmul.f32 %v758, %v762
        %764 = vrot.lane.b32.xlu0 %v496, 56
        %v765 = vpop.permute.xlu0 %764
        %v768 = vsel %vm502, %v763, 0
        %770 = vmatprep.subr.mxu0 0.0
        %771 = vmatpush1.msra.mxu0 %v765
        %772 = vmatprep.subr.mxu0 0.0
        %773 = vmatpush1.msra.mxu0 0.0
        %774 = vmatprep.subr.mxu0 0.0
        %775 = vmatpush1.msra.mxu0 0.0
        %776 = vmatprep.subr.mxu0 0.0
        %777 = vmatpush1.msra.mxu0 0.0
        %778 = vmatprep.subr.mxu0 0.0
        %779 = vmatpush1.msra.mxu0 0.0
        %780 = vmatprep.subr.mxu0 0.0
        %781 = vmatpush1.msra.mxu0 0.0
        %782 = vmatprep.subr.mxu0 0.0
        %783 = vmatpush1.msra.mxu0 0.0
        %784 = vmatprep.subr.mxu0 0.0
        %785 = vmatpush1.msra.mxu0 0.0
        %786 = vmatprep.subr.mxu0 0.0
        %787 = vmatpush1.msra.mxu0 0.0
        %788 = vmatprep.subr.mxu0 0.0
        %789 = vmatpush1.msra.mxu0 0.0
        %790 = vmatprep.subr.mxu0 0.0
        %791 = vmatpush1.msra.mxu0 0.0
        %792 = vmatprep.subr.mxu0 0.0
        %793 = vmatpush1.msra.mxu0 0.0
        %794 = vmatprep.subr.mxu0 0.0
        %795 = vmatpush1.msra.mxu0 0.0
        %796 = vmatprep.subr.mxu0 0.0
        %797 = vmatpush1.msra.mxu0 0.0
        %798 = vmatprep.subr.mxu0 0.0
        %799 = vmatpush1.msra.mxu0 0.0
        %800 = vmatprep.subr.mxu0 0.0
        %801 = vmatpush1.msra.mxu0 0.0
        %802 = vmatprep.subr.mxu0 0.0
        %803 = vmatpush1.msra.mxu0 0.0
        %804 = vmatprep.subr.mxu0 0.0
        %805 = vmatpush1.msra.mxu0 0.0
        %806 = vmatprep.subr.mxu0 0.0
        %807 = vmatpush1.msra.mxu0 0.0
        %808 = vmatprep.subr.mxu0 0.0
        %809 = vmatpush1.msra.mxu0 0.0
        %810 = vmatprep.subr.mxu0 0.0
        %811 = vmatpush1.msra.mxu0 0.0
        %812 = vmatprep.subr.mxu0 0.0
        %813 = vmatpush1.msra.mxu0 0.0
        %814 = vmatprep.subr.mxu0 0.0
        %815 = vmatpush1.msra.mxu0 0.0
        %816 = vmatprep.subr.mxu0 0.0
        %817 = vmatpush1.msra.mxu0 0.0
        %818 = vmatprep.subr.mxu0 0.0
        %819 = vmatpush1.msra.mxu0 0.0
        %820 = vmatprep.subr.mxu0 0.0
        %821 = vmatpush1.msra.mxu0 0.0
        %822 = vmatprep.subr.mxu0 0.0
        %823 = vmatpush1.msra.mxu0 0.0
        %824 = vmatprep.subr.mxu0 0.0
        %825 = vmatpush1.msra.mxu0 0.0
        %826 = vmatprep.subr.mxu0 0.0
        %827 = vmatpush1.msra.mxu0 0.0
        %828 = vmatprep.subr.mxu0 0.0
        %829 = vmatpush1.msra.mxu0 0.0
        %830 = vmatprep.subr.mxu0 0.0
        %831 = vmatpush1.msra.mxu0 0.0
        %832 = vmatprep.subr.mxu0 0.0
        %833 = vmatpush1.msra.mxu0 0.0
        %834 = vmatprep.mubr.f32.mxu0 0.0
        %835 = vmatmul.mubr.f32.gmra.mrb[0].mxu0 %v768
        %v836 = vpop.f32.mrb[0].mxu0
        %v837 = vadd.f32 0.0, %v836
        %v838 = vpop.f32.mrb[0].mxu0
        %839 = vdwg.mxu0
        %841 = vrot.lane.b32.xlu0 %v837, 8
        %v842 = vpop.permute.xlu0 %841
        %vm844 = vcmask 130112
        %845 = vst.msk [vmem:[#allocation2] sm:$0xff] %vm844, %v842
        %846 = vrot.lane.b32.xlu0 %v496, 112
        %v847 = vpop.permute.xlu0 %846
        %848 = vrot.lane.b32.xlu0 %v496, 80
        %v849 = vpop.permute.xlu0 %848
        %v850 = vsel %vm502, %v847, 0
        %v852 = vsel %vm502, %v849, 0
        %854 = vmatprep.subr.mxu0 0.0
        %855 = vmatpush1.xpose.msra.mxu0 %v852
        %856 = vmatprep.subr.mxu0 0.0
        %857 = vmatpush1.xpose.msra.mxu0 0.0
        %858 = vmatprep.subr.mxu0 0.0
        %859 = vmatpush1.xpose.msra.mxu0 0.0
        %860 = vmatprep.subr.mxu0 0.0
        %861 = vmatpush1.xpose.msra.mxu0 0.0
        %862 = vmatprep.subr.mxu0 0.0
        %863 = vmatpush1.xpose.msra.mxu0 0.0
        %864 = vmatprep.subr.mxu0 0.0
        %865 = vmatpush1.xpose.msra.mxu0 0.0
        %866 = vmatprep.subr.mxu0 0.0
        %867 = vmatpush1.xpose.msra.mxu0 0.0
        %868 = vmatprep.subr.mxu0 0.0
        %869 = vmatpush1.xpose.msra.mxu0 0.0
        %870 = vmatprep.subr.mxu0 0.0
        %871 = vmatpush1.xpose.msra.mxu0 0.0
        %872 = vmatprep.subr.mxu0 0.0
        %873 = vmatpush1.xpose.msra.mxu0 0.0
        %874 = vmatprep.subr.mxu0 0.0
        %875 = vmatpush1.xpose.msra.mxu0 0.0
        %876 = vmatprep.subr.mxu0 0.0
        %877 = vmatpush1.xpose.msra.mxu0 0.0
        %878 = vmatprep.subr.mxu0 0.0
        %879 = vmatpush1.xpose.msra.mxu0 0.0
        %880 = vmatprep.subr.mxu0 0.0
        %881 = vmatpush1.xpose.msra.mxu0 0.0
        %882 = vmatprep.subr.mxu0 0.0
        %883 = vmatpush1.xpose.msra.mxu0 0.0
        %884 = vmatprep.subr.mxu0 0.0
        %885 = vmatpush1.xpose.msra.mxu0 0.0
        %886 = vmatprep.subr.mxu0 0.0
        %887 = vmatpush1.xpose.msra.mxu0 0.0
        %888 = vmatprep.subr.mxu0 0.0
        %889 = vmatpush1.xpose.msra.mxu0 0.0
        %890 = vmatprep.subr.mxu0 0.0
        %891 = vmatpush1.xpose.msra.mxu0 0.0
        %892 = vmatprep.subr.mxu0 0.0
        %893 = vmatpush1.xpose.msra.mxu0 0.0
        %894 = vmatprep.subr.mxu0 0.0
        %895 = vmatpush1.xpose.msra.mxu0 0.0
        %896 = vmatprep.subr.mxu0 0.0
        %897 = vmatpush1.xpose.msra.mxu0 0.0
        %898 = vmatprep.subr.mxu0 0.0
        %899 = vmatpush1.xpose.msra.mxu0 0.0
        %900 = vmatprep.subr.mxu0 0.0
        %901 = vmatpush1.xpose.msra.mxu0 0.0
        %902 = vmatprep.subr.mxu0 0.0
        %903 = vmatpush1.xpose.msra.mxu0 0.0
        %904 = vmatprep.subr.mxu0 0.0
        %905 = vmatpush1.xpose.msra.mxu0 0.0
        %906 = vmatprep.subr.mxu0 0.0
        %907 = vmatpush1.xpose.msra.mxu0 0.0
        %908 = vmatprep.subr.mxu0 0.0
        %909 = vmatpush1.xpose.msra.mxu0 0.0
        %910 = vmatprep.subr.mxu0 0.0
        %911 = vmatpush1.xpose.msra.mxu0 0.0
        %912 = vmatprep.subr.mxu0 0.0
        %913 = vmatpush1.xpose.msra.mxu0 0.0
        %914 = vmatprep.subr.mxu0 0.0
        %915 = vmatpush1.xpose.msra.mxu0 0.0
        %916 = vmatprep.subr.mxu0 0.0
        %917 = vmatpush1.xpose.msra.mxu0 0.0
        %918 = vmatprep.mubr.f32.mxu0 0.0
        %919 = vmatmul.mubr.f32.gmra.mrb[0].mxu0 %v850
        %v920 = vpop.f32.mrb[0].mxu0
        %v921 = vadd.f32 0.0, %v920
        %v922 = vpop.f32.mrb[0].mxu0
        %923 = vdwg.mxu0
        %v924 = vmul.f32 %v921, 0.35355338
        %v925 = vadd.f32 %v924, %v582
        %v926 = vsel %vm502, %v925, -inf
        %927 = vmax.xlane.f32.xlu0 %v926
        %v928 = vpop.xlane.xlu0 %927
        %v929 = vsub.f32 %v925, %v928
        %v930 = vmul.f32 %v929, 1.442695
        %v931 = vpow.pop %v930
        %v932 = vsel %vm502, %v931, 0.0
        %933 = vadd.xlane.f32.xlu0 %v932
        %v934 = vpop.xlane.xlu0 %933
        %v935 = vrcp.pop %v934
        %v936 = vmul.f32 %v931, %v935
        %937 = vrot.lane.b32.xlu0 %v496, 48
        %v938 = vpop.permute.xlu0 %937
        %v941 = vsel %vm502, %v936, 0
        %943 = vmatprep.subr.mxu0 0.0
        %944 = vmatpush1.msra.mxu0 %v938
        %945 = vmatprep.subr.mxu0 0.0
        %946 = vmatpush1.msra.mxu0 0.0
        %947 = vmatprep.subr.mxu0 0.0
        %948 = vmatpush1.msra.mxu0 0.0
        %949 = vmatprep.subr.mxu0 0.0
        %950 = vmatpush1.msra.mxu0 0.0
        %951 = vmatprep.subr.mxu0 0.0
        %952 = vmatpush1.msra.mxu0 0.0
        %953 = vmatprep.subr.mxu0 0.0
        %954 = vmatpush1.msra.mxu0 0.0
        %955 = vmatprep.subr.mxu0 0.0
        %956 = vmatpush1.msra.mxu0 0.0
        %957 = vmatprep.subr.mxu0 0.0
        %958 = vmatpush1.msra.mxu0 0.0
        %959 = vmatprep.subr.mxu0 0.0
        %960 = vmatpush1.msra.mxu0 0.0
        %961 = vmatprep.subr.mxu0 0.0
        %962 = vmatpush1.msra.mxu0 0.0
        %963 = vmatprep.subr.mxu0 0.0
        %964 = vmatpush1.msra.mxu0 0.0
        %965 = vmatprep.subr.mxu0 0.0
        %966 = vmatpush1.msra.mxu0 0.0
        %967 = vmatprep.subr.mxu0 0.0
        %968 = vmatpush1.msra.mxu0 0.0
        %969 = vmatprep.subr.mxu0 0.0
        %970 = vmatpush1.msra.mxu0 0.0
        %971 = vmatprep.subr.mxu0 0.0
        %972 = vmatpush1.msra.mxu0 0.0
        %973 = vmatprep.subr.mxu0 0.0
        %974 = vmatpush1.msra.mxu0 0.0
        %975 = vmatprep.subr.mxu0 0.0
        %976 = vmatpush1.msra.mxu0 0.0
        %977 = vmatprep.subr.mxu0 0.0
        %978 = vmatpush1.msra.mxu0 0.0
        %979 = vmatprep.subr.mxu0 0.0
        %980 = vmatpush1.msra.mxu0 0.0
        %981 = vmatprep.subr.mxu0 0.0
        %982 = vmatpush1.msra.mxu0 0.0
        %983 = vmatprep.subr.mxu0 0.0
        %984 = vmatpush1.msra.mxu0 0.0
        %985 = vmatprep.subr.mxu0 0.0
        %986 = vmatpush1.msra.mxu0 0.0
        %987 = vmatprep.subr.mxu0 0.0
        %988 = vmatpush1.msra.mxu0 0.0
        %989 = vmatprep.subr.mxu0 0.0
        %990 = vmatpush1.msra.mxu0 0.0
        %991 = vmatprep.subr.mxu0 0.0
        %992 = vmatpush1.msra.mxu0 0.0
        %993 = vmatprep.subr.mxu0 0.0
        %994 = vmatpush1.msra.mxu0 0.0
        %995 = vmatprep.subr.mxu0 0.0
        %996 = vmatpush1.msra.mxu0 0.0
        %997 = vmatprep.subr.mxu0 0.0
        %998 = vmatpush1.msra.mxu0 0.0
        %999 = vmatprep.subr.mxu0 0.0
        %1000 = vmatpush1.msra.mxu0 0.0
        %1001 = vmatprep.subr.mxu0 0.0
        %1002 = vmatpush1.msra.mxu0 0.0
        %1003 = vmatprep.subr.mxu0 0.0
        %1004 = vmatpush1.msra.mxu0 0.0
        %1005 = vmatprep.subr.mxu0 0.0
        %1006 = vmatpush1.msra.mxu0 0.0
        %1007 = vmatprep.mubr.f32.mxu0 0.0
        %1008 = vmatmul.mubr.f32.gmra.mrb[0].mxu0 %v941
        %v1009 = vpop.f32.mrb[0].mxu0
        %v1010 = vadd.f32 0.0, %v1009
        %v1011 = vpop.f32.mrb[0].mxu0
        %1012 = vdwg.mxu0
        %1014 = vrot.lane.b32.xlu0 %v1010, 16
        %v1015 = vpop.permute.xlu0 %1014
        %vm1017 = vcmask 195712
        %1018 = vst.msk [vmem:[#allocation2] sm:$0xff] %vm1017, %v1015
        %1019 = vrot.lane.b32.xlu0 %v496, 104
        %v1020 = vpop.permute.xlu0 %1019
        %1021 = vrot.lane.b32.xlu0 %v496, 72
        %v1022 = vpop.permute.xlu0 %1021
        %v1023 = vsel %vm502, %v1020, 0
        %v1025 = vsel %vm502, %v1022, 0
        %1027 = vmatprep.subr.mxu0 0.0
        %1028 = vmatpush1.xpose.msra.mxu0 %v1025
        %1029 = vmatprep.subr.mxu0 0.0
        %1030 = vmatpush1.xpose.msra.mxu0 0.0
        %1031 = vmatprep.subr.mxu0 0.0
        %1032 = vmatpush1.xpose.msra.mxu0 0.0
        %1033 = vmatprep.subr.mxu0 0.0
        %1034 = vmatpush1.xpose.msra.mxu0 0.0
        %1035 = vmatprep.subr.mxu0 0.0
        %1036 = vmatpush1.xpose.msra.mxu0 0.0
        %1037 = vmatprep.subr.mxu0 0.0
        %1038 = vmatpush1.xpose.msra.mxu0 0.0
        %1039 = vmatprep.subr.mxu0 0.0
        %1040 = vmatpush1.xpose.msra.mxu0 0.0
        %1041 = vmatprep.subr.mxu0 0.0
        %1042 = vmatpush1.xpose.msra.mxu0 0.0
        %1043 = vmatprep.subr.mxu0 0.0
        %1044 = vmatpush1.xpose.msra.mxu0 0.0
        %1045 = vmatprep.subr.mxu0 0.0
        %1046 = vmatpush1.xpose.msra.mxu0 0.0
        %1047 = vmatprep.subr.mxu0 0.0
        %1048 = vmatpush1.xpose.msra.mxu0 0.0
        %1049 = vmatprep.subr.mxu0 0.0
        %1050 = vmatpush1.xpose.msra.mxu0 0.0
        %1051 = vmatprep.subr.mxu0 0.0
        %1052 = vmatpush1.xpose.msra.mxu0 0.0
        %1053 = vmatprep.subr.mxu0 0.0
        %1054 = vmatpush1.xpose.msra.mxu0 0.0
        %1055 = vmatprep.subr.mxu0 0.0
        %1056 = vmatpush1.xpose.msra.mxu0 0.0
        %1057 = vmatprep.subr.mxu0 0.0
        %1058 = vmatpush1.xpose.msra.mxu0 0.0
        %1059 = vmatprep.subr.mxu0 0.0
        %1060 = vmatpush1.xpose.msra.mxu0 0.0
        %1061 = vmatprep.subr.mxu0 0.0
        %1062 = vmatpush1.xpose.msra.mxu0 0.0
        %1063 = vmatprep.subr.mxu0 0.0
        %1064 = vmatpush1.xpose.msra.mxu0 0.0
        %1065 = vmatprep.subr.mxu0 0.0
        %1066 = vmatpush1.xpose.msra.mxu0 0.0
        %1067 = vmatprep.subr.mxu0 0.0
        %1068 = vmatpush1.xpose.msra.mxu0 0.0
        %1069 = vmatprep.subr.mxu0 0.0
        %1070 = vmatpush1.xpose.msra.mxu0 0.0
        %1071 = vmatprep.subr.mxu0 0.0
        %1072 = vmatpush1.xpose.msra.mxu0 0.0
        %1073 = vmatprep.subr.mxu0 0.0
        %1074 = vmatpush1.xpose.msra.mxu0 0.0
        %1075 = vmatprep.subr.mxu0 0.0
        %1076 = vmatpush1.xpose.msra.mxu0 0.0
        %1077 = vmatprep.subr.mxu0 0.0
        %1078 = vmatpush1.xpose.msra.mxu0 0.0
        %1079 = vmatprep.subr.mxu0 0.0
        %1080 = vmatpush1.xpose.msra.mxu0 0.0
        %1081 = vmatprep.subr.mxu0 0.0
        %1082 = vmatpush1.xpose.msra.mxu0 0.0
        %1083 = vmatprep.subr.mxu0 0.0
        %1084 = vmatpush1.xpose.msra.mxu0 0.0
        %1085 = vmatprep.subr.mxu0 0.0
        %1086 = vmatpush1.xpose.msra.mxu0 0.0
        %1087 = vmatprep.subr.mxu0 0.0
        %1088 = vmatpush1.xpose.msra.mxu0 0.0
        %1089 = vmatprep.subr.mxu0 0.0
        %1090 = vmatpush1.xpose.msra.mxu0 0.0
        %1091 = vmatprep.mubr.f32.mxu0 0.0
        %1092 = vmatmul.mubr.f32.gmra.mrb[0].mxu0 %v1023
        %v1093 = vpop.f32.mrb[0].mxu0
        %v1094 = vadd.f32 0.0, %v1093
        %v1095 = vpop.f32.mrb[0].mxu0
        %1096 = vdwg.mxu0
        %v1097 = vmul.f32 %v1094, 0.35355338
        %v1098 = vadd.f32 %v1097, %v582
        %v1099 = vsel %vm502, %v1098, -inf
        %1100 = vmax.xlane.f32.xlu0 %v1099
        %v1101 = vpop.xlane.xlu0 %1100
        %v1102 = vsub.f32 %v1098, %v1101
        %v1103 = vmul.f32 %v1102, 1.442695
        %v1104 = vpow.pop %v1103
        %v1105 = vsel %vm502, %v1104, 0.0
        %1106 = vadd.xlane.f32.xlu0 %v1105
        %v1107 = vpop.xlane.xlu0 %1106
        %v1108 = vrcp.pop %v1107
        %v1109 = vmul.f32 %v1104, %v1108
        %1110 = vrot.lane.b32.xlu0 %v496, 40
        %v1111 = vpop.permute.xlu0 %1110
        %v1114 = vsel %vm502, %v1109, 0
        %1116 = vmatprep.subr.mxu0 0.0
        %1117 = vmatpush1.msra.mxu0 %v1111
        %1118 = vmatprep.subr.mxu0 0.0
        %1119 = vmatpush1.msra.mxu0 0.0
        %1120 = vmatprep.subr.mxu0 0.0
        %1121 = vmatpush1.msra.mxu0 0.0
        %1122 = vmatprep.subr.mxu0 0.0
        %1123 = vmatpush1.msra.mxu0 0.0
        %1124 = vmatprep.subr.mxu0 0.0
        %1125 = vmatpush1.msra.mxu0 0.0
        %1126 = vmatprep.subr.mxu0 0.0
        %1127 = vmatpush1.msra.mxu0 0.0
        %1128 = vmatprep.subr.mxu0 0.0
        %1129 = vmatpush1.msra.mxu0 0.0
        %1130 = vmatprep.subr.mxu0 0.0
        %1131 = vmatpush1.msra.mxu0 0.0
        %1132 = vmatprep.subr.mxu0 0.0
        %1133 = vmatpush1.msra.mxu0 0.0
        %1134 = vmatprep.subr.mxu0 0.0
        %1135 = vmatpush1.msra.mxu0 0.0
        %1136 = vmatprep.subr.mxu0 0.0
        %1137 = vmatpush1.msra.mxu0 0.0
        %1138 = vmatprep.subr.mxu0 0.0
        %1139 = vmatpush1.msra.mxu0 0.0
        %1140 = vmatprep.subr.mxu0 0.0
        %1141 = vmatpush1.msra.mxu0 0.0
        %1142 = vmatprep.subr.mxu0 0.0
        %1143 = vmatpush1.msra.mxu0 0.0
        %1144 = vmatprep.subr.mxu0 0.0
        %1145 = vmatpush1.msra.mxu0 0.0
        %1146 = vmatprep.subr.mxu0 0.0
        %1147 = vmatpush1.msra.mxu0 0.0
        %1148 = vmatprep.subr.mxu0 0.0
        %1149 = vmatpush1.msra.mxu0 0.0
        %1150 = vmatprep.subr.mxu0 0.0
        %1151 = vmatpush1.msra.mxu0 0.0
        %1152 = vmatprep.subr.mxu0 0.0
        %1153 = vmatpush1.msra.mxu0 0.0
        %1154 = vmatprep.subr.mxu0 0.0
        %1155 = vmatpush1.msra.mxu0 0.0
        %1156 = vmatprep.subr.mxu0 0.0
        %1157 = vmatpush1.msra.mxu0 0.0
        %1158 = vmatprep.subr.mxu0 0.0
        %1159 = vmatpush1.msra.mxu0 0.0
        %1160 = vmatprep.subr.mxu0 0.0
        %1161 = vmatpush1.msra.mxu0 0.0
        %1162 = vmatprep.subr.mxu0 0.0
        %1163 = vmatpush1.msra.mxu0 0.0
        %1164 = vmatprep.subr.mxu0 0.0
        %1165 = vmatpush1.msra.mxu0 0.0
        %1166 = vmatprep.subr.mxu0 0.0
        %1167 = vmatpush1.msra.mxu0 0.0
        %1168 = vmatprep.subr.mxu0 0.0
        %1169 = vmatpush1.msra.mxu0 0.0
        %1170 = vmatprep.subr.mxu0 0.0
        %1171 = vmatpush1.msra.mxu0 0.0
        %1172 = vmatprep.subr.mxu0 0.0
        %1173 = vmatpush1.msra.mxu0 0.0
        %1174 = vmatprep.subr.mxu0 0.0
        %1175 = vmatpush1.msra.mxu0 0.0
        %1176 = vmatprep.subr.mxu0 0.0
        %1177 = vmatpush1.msra.mxu0 0.0
        %1178 = vmatprep.subr.mxu0 0.0
        %1179 = vmatpush1.msra.mxu0 0.0
        %1180 = vmatprep.mubr.f32.mxu0 0.0
        %1181 = vmatmul.mubr.f32.gmra.mrb[0].mxu0 %v1114
        %v1182 = vpop.f32.mrb[0].mxu0
        %v1183 = vadd.f32 0.0, %v1182
        %v1184 = vpop.f32.mrb[0].mxu0
        %1185 = vdwg.mxu0
        %1187 = vrot.lane.b32.xlu0 %v1183, 24
        %v1188 = vpop.permute.xlu0 %1187
        %vm1190 = vcmask 261312
        %1191 = vst.msk [vmem:[#allocation2] sm:$0xff] %vm1190, %v1188
        %v1192 = vld [vmem:[#allocation2] sm:$0xff]
        %v1193 = vld [vmem:[%s4] sm:$0xff]
        %v1194 = vld [vmem:[%s4 + $0x8] sm:$0xff]
        %v1195 = vld [vmem:[%s4 + $0x10] sm:$0xff]
        %v1196 = vld [vmem:[%s4 + $0x18] sm:$0xff]
        %v1197 = vld [vmem:[%s5] sm:$0x1]
        %v1199 = vlaneseq
        %v1200 = vshrl.u32 %v1199, 7
        %v1201 = vsub.s32 0, %v1200
        %v1202 = vrot.slane %v1197, %v1201
        %v1205 = vsel %vm393, %v1192, 0
        %1207 = vmatprep.subr.mxu0 0.0
        %1208 = vmatpush1.msra.mxu0 %v1193
        %1209 = vmatprep.subr.mxu0 0.0
        %1210 = vmatpush1.msra.mxu0 %v1194
        %1211 = vmatprep.subr.mxu0 0.0
        %1212 = vmatpush1.msra.mxu0 %v1195
        %1213 = vmatprep.subr.mxu0 0.0
        %1214 = vmatpush1.msra.mxu0 %v1196
        %1215 = vmatprep.subr.mxu0 0.0
        %1216 = vmatpush1.msra.mxu0 0.0
        %1217 = vmatprep.subr.mxu0 0.0
        %1218 = vmatpush1.msra.mxu0 0.0
        %1219 = vmatprep.subr.mxu0 0.0
        %1220 = vmatpush1.msra.mxu0 0.0
        %1221 = vmatprep.subr.mxu0 0.0
        %1222 = vmatpush1.msra.mxu0 0.0
        %1223 = vmatprep.subr.mxu0 0.0
        %1224 = vmatpush1.msra.mxu0 0.0
        %1225 = vmatprep.subr.mxu0 0.0
        %1226 = vmatpush1.msra.mxu0 0.0
        %1227 = vmatprep.subr.mxu0 0.0
        %1228 = vmatpush1.msra.mxu0 0.0
        %1229 = vmatprep.subr.mxu0 0.0
        %1230 = vmatpush1.msra.mxu0 0.0
        %1231 = vmatprep.subr.mxu0 0.0
        %1232 = vmatpush1.msra.mxu0 0.0
        %1233 = vmatprep.subr.mxu0 0.0
        %1234 = vmatpush1.msra.mxu0 0.0
        %1235 = vmatprep.subr.mxu0 0.0
        %1236 = vmatpush1.msra.mxu0 0.0
        %1237 = vmatprep.subr.mxu0 0.0
        %1238 = vmatpush1.msra.mxu0 0.0
        %1239 = vmatprep.subr.mxu0 0.0
        %1240 = vmatpush1.msra.mxu0 0.0
        %1241 = vmatprep.subr.mxu0 0.0
        %1242 = vmatpush1.msra.mxu0 0.0
        %1243 = vmatprep.subr.mxu0 0.0
        %1244 = vmatpush1.msra.mxu0 0.0
        %1245 = vmatprep.subr.mxu0 0.0
        %1246 = vmatpush1.msra.mxu0 0.0
        %1247 = vmatprep.subr.mxu0 0.0
        %1248 = vmatpush1.msra.mxu0 0.0
        %1249 = vmatprep.subr.mxu0 0.0
        %1250 = vmatpush1.msra.mxu0 0.0
        %1251 = vmatprep.subr.mxu0 0.0
        %1252 = vmatpush1.msra.mxu0 0.0
        %1253 = vmatprep.subr.mxu0 0.0
        %1254 = vmatpush1.msra.mxu0 0.0
        %1255 = vmatprep.subr.mxu0 0.0
        %1256 = vmatpush1.msra.mxu0 0.0
        %1257 = vmatprep.subr.mxu0 0.0
        %1258 = vmatpush1.msra.mxu0 0.0
        %1259 = vmatprep.subr.mxu0 0.0
        %1260 = vmatpush1.msra.mxu0 0.0
        %1261 = vmatprep.subr.mxu0 0.0
        %1262 = vmatpush1.msra.mxu0 0.0
        %1263 = vmatprep.subr.mxu0 0.0
        %1264 = vmatpush1.msra.mxu0 0.0
        %1265 = vmatprep.subr.mxu0 0.0
        %1266 = vmatpush1.msra.mxu0 0.0
        %1267 = vmatprep.subr.mxu0 0.0
        %1268 = vmatpush1.msra.mxu0 0.0
        %1269 = vmatprep.subr.mxu0 0.0
        %1270 = vmatpush1.msra.mxu0 0.0
        %1271 = vmatprep.mubr.f32.mxu0 0.0
        %1272 = vmatmul.mubr.f32.gmra.mrb[0].mxu0 %v1205
        %v1273 = vpop.f32.mrb[0].mxu0
        %v1274 = vadd.f32 %v1202, %v1273
        %v1275 = vpop.f32.mrb[0].mxu0
        %1276 = vdwg.mxu0
        %v1277 = vadd.f32 %v389, %v1274
        %v1278 = vsel %vm393, %v1277, 0.0
        %1279 = vadd.xlane.f32.xlu0 %v1278
        %v1280 = vpop.xlane.xlu0 %1279
        %v1281 = vmul.f32 %v1280, %v397
        %v1282 = vsub.f32 %v1277, %v1281
        %v1283 = vmul.f32 %v1282, %v1282
        %v1284 = vsel %vm393, %v1283, 0.0
        %1285 = vadd.xlane.f32.xlu0 %v1284
        %v1286 = vpop.xlane.xlu0 %1285
        %v1287 = vmul.f32 %v1286, 0.032258064
        %v1288 = vrsqrt.pop %v1287
        %v1289 = vmul.f32 %v1287, %v1288
        %vm1290 = vcmp.eq.f32.partialorder %v1287, inf
        %v1291 = vsel %vm1290, %v1287, %v1289
        %vm1292 = vcmp.eq.f32.partialorder %v1287, 0.0
        %v1293 = vand.u32 %v1287, 2147483648
        %v1294 = vsel %vm1292, %v1293, %v1291
        %v1295 = vadd.f32 %v1294, 1e-06
        %v1296 = vrcp.pop %v1295
        %v1297 = vmul.f32 %v1282, %v1296
        %1298 = vst.msk [vmem:[#allocation3] sm:$0xff] %vm393, 0.0
        %v1299 = vld [vmem:[%s6] sm:$0xff]
        %v1300 = vld [vmem:[%s6 + $0x8] sm:$0xff]
        %v1301 = vld [vmem:[%s6 + $0x10] sm:$0xff]
        %v1302 = vld [vmem:[%s6 + $0x18] sm:$0xff]
        %v1303 = vld [vmem:[%s7] sm:$0x1]
        %v1305 = vlaneseq
        %v1306 = vshrl.u32 %v1305, 7
        %v1307 = vsub.s32 0, %v1306
        %v1308 = vrot.slane %v1303, %v1307
        %v1311 = vsel %vm393, %v1297, 0
        %1313 = vmatprep.subr.mxu0 0.0
        %1314 = vmatpush1.msra.mxu0 %v1299
        %1315 = vmatprep.subr.mxu0 0.0
        %1316 = vmatpush1.msra.mxu0 %v1300
        %1317 = vmatprep.subr.mxu0 0.0
        %1318 = vmatpush1.msra.mxu0 %v1301
        %1319 = vmatprep.subr.mxu0 0.0
        %1320 = vmatpush1.msra.mxu0 %v1302
        %1321 = vmatprep.subr.mxu0 0.0
        %1322 = vmatpush1.msra.mxu0 0.0
        %1323 = vmatprep.subr.mxu0 0.0
        %1324 = vmatpush1.msra.mxu0 0.0
        %1325 = vmatprep.subr.mxu0 0.0
        %1326 = vmatpush1.msra.mxu0 0.0
        %1327 = vmatprep.subr.mxu0 0.0
        %1328 = vmatpush1.msra.mxu0 0.0
        %1329 = vmatprep.subr.mxu0 0.0
        %1330 = vmatpush1.msra.mxu0 0.0
        %1331 = vmatprep.subr.mxu0 0.0
        %1332 = vmatpush1.msra.mxu0 0.0
        %1333 = vmatprep.subr.mxu0 0.0
        %1334 = vmatpush1.msra.mxu0 0.0
        %1335 = vmatprep.subr.mxu0 0.0
        %1336 = vmatpush1.msra.mxu0 0.0
        %1337 = vmatprep.subr.mxu0 0.0
        %1338 = vmatpush1.msra.mxu0 0.0
        %1339 = vmatprep.subr.mxu0 0.0
        %1340 = vmatpush1.msra.mxu0 0.0
        %1341 = vmatprep.subr.mxu0 0.0
        %1342 = vmatpush1.msra.mxu0 0.0
        %1343 = vmatprep.subr.mxu0 0.0
        %1344 = vmatpush1.msra.mxu0 0.0
        %1345 = vmatprep.subr.mxu0 0.0
        %1346 = vmatpush1.msra.mxu0 0.0
        %1347 = vmatprep.subr.mxu0 0.0
        %1348 = vmatpush1.msra.mxu0 0.0
        %1349 = vmatprep.subr.mxu0 0.0
        %1350 = vmatpush1.msra.mxu0 0.0
        %1351 = vmatprep.subr.mxu0 0.0
        %1352 = vmatpush1.msra.mxu0 0.0
        %1353 = vmatprep.subr.mxu0 0.0
        %1354 = vmatpush1.msra.mxu0 0.0
        %1355 = vmatprep.subr.mxu0 0.0
        %1356 = vmatpush1.msra.mxu0 0.0
        %1357 = vmatprep.subr.mxu0 0.0
        %1358 = vmatpush1.msra.mxu0 0.0
        %1359 = vmatprep.subr.mxu0 0.0
        %1360 = vmatpush1.msra.mxu0 0.0
        %1361 = vmatprep.subr.mxu0 0.0
        %1362 = vmatpush1.msra.mxu0 0.0
        %1363 = vmatprep.subr.mxu0 0.0
        %1364 = vmatpush1.msra.mxu0 0.0
        %1365 = vmatprep.subr.mxu0 0.0
        %1366 = vmatpush1.msra.mxu0 0.0
        %1367 = vmatprep.subr.mxu0 0.0
        %1368 = vmatpush1.msra.mxu0 0.0
        %1369 = vmatprep.subr.mxu0 0.0
        %1370 = vmatpush1.msra.mxu0 0.0
        %1371 = vmatprep.subr.mxu0 0.0
        %1372 = vmatpush1.msra.mxu0 0.0
        %1373 = vmatprep.subr.mxu0 0.0
        %1374 = vmatpush1.msra.mxu0 0.0
        %1375 = vmatprep.subr.mxu0 0.0
        %1376 = vmatpush1.msra.mxu0 0.0
        %1377 = vmatprep.mubr.f32.mxu0 0.0
        %1378 = vmatmul.mubr.f32.gmra.mrb[0].mxu0 %v1311
        %v1379 = vpop.f32.mrb[0].mxu0
        %v1380 = vadd.f32 %v1308, %v1379
        %v1381 = vpop.f32.mrb[0].mxu0
        %1382 = vdwg.mxu0
        %v1383 = vmax.f32 %v1380, 0.0
        %v1384 = vld [vmem:[#allocation3] sm:$0xff]
        %v1385 = vld [vmem:[%s8] sm:$0xff]
        %v1386 = vld [vmem:[%s8 + $0x8] sm:$0xff]
        %v1387 = vld [vmem:[%s8 + $0x10] sm:$0xff]
        %v1388 = vld [vmem:[%s8 + $0x18] sm:$0xff]
        %v1389 = vld [vmem:[%s8 + $0x20] sm:$0xff]
        %v1390 = vld [vmem:[%s8 + $0x28] sm:$0xff]
        %v1391 = vld [vmem:[%s8 + $0x30] sm:$0xff]
        %v1392 = vld [vmem:[%s8 + $0x38] sm:$0xff]
        %vm1393 = vcmask 523264
        %v1395 = vsel %vm1393, %v1383, 0
        %1397 = vmatprep.subr.mxu0 0.0
        %1398 = vmatpush1.msra.mxu0 %v1385
        %1399 = vmatprep.subr.mxu0 0.0
        %1400 = vmatpush1.msra.mxu0 %v1386
        %1401 = vmatprep.subr.mxu0 0.0
        %1402 = vmatpush1.msra.mxu0 %v1387
        %1403 = vmatprep.subr.mxu0 0.0
        %1404 = vmatpush1.msra.mxu0 %v1388
        %1405 = vmatprep.subr.mxu0 0.0
        %1406 = vmatpush1.msra.mxu0 %v1389
        %1407 = vmatprep.subr.mxu0 0.0
        %1408 = vmatpush1.msra.mxu0 %v1390
        %1409 = vmatprep.subr.mxu0 0.0
        %1410 = vmatpush1.msra.mxu0 %v1391
        %1411 = vmatprep.subr.mxu0 0.0
        %1412 = vmatpush1.msra.mxu0 %v1392
        %1413 = vmatprep.subr.mxu0 0.0
        %1414 = vmatpush1.msra.mxu0 0.0
        %1415 = vmatprep.subr.mxu0 0.0
        %1416 = vmatpush1.msra.mxu0 0.0
        %1417 = vmatprep.subr.mxu0 0.0
        %1418 = vmatpush1.msra.mxu0 0.0
        %1419 = vmatprep.subr.mxu0 0.0
        %1420 = vmatpush1.msra.mxu0 0.0
        %1421 = vmatprep.subr.mxu0 0.0
        %1422 = vmatpush1.msra.mxu0 0.0
        %1423 = vmatprep.subr.mxu0 0.0
        %1424 = vmatpush1.msra.mxu0 0.0
        %1425 = vmatprep.subr.mxu0 0.0
        %1426 = vmatpush1.msra.mxu0 0.0
        %1427 = vmatprep.subr.mxu0 0.0
        %1428 = vmatpush1.msra.mxu0 0.0
        %1429 = vmatprep.subr.mxu0 0.0
        %1430 = vmatpush1.msra.mxu0 0.0
        %1431 = vmatprep.subr.mxu0 0.0
        %1432 = vmatpush1.msra.mxu0 0.0
        %1433 = vmatprep.subr.mxu0 0.0
        %1434 = vmatpush1.msra.mxu0 0.0
        %1435 = vmatprep.subr.mxu0 0.0
        %1436 = vmatpush1.msra.mxu0 0.0
        %1437 = vmatprep.subr.mxu0 0.0
        %1438 = vmatpush1.msra.mxu0 0.0
        %1439 = vmatprep.subr.mxu0 0.0
        %1440 = vmatpush1.msra.mxu0 0.0
        %1441 = vmatprep.subr.mxu0 0.0
        %1442 = vmatpush1.msra.mxu0 0.0
        %1443 = vmatprep.subr.mxu0 0.0
        %1444 = vmatpush1.msra.mxu0 0.0
        %1445 = vmatprep.subr.mxu0 0.0
        %1446 = vmatpush1.msra.mxu0 0.0
        %1447 = vmatprep.subr.mxu0 0.0
        %1448 = vmatpush1.msra.mxu0 0.0
        %1449 = vmatprep.subr.mxu0 0.0
        %1450 = vmatpush1.msra.mxu0 0.0
        %1451 = vmatprep.subr.mxu0 0.0
        %1452 = vmatpush1.msra.mxu0 0.0
        %1453 = vmatprep.subr.mxu0 0.0
        %1454 = vmatpush1.msra.mxu0 0.0
        %1455 = vmatprep.subr.mxu0 0.0
        %1456 = vmatpush1.msra.mxu0 0.0
        %1457 = vmatprep.subr.mxu0 0.0
        %1458 = vmatpush1.msra.mxu0 0.0
        %1459 = vmatprep.subr.mxu0 0.0
        %1460 = vmatpush1.msra.mxu0 0.0
        %1461 = vmatprep.mubr.f32.mxu0 0.0
        %1462 = vmatmul.mubr.f32.gmra.mrb[0].mxu0 %v1395
        %v1463 = vpop.f32.mrb[0].mxu0
        %v1464 = vadd.f32 0.0, %v1463
        %v1465 = vpop.f32.mrb[0].mxu0
        %1466 = vdwg.mxu0
        %v1467 = vadd.f32 %v1384, %v1464
        %1468 = vst.msk [vmem:[#allocation3] sm:$0xff] %vm393, %v1467
        %v1469 = vld [vmem:[#allocation3] sm:$0xff]
        %v1470 = vadd.f32 %v1277, %v1469
        %v1471 = vld [vmem:[%s9] sm:$0x1]
        %v1473 = vlaneseq
        %v1474 = vshrl.u32 %v1473, 7
        %v1475 = vsub.s32 0, %v1474
        %v1476 = vrot.slane %v1471, %v1475
        %v1478 = vadd.f32 %v1470, %v1476
        %1479 = vst.msk [vmem:[%s385] sm:$0xff] %vm393, %v1478
        %s1480 = sand.u32 %s255, 1
        %s1481 = scalar_lea.sflag [#allocation6], %s1480
        %s1482 = sand.u32 %s255, 1
        %s1483 = smul.addr %s1482, 8
        %s1484 = scalar_lea.vmem [#allocation7], %s1483
        // Predicated region
        $region65: #{tpu_custom_call.1} parent=59 // pred_check
          %p1485 = pneg %p265
        $region66: #{tpu_custom_call.1} parent=59 // pred_check_branch
          %1487 = sbr.rel (%p1485) target = $region68
        $region67: #{tpu_custom_call.1} parent=59 // pred_region
          %s1489 = ssub.s32 128, 128
          %1490 = vsyncadd %s1481, %s1489
          %s1491 = smul.addr %s27, 128
          %s1492 = scalar_lea.hbm %s10, %s1491
          %s1494 = sshll.u32 %s1484, 4
          %s1495 = int_to_ptr.vmem [resolvable:$true] %s1494
          %1497 = dma.vmem_to_hbm [thread:$0]  %s1495, 128, %s1492, %s1481
        $region68: #{tpu_custom_call.1} parent=59 // pred_fallthru
          _
      $region60: #{tpu_custom_call.1} parent=5 // pred_fallthru
        _
      %p1498 = scmp.le.s32.totalorder 2, %s22
      // Predicated region
      $region69: #{tpu_custom_call.1} parent=5 // pred_check
        %p1499 = pneg %p1498
      $region70: #{tpu_custom_call.1} parent=5 // pred_check_branch
        %1501 = sbr.rel (%p1499) target = $region72
      $region71: #{tpu_custom_call.1} parent=5 // pred_region
        %s1502 = ssub.s32 %s22, 2
        // Predicated region
        $region73: #{tpu_custom_call.1} parent=71 // pred_check
          %p1503 = pneg %p271
        $region74: #{tpu_custom_call.1} parent=71 // pred_check_branch
          %1505 = sbr.rel (%p1503) target = $region76
        $region75: #{tpu_custom_call.1} parent=71 // pred_region
          %s1506 = sand.u32 %s256, 1
          %s1507 = scalar_lea.sflag [#allocation6], %s1506
          %s1508 = sand.u32 %s256, 1
          %s1509 = smul.addr %s1508, 8
          %s1510 = scalar_lea.vmem [#allocation7], %s1509
          %1511 = dma.done %s1507, 128
        $region76: #{tpu_custom_call.1} parent=71 // pred_fallthru
          _
      $region72: #{tpu_custom_call.1} parent=5 // pred_fallthru
        _
    $region6: #{tpu_custom_call.1} parent=1 // loop_footer
      %s26 = sadd.s32 1, %s22
    $region7: #{tpu_custom_call.1} parent=1 // loop_footer_branch
      %21 = sbr.rel target = $region3
    $region8: #{tpu_custom_call.1} parent=1 // loop_exit
      _
    %1512 = vsyncpa [#allocation5], 1
    %s1513 = scalar_lea.sflag [#allocation5], 1
    %1514 = vsyncpa %s1513, 1
    %1515 = vsyncpa [#allocation6], 1
    %s1516 = scalar_lea.sflag [#allocation6], 1
    %1517 = vsyncpa %s1516, 1

// kernel: tpu_custom_call.1
$region0: #{tpu_custom_call.1}
  #allocation0 [shape = 'u32[]', space=smem, size = 0x4, offset = 0x4, fixed_abs, tag = 'smem constant byte address 0x4 - core index']
  #allocation1 [shape = 'u32[144,128]{1,0:T(1,128)}', space=vmem, size = 0x12000, scoped, tag = 'internal scratch']
  #allocation2 [shape = 'f32[8,32]{1,0:T(8,128)}', space=vmem, size = 0x1000, scoped, tag = 'scratch operand']
  #allocation3 [shape = 'f32[8,32]{1,0:T(8,128)}', space=vmem, size = 0x1000, scoped, tag = 'scratch operand']
  %s0 = inlined_call_operand.hbm [shape: f32[2,8,32], index: 0, kind: input, shape index: {}]
  %s1 = inlined_call_operand.vmem [shape: f32[2,1,8], index: 1, kind: input, shape index: {}]
  %s2 = inlined_call_operand.vmem [shape: f32[32,96], index: 2, kind: input, shape index: {}]
  %s3 = inlined_call_operand.vmem [shape: f32[1,96], index: 3, kind: input, shape index: {}]
  %s4 = inlined_call_operand.vmem [shape: f32[32,32], index: 4, kind: input, shape index: {}]
  %s5 = inlined_call_operand.vmem [shape: f32[1,32], index: 5, kind: input, shape index: {}]
  %s6 = inlined_call_operand.vmem [shape: f32[32,64], index: 6, kind: input, shape index: {}]
  %s7 = inlined_call_operand.vmem [shape: f32[1,64], index: 7, kind: input, shape index: {}]
  %s8 = inlined_call_operand.vmem [shape: f32[64,32], index: 8, kind: input, shape index: {}]
  %s9 = inlined_call_operand.vmem [shape: f32[1,32], index: 9, kind: input, shape index: {}]
  %s10 = inlined_call_operand.hbm [shape: f32[2,8,32], index: 10, kind: output, shape index: {}]
  %s11 = sld [smem:[#allocation0]]
  $region77: #{tpu_custom_call.1} parent=0
    _
  %s13 = ssub.s32 1, %s11
  %s14 = scalar_select 0, %s13, %s11
  $region1: #{tpu_custom_call.1} parent=0
    #allocation4 [shape = 'u8[8192]{0}', space=vmem, size = 0x2000, scoped, tag = 'input window, operand 0']
    #allocation5 [shape = 's32[2]{0}', space=sflag, size = 0x8, scoped, tag = 'scoped memory for tpu_custom_call.1']
    #allocation6 [shape = 's32[2]{0}', space=sflag, size = 0x8, scoped, tag = 'scoped memory for tpu_custom_call.1']
    #allocation7 [shape = 'u8[8192]{0}', space=vmem, size = 0x2000, scoped, tag = 'output window, operand 0']
    %15 = vsyncpa [#allocation5], 0
    %s16 = scalar_lea.sflag [#allocation5], 1
    %17 = vsyncpa %s16, 0
    %18 = vsyncpa [#allocation6], 0
    %s19 = scalar_lea.sflag [#allocation6], 1
    %20 = vsyncpa %s19, 0
    loop: start=0, step=1, limit=4
    $region2: #{tpu_custom_call.1} parent=1 // loop_pre_header
      _
    $region3: #{tpu_custom_call.1} parent=1 // loop_header
      %s22 = sphi 0, %s26
      %p23 = scmp.ge.s32.totalorder %s22, 4
      %s32 = sphi 0, %s34
      %s35 = sphi 0, %s32
      %s36 = sphi 0, %s35
      %s52 = sphi 0, %s36
      %s58 = sphi 0, %s60
      %s61 = sphi 0, %s58
      %s62 = sphi 0, %s61
      %s78 = sphi 0, %s62
      %s82 = sphi 0, %s82
      %s84 = sphi 0, %s82
      %s85 = sphi 0, %s84
      %s99 = sphi 0, %s85
      %s103 = sphi 0, %s103
      %s105 = sphi 0, %s103
      %s106 = sphi 0, %s105
      %s120 = sphi 0, %s106
      %s124 = sphi 0, %s124
      %s126 = sphi 0, %s124
      %s127 = sphi 0, %s126
      %s141 = sphi 0, %s127
      %s145 = sphi 0, %s145
      %s147 = sphi 0, %s145
      %s148 = sphi 0, %s147
      %s162 = sphi 0, %s148
      %s166 = sphi 0, %s166
      %s168 = sphi 0, %s166
      %s169 = sphi 0, %s168
      %s183 = sphi 0, %s169
      %s187 = sphi 0, %s187
      %s189 = sphi 0, %s187
      %s190 = sphi 0, %s189
      %s204 = sphi 0, %s190
      %s208 = sphi 0, %s208
      %s210 = sphi 0, %s208
      %s211 = sphi 0, %s210
      %s225 = sphi 0, %s211
      %s229 = sphi 0, %s229
      %s231 = sphi 0, %s229
      %s232 = sphi 0, %s231
      %s246 = sphi 0, %s232
      %s252 = sphi 0, %s254
      %s255 = sphi 0, %s252
      %s256 = sphi 0, %s255
      %s272 = sphi 0, %s256
    $region4: #{tpu_custom_call.1} parent=1 // loop_header_branch
      %25 = sbr.rel (%p23) target = $region8
    $region5: #{tpu_custom_call.1} parent=1 // loop_body
      %s27 = ssub.s32 %s22, 1
      %s28 = ssub.s32 %s22, 2
      %s29 = sadd.s32 %s22, 1
      %s30 = ssub.s32 %s22, %s29
      %p31 = scmp.eq.s32.totalorder %s30, 0
      %s33 = sadd.s32 %s32, 1
      %s34 = scalar_select %p31, %s32, %s33
      %p37 = pneg %p31
      %p38 = scmp.eq.s32.totalorder %s22, 1
      %p39 = por %p37, %p38
      %p40 = scmp.ne.s32.totalorder %s32, %s35
      %p41 = scmp.eq.s32.totalorder %s22, 0
      %p42 = por %p40, %p41
      %p43 = scmp.ne.s32.totalorder %s32, %s35
      %p44 = scmp.eq.s32.totalorder %s27, 1
      %p45 = por %p43, %p44
      %p46 = scmp.ne.s32.totalorder %s35, %s36
      %p47 = scmp.eq.s32.totalorder %s27, 0
      %p48 = por %p46, %p47
      %p49 = scmp.ne.s32.totalorder %s35, %s36
      %p50 = scmp.eq.s32.totalorder %s28, 1
      %p51 = por %p49, %p50
      %p53 = scmp.ne.s32.totalorder %s36, %s52
      %p54 = scmp.eq.s32.totalorder %s28, 0
      %p55 = por %p53, %p54
      %s56 = ssub.s32 %s22, %s29
      %p57 = scmp.eq.s32.totalorder %s56, 0
      %s59 = sadd.s32 %s58, 1
      %s60 = scalar_select %p57, %s58, %s59
      %p63 = pneg %p57
      %p64 = scmp.eq.s32.totalorder %s22, 1
      %p65 = por %p63, %p64
      %p66 = scmp.ne.s32.totalorder %s58, %s61
      %p67 = scmp.eq.s32.totalorder %s22, 0
      %p68 = por %p66, %p67
      %p69 = scmp.ne.s32.totalorder %s58, %s61
      %p70 = scmp.eq.s32.totalorder %s27, 1
      %p71 = por %p69, %p70
      %p72 = scmp.ne.s32.totalorder %s61, %s62
      %p73 = scmp.eq.s32.totalorder %s27, 0
      %p74 = por %p72, %p73
      %p75 = scmp.ne.s32.totalorder %s61, %s62
      %p76 = scmp.eq.s32.totalorder %s28, 1
      %p77 = por %p75, %p76
      %p79 = scmp.ne.s32.totalorder %s62, %s78
      %p80 = scmp.eq.s32.totalorder %s28, 0
      %p81 = por %p79, %p80
      %s83 = sadd.s32 %s82, 1
      %p86 = scmp.eq.s32.totalorder %s22, 1
      %p87 = scmp.ne.s32.totalorder %s82, %s84
      %p88 = scmp.eq.s32.totalorder %s22, 0
      %p89 = por %p87, %p88
      %p90 = scmp.ne.s32.totalorder %s82, %s84
      %p91 = scmp.eq.s32.totalorder %s27, 1
      %p92 = por %p90, %p91
      %p93 = scmp.ne.s32.totalorder %s84, %s85
      %p94 = scmp.eq.s32.totalorder %s27, 0
      %p95 = por %p93, %p94
      %p96 = scmp.ne.s32.totalorder %s84, %s85
      %p97 = scmp.eq.s32.totalorder %s28, 1
      %p98 = por %p96, %p97
      %p100 = scmp.ne.s32.totalorder %s85, %s99
      %p101 = scmp.eq.s32.totalorder %s28, 0
      %p102 = por %p100, %p101
      %s104 = sadd.s32 %s103, 1
      %p107 = scmp.eq.s32.totalorder %s22, 1
      %p108 = scmp.ne.s32.totalorder %s103, %s105
      %p109 = scmp.eq.s32.totalorder %s22, 0
      %p110 = por %p108, %p109
      %p111 = scmp.ne.s32.totalorder %s103, %s105
      %p112 = scmp.eq.s32.totalorder %s27, 1
      %p113 = por %p111, %p112
      %p114 = scmp.ne.s32.totalorder %s105, %s106
      %p115 = scmp.eq.s32.totalorder %s27, 0
      %p116 = por %p114, %p115
      %p117 = scmp.ne.s32.totalorder %s105, %s106
      %p118 = scmp.eq.s32.totalorder %s28, 1
      %p119 = por %p117, %p118
      %p121 = scmp.ne.s32.totalorder %s106, %s120
      %p122 = scmp.eq.s32.totalorder %s28, 0
      %p123 = por %p121, %p122
      %s125 = sadd.s32 %s124, 1
      %p128 = scmp.eq.s32.totalorder %s22, 1
      %p129 = scmp.ne.s32.totalorder %s124, %s126
      %p130 = scmp.eq.s32.totalorder %s22, 0
      %p131 = por %p129, %p130
      %p132 = scmp.ne.s32.totalorder %s124, %s126
      %p133 = scmp.eq.s32.totalorder %s27, 1
      %p134 = por %p132, %p133
      %p135 = scmp.ne.s32.totalorder %s126, %s127
      %p136 = scmp.eq.s32.totalorder %s27, 0
      %p137 = por %p135, %p136
      %p138 = scmp.ne.s32.totalorder %s126, %s127
      %p139 = scmp.eq.s32.totalorder %s28, 1
      %p140 = por %p138, %p139
      %p142 = scmp.ne.s32.totalorder %s127, %s141
      %p143 = scmp.eq.s32.totalorder %s28, 0
      %p144 = por %p142, %p143
      %s146 = sadd.s32 %s145, 1
      %p149 = scmp.eq.s32.totalorder %s22, 1
      %p150 = scmp.ne.s32.totalorder %s145, %s147
      %p151 = scmp.eq.s32.totalorder %s22, 0
      %p152 = por %p150, %p151
      %p153 = scmp.ne.s32.totalorder %s145, %s147
      %p154 = scmp.eq.s32.totalorder %s27, 1
      %p155 = por %p153, %p154
      %p156 = scmp.ne.s32.totalorder %s147, %s148
      %p157 = scmp.eq.s32.totalorder %s27, 0
      %p158 = por %p156, %p157
      %p159 = scmp.ne.s32.totalorder %s147, %s148
      %p160 = scmp.eq.s32.totalorder %s28, 1
      %p161 = por %p159, %p160
      %p163 = scmp.ne.s32.totalorder %s148, %s162
      %p164 = scmp.eq.s32.totalorder %s28, 0
      %p165 = por %p163, %p164
      %s167 = sadd.s32 %s166, 1
      %p170 = scmp.eq.s32.totalorder %s22, 1
      %p171 = scmp.ne.s32.totalorder %s166, %s168
      %p172 = scmp.eq.s32.totalorder %s22, 0
      %p173 = por %p171, %p172
      %p174 = scmp.ne.s32.totalorder %s166, %s168
      %p175 = scmp.eq.s32.totalorder %s27, 1
      %p176 = por %p174, %p175
      %p177 = scmp.ne.s32.totalorder %s168, %s169
      %p178 = scmp.eq.s32.totalorder %s27, 0
      %p179 = por %p177, %p178
      %p180 = scmp.ne.s32.totalorder %s168, %s169
      %p181 = scmp.eq.s32.totalorder %s28, 1
      %p182 = por %p180, %p181
      %p184 = scmp.ne.s32.totalorder %s169, %s183
      %p185 = scmp.eq.s32.totalorder %s28, 0
      %p186 = por %p184, %p185
      %s188 = sadd.s32 %s187, 1
      %p191 = scmp.eq.s32.totalorder %s22, 1
      %p192 = scmp.ne.s32.totalorder %s187, %s189
      %p193 = scmp.eq.s32.totalorder %s22, 0
      %p194 = por %p192, %p193
      %p195 = scmp.ne.s32.totalorder %s187, %s189
      %p196 = scmp.eq.s32.totalorder %s27, 1
      %p197 = por %p195, %p196
      %p198 = scmp.ne.s32.totalorder %s189, %s190
      %p199 = scmp.eq.s32.totalorder %s27, 0
      %p200 = por %p198, %p199
      %p201 = scmp.ne.s32.totalorder %s189, %s190
      %p202 = scmp.eq.s32.totalorder %s28, 1
      %p203 = por %p201, %p202
      %p205 = scmp.ne.s32.totalorder %s190, %s204
      %p206 = scmp.eq.s32.totalorder %s28, 0
      %p207 = por %p205, %p206
      %s209 = sadd.s32 %s208, 1
      %p212 = scmp.eq.s32.totalorder %s22, 1
      %p213 = scmp.ne.s32.totalorder %s208, %s210
      %p214 = scmp.eq.s32.totalorder %s22, 0
      %p215 = por %p213, %p214
      %p216 = scmp.ne.s32.totalorder %s208, %s210
      %p217 = scmp.eq.s32.totalorder %s27, 1
      %p218 = por %p216, %p217
      %p219 = scmp.ne.s32.totalorder %s210, %s211
      %p220 = scmp.eq.s32.totalorder %s27, 0
      %p221 = por %p219, %p220
      %p222 = scmp.ne.s32.totalorder %s210, %s211
      %p223 = scmp.eq.s32.totalorder %s28, 1
      %p224 = por %p222, %p223
      %p226 = scmp.ne.s32.totalorder %s211, %s225
      %p227 = scmp.eq.s32.totalorder %s28, 0
      %p228 = por %p226, %p227
      %s230 = sadd.s32 %s229, 1
      %p233 = scmp.eq.s32.totalorder %s22, 1
      %p234 = scmp.ne.s32.totalorder %s229, %s231
      %p235 = scmp.eq.s32.totalorder %s22, 0
      %p236 = por %p234, %p235
      %p237 = scmp.ne.s32.totalorder %s229, %s231
      %p238 = scmp.eq.s32.totalorder %s27, 1
      %p239 = por %p237, %p238
      %p240 = scmp.ne.s32.totalorder %s231, %s232
      %p241 = scmp.eq.s32.totalorder %s27, 0
      %p242 = por %p240, %p241
      %p243 = scmp.ne.s32.totalorder %s231, %s232
      %p244 = scmp.eq.s32.totalorder %s28, 1
      %p245 = por %p243, %p244
      %p247 = scmp.ne.s32.totalorder %s232, %s246
      %p248 = scmp.eq.s32.totalorder %s28, 0
      %p249 = por %p247, %p248
      %s250 = ssub.s32 %s22, %s29
      %p251 = scmp.eq.s32.totalorder %s250, 0
      %s253 = sadd.s32 %s252, 1
      %s254 = scalar_select %p251, %s252, %s253
      %p257 = pneg %p251
      %p258 = scmp.eq.s32.totalorder %s22, 1
      %p259 = por %p257, %p258
      %p260 = scmp.ne.s32.totalorder %s252, %s255
      %p261 = scmp.eq.s32.totalorder %s22, 0
      %p262 = por %p260, %p261
      %p263 = scmp.ne.s32.totalorder %s252, %s255
      %p264 = scmp.eq.s32.totalorder %s27, 1
      %p265 = por %p263, %p264
      %p266 = scmp.ne.s32.totalorder %s255, %s256
      %p267 = scmp.eq.s32.totalorder %s27, 0
      %p268 = por %p266, %p267
      %p269 = scmp.ne.s32.totalorder %s255, %s256
      %p270 = scmp.eq.s32.totalorder %s28, 1
      %p271 = por %p269, %p270
      %p273 = scmp.ne.s32.totalorder %s256, %s272
      %p274 = scmp.eq.s32.totalorder %s28, 0
      %p275 = por %p273, %p274
      %p276 = scmp.le.s32.totalorder 1, %s22
      %p277 = scmp.lt.s32.totalorder %s22, 3
      %p278 = pnand %p276, %p277
      %p279 = pneg %p278
      // Predicated region
      $region9: #{tpu_custom_call.1} parent=5 // pred_check
        _
      $region10: #{tpu_custom_call.1} parent=5 // pred_check_branch
        %281 = sbr.rel (%p278) target = $region12
      $region11: #{tpu_custom_call.1} parent=5 // pred_region
        %s282 = ssub.s32 %s22, 1
        // Predicated region
        $region13: #{tpu_custom_call.1} parent=11 // pred_check
          %p283 = pneg %p95
        $region14: #{tpu_custom_call.1} parent=11 // pred_check_branch
          %285 = sbr.rel (%p283) target = $region16
        $region15: #{tpu_custom_call.1} parent=11 // pred_region
          _
        $region16: #{tpu_custom_call.1} parent=11 // pred_fallthru
          _
        // Predicated region
        $region17: #{tpu_custom_call.1} parent=11 // pred_check
          %p286 = pneg %p116
        $region18: #{tpu_custom_call.1} parent=11 // pred_check_branch
          %288 = sbr.rel (%p286) target = $region20
        $region19: #{tpu_custom_call.1} parent=11 // pred_region
          _
        $region20: #{tpu_custom_call.1} parent=11 // pred_fallthru
          _
        // Predicated region
        $region21: #{tpu_custom_call.1} parent=11 // pred_check
          %p289 = pneg %p137
        $region22: #{tpu_custom_call.1} parent=11 // pred_check_branch
          %291 = sbr.rel (%p289) target = $region24
        $region23: #{tpu_custom_call.1} parent=11 // pred_region
          _
        $region24: #{tpu_custom_call.1} parent=11 // pred_fallthru
          _
        // Predicated region
        $region25: #{tpu_custom_call.1} parent=11 // pred_check
          %p292 = pneg %p158
        $region26: #{tpu_custom_call.1} parent=11 // pred_check_branch
          %294 = sbr.rel (%p292) target = $region28
        $region27: #{tpu_custom_call.1} parent=11 // pred_region
          _
        $region28: #{tpu_custom_call.1} parent=11 // pred_fallthru
          _
        // Predicated region
        $region29: #{tpu_custom_call.1} parent=11 // pred_check
          %p295 = pneg %p179
        $region30: #{tpu_custom_call.1} parent=11 // pred_check_branch
          %297 = sbr.rel (%p295) target = $region32
        $region31: #{tpu_custom_call.1} parent=11 // pred_region
          _
        $region32: #{tpu_custom_call.1} parent=11 // pred_fallthru
          _
        // Predicated region
        $region33: #{tpu_custom_call.1} parent=11 // pred_check
          %p298 = pneg %p200
        $region34: #{tpu_custom_call.1} parent=11 // pred_check_branch
          %300 = sbr.rel (%p298) target = $region36
        $region35: #{tpu_custom_call.1} parent=11 // pred_region
          _
        $region36: #{tpu_custom_call.1} parent=11 // pred_fallthru
          _
        // Predicated region
        $region37: #{tpu_custom_call.1} parent=11 // pred_check
          %p301 = pneg %p221
        $region38: #{tpu_custom_call.1} parent=11 // pred_check_branch
          %303 = sbr.rel (%p301) target = $region40
        $region39: #{tpu_custom_call.1} parent=11 // pred_region
          _
        $region40: #{tpu_custom_call.1} parent=11 // pred_fallthru
          _
        // Predicated region
        $region41: #{tpu_custom_call.1} parent=11 // pred_check
          %p304 = pneg %p242
        $region42: #{tpu_custom_call.1} parent=11 // pred_check_branch
          %306 = sbr.rel (%p304) target = $region44
        $region43: #{tpu_custom_call.1} parent=11 // pred_region
          _
        $region44: #{tpu_custom_call.1} parent=11 // pred_fallthru
          _
      $region12: #{tpu_custom_call.1} parent=5 // pred_fallthru
        _
      %p307 = scmp.lt.s32.totalorder %s22, 2
      // Predicated region
      $region45: #{tpu_custom_call.1} parent=5 // pred_check
        %p308 = pneg %p307
      $region46: #{tpu_custom_call.1} parent=5 // pred_check_branch
        %310 = sbr.rel (%p308) target = $region48
      $region47: #{tpu_custom_call.1} parent=5 // pred_region
        // Predicated region
        $region49: #{tpu_custom_call.1} parent=47 // pred_check
          %p311 = pneg %p42
        $region50: #{tpu_custom_call.1} parent=47 // pred_check_branch
          %313 = sbr.rel (%p311) target = $region52
        $region51: #{tpu_custom_call.1} parent=47 // pred_region
          %s314 = sand.u32 %s32, 1
          %s315 = scalar_lea.sflag [#allocation5], %s314
          %s316 = sand.u32 %s32, 1
          %s317 = smul.addr %s316, 8
          %s318 = scalar_lea.vmem [#allocation4], %s317
          %s320 = ssub.s32 128, 128
          %321 = vsyncadd %s315, %s320
          %s322 = smul.addr %s22, 128
          %s323 = scalar_lea.hbm %s0, %s322
          %s325 = sshll.u32 %s318, 4
          %s326 = int_to_ptr.vmem [resolvable:$true] %s325
          %328 = dma.hbm_to_vmem [thread:$0]  %s323, 128, %s326, %s315
        $region52: #{tpu_custom_call.1} parent=47 // pred_fallthru
          _
        // Predicated region
        $region53: #{tpu_custom_call.1} parent=47 // pred_check
          %p329 = pneg %p68
        $region54: #{tpu_custom_call.1} parent=47 // pred_check_branch
          %331 = sbr.rel (%p329) target = $region56
        $region55: #{tpu_custom_call.1} parent=47 // pred_region
          %p332 = scmp.lt.s32.totalorder %s22, 1
          %s333 = scalar_select %p332, %s22, 1
          %s334 = scalar_lea.vmem %s1, %s333
        $region56: #{tpu_custom_call.1} parent=47 // pred_fallthru
          _
      $region48: #{tpu_custom_call.1} parent=5 // pred_fallthru
        _
      %p335 = scmp.le.s32.totalorder 1, %s22
      %p336 = scmp.lt.s32.totalorder %s22, 3
      %p337 = pnand %p335, %p336
      %p338 = pneg %p337
      // Predicated region
      $region57: #{tpu_custom_call.1} parent=5 // pred_check
        _
      $region58: #{tpu_custom_call.1} parent=5 // pred_check_branch
        %340 = sbr.rel (%p337) target = $region60
      $region59: #{tpu_custom_call.1} parent=5 // pred_region
        %s341 = ssub.s32 %s22, 1
        %s342 = sand.u32 %s35, 1
        %s343 = scalar_lea.sflag [#allocation5], %s342
        %s344 = sand.u32 %s35, 1
        %s345 = smul.addr %s344, 8
        %s346 = scalar_lea.vmem [#allocation4], %s345
        // Predicated region
        $region61: #{tpu_custom_call.1} parent=59 // pred_check
          %p347 = pneg %p48
        $region62: #{tpu_custom_call.1} parent=59 // pred_check_branch
          %349 = sbr.rel (%p347) target = $region64
        $region63: #{tpu_custom_call.1} parent=59 // pred_region
          %350 = dma.done %s343, 128
        $region64: #{tpu_custom_call.1} parent=59 // pred_fallthru
          _
        %s351 = sand.u32 %s35, 1
        %s352 = scalar_lea.sflag [#allocation5], %s351
        %s353 = sand.u32 %s35, 1
        %s354 = smul.addr %s353, 8
        %s355 = scalar_lea.vmem [#allocation4], %s354
        %p356 = pneg %p48
        %p357 = pneg %p45
        %p358 = scmp.lt.s32.totalorder %s27, 1
        %s359 = scalar_select %p358, %s27, 1
        %s360 = scalar_lea.vmem %s1, %s359
        %p361 = pneg %p74
        %p362 = pneg %p71
        %p363 = pneg %p95
        %p364 = pneg %p92
        %p365 = pneg %p116
        %p366 = pneg %p113
        %p367 = pneg %p137
        %p368 = pneg %p134
        %p369 = pneg %p158
        %p370 = pneg %p155
        %p371 = pneg %p179
        %p372 = pneg %p176
        %p373 = pneg %p200
        %p374 = pneg %p197
        %p375 = pneg %p221
        %p376 = pneg %p218
        %p377 = pneg %p242
        %p378 = pneg %p239
        %p379 = pneg %p268
        %p380 = pneg %p265
        %s381 = sand.u32 %s255, 1
        %s382 = scalar_lea.sflag [#allocation6], %s381
        %s383 = sand.u32 %s255, 1
        %s384 = smul.addr %s383, 8
        %s385 = scalar_lea.vmem [#allocation7], %s384
        %p386 = scmp.lt.s32.totalorder %s27, 1
        %s387 = scalar_select %p386, %s27, 1
        %s388 = scalar_lea.vmem %s1, %s387
        %v389 = vld [vmem:[%s346] sm:$0xff]
        %v390 = vld [vmem:[%s388] sm:$0x1]
        %vm391 = vcmp.eq.f32.partialorder %v390, 0.0
        %v392 = vsel %vm391, -1e+09, 0.0
        %vm393 = vcmask 261120
        %v394 = vsel %vm393, %v389, 0.0
        %395 = vadd.xlane.f32.xlu0 %v394
        %v396 = vpop.xlane.xlu0 %395
        %v397 = vrcp.pop 32.0
        %v398 = vmul.f32 %v396, %v397
        %v399 = vsub.f32 %v389, %v398
        %v400 = vmul.f32 %v399, %v399
        %v401 = vsel %vm393, %v400, 0.0
        %402 = vadd.xlane.f32.xlu0 %v401
        %v403 = vpop.xlane.xlu0 %402
        %v404 = vmul.f32 %v403, 0.032258064
        %v405 = vrsqrt.pop %v404
        %v406 = vmul.f32 %v404, %v405
        %vm407 = vcmp.eq.f32.partialorder %v404, inf
        %v408 = vsel %vm407, %v404, %v406
        %vm409 = vcmp.eq.f32.partialorder %v404, 0.0
        %v410 = vand.u32 %v404, 2147483648
        %v411 = vsel %vm409, %v410, %v408
        %v412 = vadd.f32 %v411, 1e-06
        %v413 = vrcp.pop %v412
        %v414 = vmul.f32 %v399, %v413
        %v415 = vld [vmem:[%s2] sm:$0xff]
        %v416 = vld [vmem:[%s2 + $0x8] sm:$0xff]
        %v417 = vld [vmem:[%s2 + $0x10] sm:$0xff]
        %v418 = vld [vmem:[%s2 + $0x18] sm:$0xff]
        %v419 = vld [vmem:[%s3] sm:$0x1]
        %v421 = vlaneseq
        %v422 = vshrl.u32 %v421, 7
        %v423 = vsub.s32 0, %v422
        %v424 = vrot.slane %v419, %v423
        %v427 = vsel %vm393, %v414, 0
        %429 = vmatprep.subr.mxu0 0.0
        %430 = vmatpush1.msra.mxu0 %v415
        %431 = vmatprep.subr.mxu0 0.0
        %432 = vmatpush1.msra.mxu0 %v416
        %433 = vmatprep.subr.mxu0 0.0
        %434 = vmatpush1.msra.mxu0 %v417
        %435 = vmatprep.subr.mxu0 0.0
        %436 = vmatpush1.msra.mxu0 %v418
        %437 = vmatprep.subr.mxu0 0.0
        %438 = vmatpush1.msra.mxu0 0.0
        %439 = vmatprep.subr.mxu0 0.0
        %440 = vmatpush1.msra.mxu0 0.0
        %441 = vmatprep.subr.mxu0 0.0
        %442 = vmatpush1.msra.mxu0 0.0
        %443 = vmatprep.subr.mxu0 0.0
        %444 = vmatpush1.msra.mxu0 0.0
        %445 = vmatprep.subr.mxu0 0.0
        %446 = vmatpush1.msra.mxu0 0.0
        %447 = vmatprep.subr.mxu0 0.0
        %448 = vmatpush1.msra.mxu0 0.0
        %449 = vmatprep.subr.mxu0 0.0
        %450 = vmatpush1.msra.mxu0 0.0
        %451 = vmatprep.subr.mxu0 0.0
        %452 = vmatpush1.msra.mxu0 0.0
        %453 = vmatprep.subr.mxu0 0.0
        %454 = vmatpush1.msra.mxu0 0.0
        %455 = vmatprep.subr.mxu0 0.0
        %456 = vmatpush1.msra.mxu0 0.0
        %457 = vmatprep.subr.mxu0 0.0
        %458 = vmatpush1.msra.mxu0 0.0
        %459 = vmatprep.subr.mxu0 0.0
        %460 = vmatpush1.msra.mxu0 0.0
        %461 = vmatprep.subr.mxu0 0.0
        %462 = vmatpush1.msra.mxu0 0.0
        %463 = vmatprep.subr.mxu0 0.0
        %464 = vmatpush1.msra.mxu0 0.0
        %465 = vmatprep.subr.mxu0 0.0
        %466 = vmatpush1.msra.mxu0 0.0
        %467 = vmatprep.subr.mxu0 0.0
        %468 = vmatpush1.msra.mxu0 0.0
        %469 = vmatprep.subr.mxu0 0.0
        %470 = vmatpush1.msra.mxu0 0.0
        %471 = vmatprep.subr.mxu0 0.0
        %472 = vmatpush1.msra.mxu0 0.0
        %473 = vmatprep.subr.mxu0 0.0
        %474 = vmatpush1.msra.mxu0 0.0
        %475 = vmatprep.subr.mxu0 0.0
        %476 = vmatpush1.msra.mxu0 0.0
        %477 = vmatprep.subr.mxu0 0.0
        %478 = vmatpush1.msra.mxu0 0.0
        %479 = vmatprep.subr.mxu0 0.0
        %480 = vmatpush1.msra.mxu0 0.0
        %481 = vmatprep.subr.mxu0 0.0
        %482 = vmatpush1.msra.mxu0 0.0
        %483 = vmatprep.subr.mxu0 0.0
        %484 = vmatpush1.msra.mxu0 0.0
        %485 = vmatprep.subr.mxu0 0.0
        %486 = vmatpush1.msra.mxu0 0.0
        %487 = vmatprep.subr.mxu0 0.0
        %488 = vmatpush1.msra.mxu0 0.0
        %489 = vmatprep.subr.mxu0 0.0
        %490 = vmatpush1.msra.mxu0 0.0
        %491 = vmatprep.subr.mxu0 0.0
        %492 = vmatpush1.msra.mxu0 0.0
        %493 = vmatprep.mubr.f32.mxu0 0.0
        %494 = vmatmul.mubr.f32.gmra.mrb[0].mxu0 %v427
        %v495 = vpop.f32.mrb[0].mxu0
        %v496 = vadd.f32 %v424, %v495
        %v497 = vpop.f32.mrb[0].mxu0
        %498 = vdwg.mxu0
        %500 = vrot.lane.b32.xlu0 %v496, 96
        %v501 = vpop.permute.xlu0 %500
        %vm502 = vcmask 64512
        %v503 = vsel %vm502, %v496, 0
        %v505 = vsel %vm502, %v501, 0
        %507 = vmatprep.subr.mxu0 0.0
        %508 = vmatpush1.xpose.msra.mxu0 %v505
        %509 = vmatprep.subr.mxu0 0.0
        %510 = vmatpush1.xpose.msra.mxu0 0.0
        %511 = vmatprep.subr.mxu0 0.0
        %512 = vmatpush1.xpose.msra.mxu0 0.0
        %513 = vmatprep.subr.mxu0 0.0
        %514 = vmatpush1.xpose.msra.mxu0 0.0
        %515 = vmatprep.subr.mxu0 0.0
        %516 = vmatpush1.xpose.msra.mxu0 0.0
        %517 = vmatprep.subr.mxu0 0.0
        %518 = vmatpush1.xpose.msra.mxu0 0.0
        %519 = vmatprep.subr.mxu0 0.0
        %520 = vmatpush1.xpose.msra.mxu0 0.0
        %521 = vmatprep.subr.mxu0 0.0
        %522 = vmatpush1.xpose.msra.mxu0 0.0
        %523 = vmatprep.subr.mxu0 0.0
        %524 = vmatpush1.xpose.msra.mxu0 0.0
        %525 = vmatprep.subr.mxu0 0.0
        %526 = vmatpush1.xpose.msra.mxu0 0.0
        %527 = vmatprep.subr.mxu0 0.0
        %528 = vmatpush1.xpose.msra.mxu0 0.0
        %529 = vmatprep.subr.mxu0 0.0
        %530 = vmatpush1.xpose.msra.mxu0 0.0
        %531 = vmatprep.subr.mxu0 0.0
        %532 = vmatpush1.xpose.msra.mxu0 0.0
        %533 = vmatprep.subr.mxu0 0.0
        %534 = vmatpush1.xpose.msra.mxu0 0.0
        %535 = vmatprep.subr.mxu0 0.0
        %536 = vmatpush1.xpose.msra.mxu0 0.0
        %537 = vmatprep.subr.mxu0 0.0
        %538 = vmatpush1.xpose.msra.mxu0 0.0
        %539 = vmatprep.subr.mxu0 0.0
        %540 = vmatpush1.xpose.msra.mxu0 0.0
        %541 = vmatprep.subr.mxu0 0.0
        %542 = vmatpush1.xpose.msra.mxu0 0.0
        %543 = vmatprep.subr.mxu0 0.0
        %544 = vmatpush1.xpose.msra.mxu0 0.0
        %545 = vmatprep.subr.mxu0 0.0
        %546 = vmatpush1.xpose.msra.mxu0 0.0
        %547 = vmatprep.subr.mxu0 0.0
        %548 = vmatpush1.xpose.msra.mxu0 0.0
        %549 = vmatprep.subr.mxu0 0.0
        %550 = vmatpush1.xpose.msra.mxu0 0.0
        %551 = vmatprep.subr.mxu0 0.0
        %552 = vmatpush1.xpose.msra.mxu0 0.0
        %553 = vmatprep.subr.mxu0 0.0
        %554 = vmatpush1.xpose.msra.mxu0 0.0
        %555 = vmatprep.subr.mxu0 0.0
        %556 = vmatpush1.xpose.msra.mxu0 0.0
        %557 = vmatprep.subr.mxu0 0.0
        %558 = vmatpush1.xpose.msra.mxu0 0.0
        %559 = vmatprep.subr.mxu0 0.0
        %560 = vmatpush1.xpose.msra.mxu0 0.0
        %561 = vmatprep.subr.mxu0 0.0
        %562 = vmatpush1.xpose.msra.mxu0 0.0
        %563 = vmatprep.subr.mxu0 0.0
        %564 = vmatpush1.xpose.msra.mxu0 0.0
        %565 = vmatprep.subr.mxu0 0.0
        %566 = vmatpush1.xpose.msra.mxu0 0.0
        %567 = vmatprep.subr.mxu0 0.0
        %568 = vmatpush1.xpose.msra.mxu0 0.0
        %569 = vmatprep.subr.mxu0 0.0
        %570 = vmatpush1.xpose.msra.mxu0 0.0
        %571 = vmatprep.mubr.f32.mxu0 0.0
        %572 = vmatmul.mubr.f32.gmra.mrb[0].mxu0 %v503
        %v573 = vpop.f32.mrb[0].mxu0
        %v574 = vadd.f32 0.0, %v573
        %v575 = vpop.f32.mrb[0].mxu0
        %576 = vdwg.mxu0
        %v577 = vmul.f32 %v574, 0.35355338
        %v579 = vlaneseq
        %v580 = vshrl.u32 %v579, 7
        %v581 = vsub.s32 0, %v580
        %v582 = vrot.slane %v392, %v581
        %v584 = vadd.f32 %v577, %v582
        %v585 = vsel %vm502, %v584, -inf
        %586 = vmax.xlane.f32.xlu0 %v585
        %v587 = vpop.xlane.xlu0 %586
        %v588 = vsub.f32 %v584, %v587
        %v589 = vmul.f32 %v588, 1.442695
        %v590 = vpow.pop %v589
        %v591 = vsel %vm502, %v590, 0.0
        %592 = vadd.xlane.f32.xlu0 %v591
        %v593 = vpop.xlane.xlu0 %592
        %v594 = vrcp.pop %v593
        %v595 = vmul.f32 %v590, %v594
        %596 = vrot.lane.b32.xlu0 %v496, 64
        %v597 = vpop.permute.xlu0 %596
        %v600 = vsel %vm502, %v595, 0
        %602 = vmatprep.subr.mxu0 0.0
        %603 = vmatpush1.msra.mxu0 %v597
        %604 = vmatprep.subr.mxu0 0.0
        %605 = vmatpush1.msra.mxu0 0.0
        %606 = vmatprep.subr.mxu0 0.0
        %607 = vmatpush1.msra.mxu0 0.0
        %608 = vmatprep.subr.mxu0 0.0
        %609 = vmatpush1.msra.mxu0 0.0
        %610 = vmatprep.subr.mxu0 0.0
        %611 = vmatpush1.msra.mxu0 0.0
        %612 = vmatprep.subr.mxu0 0.0
        %613 = vmatpush1.msra.mxu0 0.0
        %614 = vmatprep.subr.mxu0 0.0
        %615 = vmatpush1.msra.mxu0 0.0
        %616 = vmatprep.subr.mxu0 0.0
        %617 = vmatpush1.msra.mxu0 0.0
        %618 = vmatprep.subr.mxu0 0.0
        %619 = vmatpush1.msra.mxu0 0.0
        %620 = vmatprep.subr.mxu0 0.0
        %621 = vmatpush1.msra.mxu0 0.0
        %622 = vmatprep.subr.mxu0 0.0
        %623 = vmatpush1.msra.mxu0 0.0
        %624 = vmatprep.subr.mxu0 0.0
        %625 = vmatpush1.msra.mxu0 0.0
        %626 = vmatprep.subr.mxu0 0.0
        %627 = vmatpush1.msra.mxu0 0.0
        %628 = vmatprep.subr.mxu0 0.0
        %629 = vmatpush1.msra.mxu0 0.0
        %630 = vmatprep.subr.mxu0 0.0
        %631 = vmatpush1.msra.mxu0 0.0
        %632 = vmatprep.subr.mxu0 0.0
        %633 = vmatpush1.msra.mxu0 0.0
        %634 = vmatprep.subr.mxu0 0.0
        %635 = vmatpush1.msra.mxu0 0.0
        %636 = vmatprep.subr.mxu0 0.0
        %637 = vmatpush1.msra.mxu0 0.0
        %638 = vmatprep.subr.mxu0 0.0
        %639 = vmatpush1.msra.mxu0 0.0
        %640 = vmatprep.subr.mxu0 0.0
        %641 = vmatpush1.msra.mxu0 0.0
        %642 = vmatprep.subr.mxu0 0.0
        %643 = vmatpush1.msra.mxu0 0.0
        %644 = vmatprep.subr.mxu0 0.0
        %645 = vmatpush1.msra.mxu0 0.0
        %646 = vmatprep.subr.mxu0 0.0
        %647 = vmatpush1.msra.mxu0 0.0
        %648 = vmatprep.subr.mxu0 0.0
        %649 = vmatpush1.msra.mxu0 0.0
        %650 = vmatprep.subr.mxu0 0.0
        %651 = vmatpush1.msra.mxu0 0.0
        %652 = vmatprep.subr.mxu0 0.0
        %653 = vmatpush1.msra.mxu0 0.0
        %654 = vmatprep.subr.mxu0 0.0
        %655 = vmatpush1.msra.mxu0 0.0
        %656 = vmatprep.subr.mxu0 0.0
        %657 = vmatpush1.msra.mxu0 0.0
        %658 = vmatprep.subr.mxu0 0.0
        %659 = vmatpush1.msra.mxu0 0.0
        %660 = vmatprep.subr.mxu0 0.0
        %661 = vmatpush1.msra.mxu0 0.0
        %662 = vmatprep.subr.mxu0 0.0
        %663 = vmatpush1.msra.mxu0 0.0
        %664 = vmatprep.subr.mxu0 0.0
        %665 = vmatpush1.msra.mxu0 0.0
        %666 = vmatprep.mubr.f32.mxu0 0.0
        %667 = vmatmul.mubr.f32.gmra.mrb[0].mxu0 %v600
        %v668 = vpop.f32.mrb[0].mxu0
        %v669 = vadd.f32 0.0, %v668
        %v670 = vpop.f32.mrb[0].mxu0
        %671 = vdwg.mxu0
        %672 = vst.msk [vmem:[#allocation2] sm:$0xff] %vm502, %v669
        %673 = vrot.lane.b32.xlu0 %v496, 120
        %v674 = vpop.permute.xlu0 %673
        %675 = vrot.lane.b32.xlu0 %v496, 88
        %v676 = vpop.permute.xlu0 %675
        %v677 = vsel %vm502, %v674, 0
        %v679 = vsel %vm502, %v676, 0
        %681 = vmatprep.subr.mxu0 0.0
        %682 = vmatpush1.xpose.msra.mxu0 %v679
        %683 = vmatprep.subr.mxu0 0.0
        %684 = vmatpush1.xpose.msra.mxu0 0.0
        %685 = vmatprep.subr.mxu0 0.0
        %686 = vmatpush1.xpose.msra.mxu0 0.0
        %687 = vmatprep.subr.mxu0 0.0
        %688 = vmatpush1.xpose.msra.mxu0 0.0
        %689 = vmatprep.subr.mxu0 0.0
        %690 = vmatpush1.xpose.msra.mxu0 0.0
        %691 = vmatprep.subr.mxu0 0.0
        %692 = vmatpush1.xpose.msra.mxu0 0.0
        %693 = vmatprep.subr.mxu0 0.0
        %694 = vmatpush1.xpose.msra.mxu0 0.0
        %695 = vmatprep.subr.mxu0 0.0
        %696 = vmatpush1.xpose.msra.mxu0 0.0
        %697 = vmatprep.subr.mxu0 0.0
        %698 = vmatpush1.xpose.msra.mxu0 0.0
        %699 = vmatprep.subr.mxu0 0.0
        %700 = vmatpush1.xpose.msra.mxu0 0.0
        %701 = vmatprep.subr.mxu0 0.0
        %702 = vmatpush1.xpose.msra.mxu0 0.0
        %703 = vmatprep.subr.mxu0 0.0
        %704 = vmatpush1.xpose.msra.mxu0 0.0
        %705 = vmatprep.subr.mxu0 0.0
        %706 = vmatpush1.xpose.msra.mxu0 0.0
        %707 = vmatprep.subr.mxu0 0.0
        %708 = vmatpush1.xpose.msra.mxu0 0.0
        %709 = vmatprep.subr.mxu0 0.0
        %710 = vmatpush1.xpose.msra.mxu0 0.0
        %711 = vmatprep.subr.mxu0 0.0
        %712 = vmatpush1.xpose.msra.mxu0 0.0
        %713 = vmatprep.subr.mxu0 0.0
        %714 = vmatpush1.xpose.msra.mxu0 0.0
        %715 = vmatprep.subr.mxu0 0.0
        %716 = vmatpush1.xpose.msra.mxu0 0.0
        %717 = vmatprep.subr.mxu0 0.0
        %718 = vmatpush1.xpose.msra.mxu0 0.0
        %719 = vmatprep.subr.mxu0 0.0
        %720 = vmatpush1.xpose.msra.mxu0 0.0
        %721 = vmatprep.subr.mxu0 0.0
        %722 = vmatpush1.xpose.msra.mxu0 0.0
        %723 = vmatprep.subr.mxu0 0.0
        %724 = vmatpush1.xpose.msra.mxu0 0.0
        %725 = vmatprep.subr.mxu0 0.0
        %726 = vmatpush1.xpose.msra.mxu0 0.0
        %727 = vmatprep.subr.mxu0 0.0
        %728 = vmatpush1.xpose.msra.mxu0 0.0
        %729 = vmatprep.subr.mxu0 0.0
        %730 = vmatpush1.xpose.msra.mxu0 0.0
        %731 = vmatprep.subr.mxu0 0.0
        %732 = vmatpush1.xpose.msra.mxu0 0.0
        %733 = vmatprep.subr.mxu0 0.0
        %734 = vmatpush1.xpose.msra.mxu0 0.0
        %735 = vmatprep.subr.mxu0 0.0
        %736 = vmatpush1.xpose.msra.mxu0 0.0
        %737 = vmatprep.subr.mxu0 0.0
        %738 = vmatpush1.xpose.msra.mxu0 0.0
        %739 = vmatprep.subr.mxu0 0.0
        %740 = vmatpush1.xpose.msra.mxu0 0.0
        %741 = vmatprep.subr.mxu0 0.0
        %742 = vmatpush1.xpose.msra.mxu0 0.0
        %743 = vmatprep.subr.mxu0 0.0
        %744 = vmatpush1.xpose.msra.mxu0 0.0
        %745 = vmatprep.mubr.f32.mxu0 0.0
        %746 = vmatmul.mubr.f32.gmra.mrb[0].mxu0 %v677
        %v747 = vpop.f32.mrb[0].mxu0
        %v748 = vadd.f32 0.0, %v747
        %v749 = vpop.f32.mrb[0].mxu0
        %750 = vdwg.mxu0
        %v751 = vmul.f32 %v748, 0.35355338
        %v752 = vadd.f32 %v751, %v582
        %v753 = vsel %vm502, %v752, -inf
        %754 = vmax.xlane.f32.xlu0 %v753
        %v755 = vpop.xlane.xlu0 %754
        %v756 = vsub.f32 %v752, %v755
        %v757 = vmul.f32 %v756, 1.442695
        %v758 = vpow.pop %v757
        %v759 = vsel %vm502, %v758, 0.0
        %760 = vadd.xlane.f32.xlu0 %v759
        %v761 = vpop.xlane.xlu0 %760
        %v762 = vrcp.pop %v761
        %v763 = vmul.f32 %v758, %v762
        %764 = vrot.lane.b32.xlu0 %v496, 56
        %v765 = vpop.permute.xlu0 %764
        %v768 = vsel %vm502, %v763, 0
        %770 = vmatprep.subr.mxu0 0.0
        %771 = vmatpush1.msra.mxu0 %v765
        %772 = vmatprep.subr.mxu0 0.0
        %773 = vmatpush1.msra.mxu0 0.0
        %774 = vmatprep.subr.mxu0 0.0
        %775 = vmatpush1.msra.mxu0 0.0
        %776 = vmatprep.subr.mxu0 0.0
        %777 = vmatpush1.msra.mxu0 0.0
        %778 = vmatprep.subr.mxu0 0.0
        %779 = vmatpush1.msra.mxu0 0.0
        %780 = vmatprep.subr.mxu0 0.0
        %781 = vmatpush1.msra.mxu0 0.0
        %782 = vmatprep.subr.mxu0 0.0
        %783 = vmatpush1.msra.mxu0 0.0
        %784 = vmatprep.subr.mxu0 0.0
        %785 = vmatpush1.msra.mxu0 0.0
        %786 = vmatprep.subr.mxu0 0.0
        %787 = vmatpush1.msra.mxu0 0.0
        %788 = vmatprep.subr.mxu0 0.0
        %789 = vmatpush1.msra.mxu0 0.0
        %790 = vmatprep.subr.mxu0 0.0
        %791 = vmatpush1.msra.mxu0 0.0
        %792 = vmatprep.subr.mxu0 0.0
        %793 = vmatpush1.msra.mxu0 0.0
        %794 = vmatprep.subr.mxu0 0.0
        %795 = vmatpush1.msra.mxu0 0.0
        %796 = vmatprep.subr.mxu0 0.0
        %797 = vmatpush1.msra.mxu0 0.0
        %798 = vmatprep.subr.mxu0 0.0
        %799 = vmatpush1.msra.mxu0 0.0
        %800 = vmatprep.subr.mxu0 0.0
        %801 = vmatpush1.msra.mxu0 0.0
        %802 = vmatprep.subr.mxu0 0.0
        %803 = vmatpush1.msra.mxu0 0.0
        %804 = vmatprep.subr.mxu0 0.0
        %805 = vmatpush1.msra.mxu0 0.0
        %806 = vmatprep.subr.mxu0 0.0
        %807 = vmatpush1.msra.mxu0 0.0
        %808 = vmatprep.subr.mxu0 0.0
        %809 = vmatpush1.msra.mxu0 0.0
        %810 = vmatprep.subr.mxu0 0.0
        %811 = vmatpush1.msra.mxu0 0.0
        %812 = vmatprep.subr.mxu0 0.0
        %813 = vmatpush1.msra.mxu0 0.0
        %814 = vmatprep.subr.mxu0 0.0
        %815 = vmatpush1.msra.mxu0 0.0
        %816 = vmatprep.subr.mxu0 0.0
        %817 = vmatpush1.msra.mxu0 0.0
        %818 = vmatprep.subr.mxu0 0.0
        %819 = vmatpush1.msra.mxu0 0.0
        %820 = vmatprep.subr.mxu0 0.0
        %821 = vmatpush1.msra.mxu0 0.0
        %822 = vmatprep.subr.mxu0 0.0
        %823 = vmatpush1.msra.mxu0 0.0
        %824 = vmatprep.subr.mxu0 0.0
        %825 = vmatpush1.msra.mxu0 0.0
        %826 = vmatprep.subr.mxu0 0.0
        %827 = vmatpush1.msra.mxu0 0.0
        %828 = vmatprep.subr.mxu0 0.0
        %829 = vmatpush1.msra.mxu0 0.0
        %830 = vmatprep.subr.mxu0 0.0
        %831 = vmatpush1.msra.mxu0 0.0
        %832 = vmatprep.subr.mxu0 0.0
        %833 = vmatpush1.msra.mxu0 0.0
        %834 = vmatprep.mubr.f32.mxu0 0.0
        %835 = vmatmul.mubr.f32.gmra.mrb[0].mxu0 %v768
        %v836 = vpop.f32.mrb[0].mxu0
        %v837 = vadd.f32 0.0, %v836
        %v838 = vpop.f32.mrb[0].mxu0
        %839 = vdwg.mxu0
        %841 = vrot.lane.b32.xlu0 %v837, 8
        %v842 = vpop.permute.xlu0 %841
        %vm844 = vcmask 130112
        %845 = vst.msk [vmem:[#allocation2] sm:$0xff] %vm844, %v842
        %846 = vrot.lane.b32.xlu0 %v496, 112
        %v847 = vpop.permute.xlu0 %846
        %848 = vrot.lane.b32.xlu0 %v496, 80
        %v849 = vpop.permute.xlu0 %848
        %v850 = vsel %vm502, %v847, 0
        %v852 = vsel %vm502, %v849, 0
        %854 = vmatprep.subr.mxu0 0.0
        %855 = vmatpush1.xpose.msra.mxu0 %v852
        %856 = vmatprep.subr.mxu0 0.0
        %857 = vmatpush1.xpose.msra.mxu0 0.0
        %858 = vmatprep.subr.mxu0 0.0
        %859 = vmatpush1.xpose.msra.mxu0 0.0
        %860 = vmatprep.subr.mxu0 0.0
        %861 = vmatpush1.xpose.msra.mxu0 0.0
        %862 = vmatprep.subr.mxu0 0.0
        %863 = vmatpush1.xpose.msra.mxu0 0.0
        %864 = vmatprep.subr.mxu0 0.0
        %865 = vmatpush1.xpose.msra.mxu0 0.0
        %866 = vmatprep.subr.mxu0 0.0
        %867 = vmatpush1.xpose.msra.mxu0 0.0
        %868 = vmatprep.subr.mxu0 0.0
        %869 = vmatpush1.xpose.msra.mxu0 0.0
        %870 = vmatprep.subr.mxu0 0.0
        %871 = vmatpush1.xpose.msra.mxu0 0.0
        %872 = vmatprep.subr.mxu0 0.0
        %873 = vmatpush1.xpose.msra.mxu0 0.0
        %874 = vmatprep.subr.mxu0 0.0
        %875 = vmatpush1.xpose.msra.mxu0 0.0
        %876 = vmatprep.subr.mxu0 0.0
        %877 = vmatpush1.xpose.msra.mxu0 0.0
        %878 = vmatprep.subr.mxu0 0.0
        %879 = vmatpush1.xpose.msra.mxu0 0.0
        %880 = vmatprep.subr.mxu0 0.0
        %881 = vmatpush1.xpose.msra.mxu0 0.0
        %882 = vmatprep.subr.mxu0 0.0
        %883 = vmatpush1.xpose.msra.mxu0 0.0
        %884 = vmatprep.subr.mxu0 0.0
        %885 = vmatpush1.xpose.msra.mxu0 0.0
        %886 = vmatprep.subr.mxu0 0.0
        %887 = vmatpush1.xpose.msra.mxu0 0.0
        %888 = vmatprep.subr.mxu0 0.0
        %889 = vmatpush1.xpose.msra.mxu0 0.0
        %890 = vmatprep.subr.mxu0 0.0
        %891 = vmatpush1.xpose.msra.mxu0 0.0
        %892 = vmatprep.subr.mxu0 0.0
        %893 = vmatpush1.xpose.msra.mxu0 0.0
        %894 = vmatprep.subr.mxu0 0.0
        %895 = vmatpush1.xpose.msra.mxu0 0.0
        %896 = vmatprep.subr.mxu0 0.0
        %897 = vmatpush1.xpose.msra.mxu0 0.0
        %898 = vmatprep.subr.mxu0 0.0
        %899 = vmatpush1.xpose.msra.mxu0 0.0
        %900 = vmatprep.subr.mxu0 0.0
        %901 = vmatpush1.xpose.msra.mxu0 0.0
        %902 = vmatprep.subr.mxu0 0.0
        %903 = vmatpush1.xpose.msra.mxu0 0.0
        %904 = vmatprep.subr.mxu0 0.0
        %905 = vmatpush1.xpose.msra.mxu0 0.0
        %906 = vmatprep.subr.mxu0 0.0
        %907 = vmatpush1.xpose.msra.mxu0 0.0
        %908 = vmatprep.subr.mxu0 0.0
        %909 = vmatpush1.xpose.msra.mxu0 0.0
        %910 = vmatprep.subr.mxu0 0.0
        %911 = vmatpush1.xpose.msra.mxu0 0.0
        %912 = vmatprep.subr.mxu0 0.0
        %913 = vmatpush1.xpose.msra.mxu0 0.0
        %914 = vmatprep.subr.mxu0 0.0
        %915 = vmatpush1.xpose.msra.mxu0 0.0
        %916 = vmatprep.subr.mxu0 0.0
        %917 = vmatpush1.xpose.msra.mxu0 0.0
        %918 = vmatprep.mubr.f32.mxu0 0.0
        %919 = vmatmul.mubr.f32.gmra.mrb[0].mxu0 %v850
        %v920 = vpop.f32.mrb[0].mxu0
        %v921 = vadd.f32 0.0, %v920
        %v922 = vpop.f32.mrb[0].mxu0
        %923 = vdwg.mxu0
        %v924 = vmul.f32 %v921, 0.35355338
        %v925 = vadd.f32 %v924, %v582
        %v926 = vsel %vm502, %v925, -inf
        %927 = vmax.xlane.f32.xlu0 %v926
        %v928 = vpop.xlane.xlu0 %927
        %v929 = vsub.f32 %v925, %v928
        %v930 = vmul.f32 %v929, 1.442695
        %v931 = vpow.pop %v930
        %v932 = vsel %vm502, %v931, 0.0
        %933 = vadd.xlane.f32.xlu0 %v932
        %v934 = vpop.xlane.xlu0 %933
        %v935 = vrcp.pop %v934
        %v936 = vmul.f32 %v931, %v935
        %937 = vrot.lane.b32.xlu0 %v496, 48
        %v938 = vpop.permute.xlu0 %937
        %v941 = vsel %vm502, %v936, 0
        %943 = vmatprep.subr.mxu0 0.0
        %944 = vmatpush1.msra.mxu0 %v938
        %945 = vmatprep.subr.mxu0 0.0
        %946 = vmatpush1.msra.mxu0 0.0
        %947 = vmatprep.subr.mxu0 0.0
        %948 = vmatpush1.msra.mxu0 0.0
        %949 = vmatprep.subr.mxu0 0.0
        %950 = vmatpush1.msra.mxu0 0.0
        %951 = vmatprep.subr.mxu0 0.0
        %952 = vmatpush1.msra.mxu0 0.0
        %953 = vmatprep.subr.mxu0 0.0
        %954 = vmatpush1.msra.mxu0 0.0
        %955 = vmatprep.subr.mxu0 0.0
        %956 = vmatpush1.msra.mxu0 0.0
        %957 = vmatprep.subr.mxu0 0.0
        %958 = vmatpush1.msra.mxu0 0.0
        %959 = vmatprep.subr.mxu0 0.0
        %960 = vmatpush1.msra.mxu0 0.0
        %961 = vmatprep.subr.mxu0 0.0
        %962 = vmatpush1.msra.mxu0 0.0
        %963 = vmatprep.subr.mxu0 0.0
        %964 = vmatpush1.msra.mxu0 0.0
        %965 = vmatprep.subr.mxu0 0.0
        %966 = vmatpush1.msra.mxu0 0.0
        %967 = vmatprep.subr.mxu0 0.0
        %968 = vmatpush1.msra.mxu0 0.0
        %969 = vmatprep.subr.mxu0 0.0
        %970 = vmatpush1.msra.mxu0 0.0
        %971 = vmatprep.subr.mxu0 0.0
        %972 = vmatpush1.msra.mxu0 0.0
        %973 = vmatprep.subr.mxu0 0.0
        %974 = vmatpush1.msra.mxu0 0.0
        %975 = vmatprep.subr.mxu0 0.0
        %976 = vmatpush1.msra.mxu0 0.0
        %977 = vmatprep.subr.mxu0 0.0
        %978 = vmatpush1.msra.mxu0 0.0
        %979 = vmatprep.subr.mxu0 0.0
        %980 = vmatpush1.msra.mxu0 0.0
        %981 = vmatprep.subr.mxu0 0.0
        %982 = vmatpush1.msra.mxu0 0.0
        %983 = vmatprep.subr.mxu0 0.0
        %984 = vmatpush1.msra.mxu0 0.0
        %985 = vmatprep.subr.mxu0 0.0
        %986 = vmatpush1.msra.mxu0 0.0
        %987 = vmatprep.subr.mxu0 0.0
        %988 = vmatpush1.msra.mxu0 0.0
        %989 = vmatprep.subr.mxu0 0.0
        %990 = vmatpush1.msra.mxu0 0.0
        %991 = vmatprep.subr.mxu0 0.0
        %992 = vmatpush1.msra.mxu0 0.0
        %993 = vmatprep.subr.mxu0 0.0
        %994 = vmatpush1.msra.mxu0 0.0
        %995 = vmatprep.subr.mxu0 0.0
        %996 = vmatpush1.msra.mxu0 0.0
        %997 = vmatprep.subr.mxu0 0.0
        %998 = vmatpush1.msra.mxu0 0.0
        %999 = vmatprep.subr.mxu0 0.0
        %1000 = vmatpush1.msra.mxu0 0.0
        %1001 = vmatprep.subr.mxu0 0.0
        %1002 = vmatpush1.msra.mxu0 0.0
        %1003 = vmatprep.subr.mxu0 0.0
        %1004 = vmatpush1.msra.mxu0 0.0
        %1005 = vmatprep.subr.mxu0 0.0
        %1006 = vmatpush1.msra.mxu0 0.0
        %1007 = vmatprep.mubr.f32.mxu0 0.0
        %1008 = vmatmul.mubr.f32.gmra.mrb[0].mxu0 %v941
        %v1009 = vpop.f32.mrb[0].mxu0
        %v1010 = vadd.f32 0.0, %v1009
        %v1011 = vpop.f32.mrb[0].mxu0
        %1012 = vdwg.mxu0
        %1014 = vrot.lane.b32.xlu0 %v1010, 16
        %v1015 = vpop.permute.xlu0 %1014
        %vm1017 = vcmask 195712
        %1018 = vst.msk [vmem:[#allocation2] sm:$0xff] %vm1017, %v1015
        %1019 = vrot.lane.b32.xlu0 %v496, 104
        %v1020 = vpop.permute.xlu0 %1019
        %1021 = vrot.lane.b32.xlu0 %v496, 72
        %v1022 = vpop.permute.xlu0 %1021
        %v1023 = vsel %vm502, %v1020, 0
        %v1025 = vsel %vm502, %v1022, 0
        %1027 = vmatprep.subr.mxu0 0.0
        %1028 = vmatpush1.xpose.msra.mxu0 %v1025
        %1029 = vmatprep.subr.mxu0 0.0
        %1030 = vmatpush1.xpose.msra.mxu0 0.0
        %1031 = vmatprep.subr.mxu0 0.0
        %1032 = vmatpush1.xpose.msra.mxu0 0.0
        %1033 = vmatprep.subr.mxu0 0.0
        %1034 = vmatpush1.xpose.msra.mxu0 0.0
        %1035 = vmatprep.subr.mxu0 0.0
        %1036 = vmatpush1.xpose.msra.mxu0 0.0
        %1037 = vmatprep.subr.mxu0 0.0
        %1038 = vmatpush1.xpose.msra.mxu0 0.0
        %1039 = vmatprep.subr.mxu0 0.0
        %1040 = vmatpush1.xpose.msra.mxu0 0.0
        %1041 = vmatprep.subr.mxu0 0.0
        %1042 = vmatpush1.xpose.msra.mxu0 0.0
        %1043 = vmatprep.subr.mxu0 0.0
        %1044 = vmatpush1.xpose.msra.mxu0 0.0
        %1045 = vmatprep.subr.mxu0 0.0
        %1046 = vmatpush1.xpose.msra.mxu0 0.0
        %1047 = vmatprep.subr.mxu0 0.0
        %1048 = vmatpush1.xpose.msra.mxu0 0.0
        %1049 = vmatprep.subr.mxu0 0.0
        %1050 = vmatpush1.xpose.msra.mxu0 0.0
        %1051 = vmatprep.subr.mxu0 0.0
        %1052 = vmatpush1.xpose.msra.mxu0 0.0
        %1053 = vmatprep.subr.mxu0 0.0
        %1054 = vmatpush1.xpose.msra.mxu0 0.0
        %1055 = vmatprep.subr.mxu0 0.0
        %1056 = vmatpush1.xpose.msra.mxu0 0.0
        %1057 = vmatprep.subr.mxu0 0.0
        %1058 = vmatpush1.xpose.msra.mxu0 0.0
        %1059 = vmatprep.subr.mxu0 0.0
        %1060 = vmatpush1.xpose.msra.mxu0 0.0
        %1061 = vmatprep.subr.mxu0 0.0
        %1062 = vmatpush1.xpose.msra.mxu0 0.0
        %1063 = vmatprep.subr.mxu0 0.0
        %1064 = vmatpush1.xpose.msra.mxu0 0.0
        %1065 = vmatprep.subr.mxu0 0.0
        %1066 = vmatpush1.xpose.msra.mxu0 0.0
        %1067 = vmatprep.subr.mxu0 0.0
        %1068 = vmatpush1.xpose.msra.mxu0 0.0
        %1069 = vmatprep.subr.mxu0 0.0
        %1070 = vmatpush1.xpose.msra.mxu0 0.0
        %1071 = vmatprep.subr.mxu0 0.0
        %1072 = vmatpush1.xpose.msra.mxu0 0.0
        %1073 = vmatprep.subr.mxu0 0.0
        %1074 = vmatpush1.xpose.msra.mxu0 0.0
        %1075 = vmatprep.subr.mxu0 0.0
        %1076 = vmatpush1.xpose.msra.mxu0 0.0
        %1077 = vmatprep.subr.mxu0 0.0
        %1078 = vmatpush1.xpose.msra.mxu0 0.0
        %1079 = vmatprep.subr.mxu0 0.0
        %1080 = vmatpush1.xpose.msra.mxu0 0.0
        %1081 = vmatprep.subr.mxu0 0.0
        %1082 = vmatpush1.xpose.msra.mxu0 0.0
        %1083 = vmatprep.subr.mxu0 0.0
        %1084 = vmatpush1.xpose.msra.mxu0 0.0
        %1085 = vmatprep.subr.mxu0 0.0
        %1086 = vmatpush1.xpose.msra.mxu0 0.0
        %1087 = vmatprep.subr.mxu0 0.0
        %1088 = vmatpush1.xpose.msra.mxu0 0.0
        %1089 = vmatprep.subr.mxu0 0.0
        %1090 = vmatpush1.xpose.msra.mxu0 0.0
        %1091 = vmatprep.mubr.f32.mxu0 0.0
        %1092 = vmatmul.mubr.f32.gmra.mrb[0].mxu0 %v1023
        %v1093 = vpop.f32.mrb[0].mxu0
        %v1094 = vadd.f32 0.0, %v1093
        %v1095 = vpop.f32.mrb[0].mxu0
        %1096 = vdwg.mxu0
        %v1097 = vmul.f32 %v1094, 0.35355338
        %v1098 = vadd.f32 %v1097, %v582
        %v1099 = vsel %vm502, %v1098, -inf
        %1100 = vmax.xlane.f32.xlu0 %v1099
        %v1101 = vpop.xlane.xlu0 %1100
        %v1102 = vsub.f32 %v1098, %v1101
        %v1103 = vmul.f32 %v1102, 1.442695
        %v1104 = vpow.pop %v1103
        %v1105 = vsel %vm502, %v1104, 0.0
        %1106 = vadd.xlane.f32.xlu0 %v1105
        %v1107 = vpop.xlane.xlu0 %1106
        %v1108 = vrcp.pop %v1107
        %v1109 = vmul.f32 %v1104, %v1108
        %1110 = vrot.lane.b32.xlu0 %v496, 40
        %v1111 = vpop.permute.xlu0 %1110
        %v1114 = vsel %vm502, %v1109, 0
        %1116 = vmatprep.subr.mxu0 0.0
        %1117 = vmatpush1.msra.mxu0 %v1111
        %1118 = vmatprep.subr.mxu0 0.0
        %1119 = vmatpush1.msra.mxu0 0.0
        %1120 = vmatprep.subr.mxu0 0.0
        %1121 = vmatpush1.msra.mxu0 0.0
        %1122 = vmatprep.subr.mxu0 0.0
        %1123 = vmatpush1.msra.mxu0 0.0
        %1124 = vmatprep.subr.mxu0 0.0
        %1125 = vmatpush1.msra.mxu0 0.0
        %1126 = vmatprep.subr.mxu0 0.0
        %1127 = vmatpush1.msra.mxu0 0.0
        %1128 = vmatprep.subr.mxu0 0.0
        %1129 = vmatpush1.msra.mxu0 0.0
        %1130 = vmatprep.subr.mxu0 0.0
        %1131 = vmatpush1.msra.mxu0 0.0
        %1132 = vmatprep.subr.mxu0 0.0
        %1133 = vmatpush1.msra.mxu0 0.0
        %1134 = vmatprep.subr.mxu0 0.0
        %1135 = vmatpush1.msra.mxu0 0.0
        %1136 = vmatprep.subr.mxu0 0.0
        %1137 = vmatpush1.msra.mxu0 0.0
        %1138 = vmatprep.subr.mxu0 0.0
        %1139 = vmatpush1.msra.mxu0 0.0
        %1140 = vmatprep.subr.mxu0 0.0
        %1141 = vmatpush1.msra.mxu0 0.0
        %1142 = vmatprep.subr.mxu0 0.0
        %1143 = vmatpush1.msra.mxu0 0.0
        %1144 = vmatprep.subr.mxu0 0.0
        %1145 = vmatpush1.msra.mxu0 0.0
        %1146 = vmatprep.subr.mxu0 0.0
        %1147 = vmatpush1.msra.mxu0 0.0
        %1148 = vmatprep.subr.mxu0 0.0
        %1149 = vmatpush1.msra.mxu0 0.0
        %1150 = vmatprep.subr.mxu0 0.0
        %1151 = vmatpush1.msra.mxu0 0.0
        %1152 = vmatprep.subr.mxu0 0.0
        %1153 = vmatpush1.msra.mxu0 0.0
        %1154 = vmatprep.subr.mxu0 0.0
        %1155 = vmatpush1.msra.mxu0 0.0
        %1156 = vmatprep.subr.mxu0 0.0
        %1157 = vmatpush1.msra.mxu0 0.0
        %1158 = vmatprep.subr.mxu0 0.0
        %1159 = vmatpush1.msra.mxu0 0.0
        %1160 = vmatprep.subr.mxu0 0.0
        %1161 = vmatpush1.msra.mxu0 0.0
        %1162 = vmatprep.subr.mxu0 0.0
        %1163 = vmatpush1.msra.mxu0 0.0
        %1164 = vmatprep.subr.mxu0 0.0
        %1165 = vmatpush1.msra.mxu0 0.0
        %1166 = vmatprep.subr.mxu0 0.0
        %1167 = vmatpush1.msra.mxu0 0.0
        %1168 = vmatprep.subr.mxu0 0.0
        %1169 = vmatpush1.msra.mxu0 0.0
        %1170 = vmatprep.subr.mxu0 0.0
        %1171 = vmatpush1.msra.mxu0 0.0
        %1172 = vmatprep.subr.mxu0 0.0
        %1173 = vmatpush1.msra.mxu0 0.0
        %1174 = vmatprep.subr.mxu0 0.0
        %1175 = vmatpush1.msra.mxu0 0.0
        %1176 = vmatprep.subr.mxu0 0.0
        %1177 = vmatpush1.msra.mxu0 0.0
        %1178 = vmatprep.subr.mxu0 0.0
        %1179 = vmatpush1.msra.mxu0 0.0
        %1180 = vmatprep.mubr.f32.mxu0 0.0
        %1181 = vmatmul.mubr.f32.gmra.mrb[0].mxu0 %v1114
        %v1182 = vpop.f32.mrb[0].mxu0
        %v1183 = vadd.f32 0.0, %v1182
        %v1184 = vpop.f32.mrb[0].mxu0
        %1185 = vdwg.mxu0
        %1187 = vrot.lane.b32.xlu0 %v1183, 24
        %v1188 = vpop.permute.xlu0 %1187
        %vm1190 = vcmask 261312
        %1191 = vst.msk [vmem:[#allocation2] sm:$0xff] %vm1190, %v1188
        %v1192 = vld [vmem:[#allocation2] sm:$0xff]
        %v1193 = vld [vmem:[%s4] sm:$0xff]
        %v1194 = vld [vmem:[%s4 + $0x8] sm:$0xff]
        %v1195 = vld [vmem:[%s4 + $0x10] sm:$0xff]
        %v1196 = vld [vmem:[%s4 + $0x18] sm:$0xff]
        %v1197 = vld [vmem:[%s5] sm:$0x1]
        %v1199 = vlaneseq
        %v1200 = vshrl.u32 %v1199, 7
        %v1201 = vsub.s32 0, %v1200
        %v1202 = vrot.slane %v1197, %v1201
        %v1205 = vsel %vm393, %v1192, 0
        %1207 = vmatprep.subr.mxu0 0.0
        %1208 = vmatpush1.msra.mxu0 %v1193
        %1209 = vmatprep.subr.mxu0 0.0
        %1210 = vmatpush1.msra.mxu0 %v1194
        %1211 = vmatprep.subr.mxu0 0.0
        %1212 = vmatpush1.msra.mxu0 %v1195
        %1213 = vmatprep.subr.mxu0 0.0
        %1214 = vmatpush1.msra.mxu0 %v1196
        %1215 = vmatprep.subr.mxu0 0.0
        %1216 = vmatpush1.msra.mxu0 0.0
        %1217 = vmatprep.subr.mxu0 0.0
        %1218 = vmatpush1.msra.mxu0 0.0
        %1219 = vmatprep.subr.mxu0 0.0
        %1220 = vmatpush1.msra.mxu0 0.0
        %1221 = vmatprep.subr.mxu0 0.0
        %1222 = vmatpush1.msra.mxu0 0.0
        %1223 = vmatprep.subr.mxu0 0.0
        %1224 = vmatpush1.msra.mxu0 0.0
        %1225 = vmatprep.subr.mxu0 0.0
        %1226 = vmatpush1.msra.mxu0 0.0
        %1227 = vmatprep.subr.mxu0 0.0
        %1228 = vmatpush1.msra.mxu0 0.0
        %1229 = vmatprep.subr.mxu0 0.0
        %1230 = vmatpush1.msra.mxu0 0.0
        %1231 = vmatprep.subr.mxu0 0.0
        %1232 = vmatpush1.msra.mxu0 0.0
        %1233 = vmatprep.subr.mxu0 0.0
        %1234 = vmatpush1.msra.mxu0 0.0
        %1235 = vmatprep.subr.mxu0 0.0
        %1236 = vmatpush1.msra.mxu0 0.0
        %1237 = vmatprep.subr.mxu0 0.0
        %1238 = vmatpush1.msra.mxu0 0.0
        %1239 = vmatprep.subr.mxu0 0.0
        %1240 = vmatpush1.msra.mxu0 0.0
        %1241 = vmatprep.subr.mxu0 0.0
        %1242 = vmatpush1.msra.mxu0 0.0
        %1243 = vmatprep.subr.mxu0 0.0
        %1244 = vmatpush1.msra.mxu0 0.0
        %1245 = vmatprep.subr.mxu0 0.0
        %1246 = vmatpush1.msra.mxu0 0.0
        %1247 = vmatprep.subr.mxu0 0.0
        %1248 = vmatpush1.msra.mxu0 0.0
        %1249 = vmatprep.subr.mxu0 0.0
        %1250 = vmatpush1.msra.mxu0 0.0
        %1251 = vmatprep.subr.mxu0 0.0
        %1252 = vmatpush1.msra.mxu0 0.0
        %1253 = vmatprep.subr.mxu0 0.0
        %1254 = vmatpush1.msra.mxu0 0.0
        %1255 = vmatprep.subr.mxu0 0.0
        %1256 = vmatpush1.msra.mxu0 0.0
        %1257 = vmatprep.subr.mxu0 0.0
        %1258 = vmatpush1.msra.mxu0 0.0
        %1259 = vmatprep.subr.mxu0 0.0
        %1260 = vmatpush1.msra.mxu0 0.0
        %1261 = vmatprep.subr.mxu0 0.0
        %1262 = vmatpush1.msra.mxu0 0.0
        %1263 = vmatprep.subr.mxu0 0.0
        %1264 = vmatpush1.msra.mxu0 0.0
        %1265 = vmatprep.subr.mxu0 0.0
        %1266 = vmatpush1.msra.mxu0 0.0
        %1267 = vmatprep.subr.mxu0 0.0
        %1268 = vmatpush1.msra.mxu0 0.0
        %1269 = vmatprep.subr.mxu0 0.0
        %1270 = vmatpush1.msra.mxu0 0.0
        %1271 = vmatprep.mubr.f32.mxu0 0.0
        %1272 = vmatmul.mubr.f32.gmra.mrb[0].mxu0 %v1205
        %v1273 = vpop.f32.mrb[0].mxu0
        %v1274 = vadd.f32 %v1202, %v1273
        %v1275 = vpop.f32.mrb[0].mxu0
        %1276 = vdwg.mxu0
        %v1277 = vadd.f32 %v389, %v1274
        %v1278 = vsel %vm393, %v1277, 0.0
        %1279 = vadd.xlane.f32.xlu0 %v1278
        %v1280 = vpop.xlane.xlu0 %1279
        %v1281 = vmul.f32 %v1280, %v397
        %v1282 = vsub.f32 %v1277, %v1281
        %v1283 = vmul.f32 %v1282, %v1282
        %v1284 = vsel %vm393, %v1283, 0.0
        %1285 = vadd.xlane.f32.xlu0 %v1284
        %v1286 = vpop.xlane.xlu0 %1285
        %v1287 = vmul.f32 %v1286, 0.032258064
        %v1288 = vrsqrt.pop %v1287
        %v1289 = vmul.f32 %v1287, %v1288
        %vm1290 = vcmp.eq.f32.partialorder %v1287, inf
        %v1291 = vsel %vm1290, %v1287, %v1289
        %vm1292 = vcmp.eq.f32.partialorder %v1287, 0.0
        %v1293 = vand.u32 %v1287, 2147483648
        %v1294 = vsel %vm1292, %v1293, %v1291
        %v1295 = vadd.f32 %v1294, 1e-06
        %v1296 = vrcp.pop %v1295
        %v1297 = vmul.f32 %v1282, %v1296
        %1298 = vst.msk [vmem:[#allocation3] sm:$0xff] %vm393, 0.0
        %v1299 = vld [vmem:[%s6] sm:$0xff]
        %v1300 = vld [vmem:[%s6 + $0x8] sm:$0xff]
        %v1301 = vld [vmem:[%s6 + $0x10] sm:$0xff]
        %v1302 = vld [vmem:[%s6 + $0x18] sm:$0xff]
        %v1303 = vld [vmem:[%s7] sm:$0x1]
        %v1305 = vlaneseq
        %v1306 = vshrl.u32 %v1305, 7
        %v1307 = vsub.s32 0, %v1306
        %v1308 = vrot.slane %v1303, %v1307
        %v1311 = vsel %vm393, %v1297, 0
        %1313 = vmatprep.subr.mxu0 0.0
        %1314 = vmatpush1.msra.mxu0 %v1299
        %1315 = vmatprep.subr.mxu0 0.0
        %1316 = vmatpush1.msra.mxu0 %v1300
        %1317 = vmatprep.subr.mxu0 0.0
        %1318 = vmatpush1.msra.mxu0 %v1301
        %1319 = vmatprep.subr.mxu0 0.0
        %1320 = vmatpush1.msra.mxu0 %v1302
        %1321 = vmatprep.subr.mxu0 0.0
        %1322 = vmatpush1.msra.mxu0 0.0
        %1323 = vmatprep.subr.mxu0 0.0
        %1324 = vmatpush1.msra.mxu0 0.0
        %1325 = vmatprep.subr.mxu0 0.0
        %1326 = vmatpush1.msra.mxu0 0.0
        %1327 = vmatprep.subr.mxu0 0.0
        %1328 = vmatpush1.msra.mxu0 0.0
        %1329 = vmatprep.subr.mxu0 0.0
        %1330 = vmatpush1.msra.mxu0 0.0
        %1331 = vmatprep.subr.mxu0 0.0
        %1332 = vmatpush1.msra.mxu0 0.0
        %1333 = vmatprep.subr.mxu0 0.0
        %1334 = vmatpush1.msra.mxu0 0.0
        %1335 = vmatprep.subr.mxu0 0.0
        %1336 = vmatpush1.msra.mxu0 0.0
        %1337 = vmatprep.subr.mxu0 0.0
        %1338 = vmatpush1.msra.mxu0 0.0
        %1339 = vmatprep.subr.mxu0 0.0
        %1340 = vmatpush1.msra.mxu0 0.0
        %1341 = vmatprep.subr.mxu0 0.0
        %1342 = vmatpush1.msra.mxu0 0.0
        %1343 = vmatprep.subr.mxu0 0.0
        %1344 = vmatpush1.msra.mxu0 0.0
        %1345 = vmatprep.subr.mxu0 0.0
        %1346 = vmatpush1.msra.mxu0 0.0
        %1347 = vmatprep.subr.mxu0 0.0
        %1348 = vmatpush1.msra.mxu0 0.0
        %1349 = vmatprep.subr.mxu0 0.0
        %1350 = vmatpush1.msra.mxu0 0.0
        %1351 = vmatprep.subr.mxu0 0.0
        %1352 = vmatpush1.msra.mxu0 0.0
        %1353 = vmatprep.subr.mxu0 0.0
        %1354 = vmatpush1.msra.mxu0 0.0
        %1355 = vmatprep.subr.mxu0 0.0
        %1356 = vmatpush1.msra.mxu0 0.0
        %1357 = vmatprep.subr.mxu0 0.0
        %1358 = vmatpush1.msra.mxu0 0.0
        %1359 = vmatprep.subr.mxu0 0.0
        %1360 = vmatpush1.msra.mxu0 0.0
        %1361 = vmatprep.subr.mxu0 0.0
        %1362 = vmatpush1.msra.mxu0 0.0
        %1363 = vmatprep.subr.mxu0 0.0
        %1364 = vmatpush1.msra.mxu0 0.0
        %1365 = vmatprep.subr.mxu0 0.0
        %1366 = vmatpush1.msra.mxu0 0.0
        %1367 = vmatprep.subr.mxu0 0.0
        %1368 = vmatpush1.msra.mxu0 0.0
        %1369 = vmatprep.subr.mxu0 0.0
        %1370 = vmatpush1.msra.mxu0 0.0
        %1371 = vmatprep.subr.mxu0 0.0
        %1372 = vmatpush1.msra.mxu0 0.0
        %1373 = vmatprep.subr.mxu0 0.0
        %1374 = vmatpush1.msra.mxu0 0.0
        %1375 = vmatprep.subr.mxu0 0.0
        %1376 = vmatpush1.msra.mxu0 0.0
        %1377 = vmatprep.mubr.f32.mxu0 0.0
        %1378 = vmatmul.mubr.f32.gmra.mrb[0].mxu0 %v1311
        %v1379 = vpop.f32.mrb[0].mxu0
        %v1380 = vadd.f32 %v1308, %v1379
        %v1381 = vpop.f32.mrb[0].mxu0
        %1382 = vdwg.mxu0
        %v1383 = vmax.f32 %v1380, 0.0
        %v1384 = vld [vmem:[#allocation3] sm:$0xff]
        %v1385 = vld [vmem:[%s8] sm:$0xff]
        %v1386 = vld [vmem:[%s8 + $0x8] sm:$0xff]
        %v1387 = vld [vmem:[%s8 + $0x10] sm:$0xff]
        %v1388 = vld [vmem:[%s8 + $0x18] sm:$0xff]
        %v1389 = vld [vmem:[%s8 + $0x20] sm:$0xff]
        %v1390 = vld [vmem:[%s8 + $0x28] sm:$0xff]
        %v1391 = vld [vmem:[%s8 + $0x30] sm:$0xff]
        %v1392 = vld [vmem:[%s8 + $0x38] sm:$0xff]
        %vm1393 = vcmask 523264
        %v1395 = vsel %vm1393, %v1383, 0
        %1397 = vmatprep.subr.mxu0 0.0
        %1398 = vmatpush1.msra.mxu0 %v1385
        %1399 = vmatprep.subr.mxu0 0.0
        %1400 = vmatpush1.msra.mxu0 %v1386
        %1401 = vmatprep.subr.mxu0 0.0
        %1402 = vmatpush1.msra.mxu0 %v1387
        %1403 = vmatprep.subr.mxu0 0.0
        %1404 = vmatpush1.msra.mxu0 %v1388
        %1405 = vmatprep.subr.mxu0 0.0
        %1406 = vmatpush1.msra.mxu0 %v1389
        %1407 = vmatprep.subr.mxu0 0.0
        %1408 = vmatpush1.msra.mxu0 %v1390
        %1409 = vmatprep.subr.mxu0 0.0
        %1410 = vmatpush1.msra.mxu0 %v1391
        %1411 = vmatprep.subr.mxu0 0.0
        %1412 = vmatpush1.msra.mxu0 %v1392
        %1413 = vmatprep.subr.mxu0 0.0
        %1414 = vmatpush1.msra.mxu0 0.0
        %1415 = vmatprep.subr.mxu0 0.0
        %1416 = vmatpush1.msra.mxu0 0.0
        %1417 = vmatprep.subr.mxu0 0.0
        %1418 = vmatpush1.msra.mxu0 0.0
        %1419 = vmatprep.subr.mxu0 0.0
        %1420 = vmatpush1.msra.mxu0 0.0
        %1421 = vmatprep.subr.mxu0 0.0
        %1422 = vmatpush1.msra.mxu0 0.0
        %1423 = vmatprep.subr.mxu0 0.0
        %1424 = vmatpush1.msra.mxu0 0.0
        %1425 = vmatprep.subr.mxu0 0.0
        %1426 = vmatpush1.msra.mxu0 0.0
        %1427 = vmatprep.subr.mxu0 0.0
        %1428 = vmatpush1.msra.mxu0 0.0
        %1429 = vmatprep.subr.mxu0 0.0
        %1430 = vmatpush1.msra.mxu0 0.0
        %1431 = vmatprep.subr.mxu0 0.0
        %1432 = vmatpush1.msra.mxu0 0.0
        %1433 = vmatprep.subr.mxu0 0.0
        %1434 = vmatpush1.msra.mxu0 0.0
        %1435 = vmatprep.subr.mxu0 0.0
        %1436 = vmatpush1.msra.mxu0 0.0
        %1437 = vmatprep.subr.mxu0 0.0
        %1438 = vmatpush1.msra.mxu0 0.0
        %1439 = vmatprep.subr.mxu0 0.0
        %1440 = vmatpush1.msra.mxu0 0.0
        %1441 = vmatprep.subr.mxu0 0.0
        %1442 = vmatpush1.msra.mxu0 0.0
        %1443 = vmatprep.subr.mxu0 0.0
        %1444 = vmatpush1.msra.mxu0 0.0
        %1445 = vmatprep.subr.mxu0 0.0
        %1446 = vmatpush1.msra.mxu0 0.0
        %1447 = vmatprep.subr.mxu0 0.0
        %1448 = vmatpush1.msra.mxu0 0.0
        %1449 = vmatprep.subr.mxu0 0.0
        %1450 = vmatpush1.msra.mxu0 0.0
        %1451 = vmatprep.subr.mxu0 0.0
        %1452 = vmatpush1.msra.mxu0 0.0
        %1453 = vmatprep.subr.mxu0 0.0
        %1454 = vmatpush1.msra.mxu0 0.0
        %1455 = vmatprep.subr.mxu0 0.0
        %1456 = vmatpush1.msra.mxu0 0.0
        %1457 = vmatprep.subr.mxu0 0.0
        %1458 = vmatpush1.msra.mxu0 0.0
        %1459 = vmatprep.subr.mxu0 0.0
        %1460 = vmatpush1.msra.mxu0 0.0
        %1461 = vmatprep.mubr.f32.mxu0 0.0
        %1462 = vmatmul.mubr.f32.gmra.mrb[0].mxu0 %v1395
        %v1463 = vpop.f32.mrb[0].mxu0
        %v1464 = vadd.f32 0.0, %v1463
        %v1465 = vpop.f32.mrb[0].mxu0
        %1466 = vdwg.mxu0
        %v1467 = vadd.f32 %v1384, %v1464
        %1468 = vst.msk [vmem:[#allocation3] sm:$0xff] %vm393, %v1467
        %v1469 = vld [vmem:[#allocation3] sm:$0xff]
        %v1470 = vadd.f32 %v1277, %v1469
        %v1471 = vld [vmem:[%s9] sm:$0x1]
        %v1473 = vlaneseq
        %v1474 = vshrl.u32 %v1473, 7
        %v1475 = vsub.s32 0, %v1474
        %v1476 = vrot.slane %v1471, %v1475
        %v1478 = vadd.f32 %v1470, %v1476
        %1479 = vst.msk [vmem:[%s385] sm:$0xff] %vm393, %v1478
        %s1480 = sand.u32 %s255, 1
        %s1481 = scalar_lea.sflag [#allocation6], %s1480
        %s1482 = sand.u32 %s255, 1
        %s1483 = smul.addr %s1482, 8
        %s1484 = scalar_lea.vmem [#allocation7], %s1483
        // Predicated region
        $region65: #{tpu_custom_call.1} parent=59 // pred_check
          %p1485 = pneg %p265
        $region66: #{tpu_custom_call.1} parent=59 // pred_check_branch
          %1487 = sbr.rel (%p1485) target = $region68
        $region67: #{tpu_custom_call.1} parent=59 // pred_region
          %s1489 = ssub.s32 128, 128
          %1490 = vsyncadd %s1481, %s1489
          %s1491 = smul.addr %s27, 128
          %s1492 = scalar_lea.hbm %s10, %s1491
          %s1494 = sshll.u32 %s1484, 4
          %s1495 = int_to_ptr.vmem [resolvable:$true] %s1494
          %1497 = dma.vmem_to_hbm [thread:$0]  %s1495, 128, %s1492, %s1481
        $region68: #{tpu_custom_call.1} parent=59 // pred_fallthru
          _
      $region60: #{tpu_custom_call.1} parent=5 // pred_fallthru
        _
      %p1498 = scmp.le.s32.totalorder 2, %s22
      // Predicated region
      $region69: #{tpu_custom_call.1} parent=5 // pred_check
        %p1499 = pneg %p1498
      $region70: #{tpu_custom_call.1} parent=5 // pred_check_branch
        %1501 = sbr.rel (%p1499) target = $region72
      $region71: #{tpu_custom_call.1} parent=5 // pred_region
        %s1502 = ssub.s32 %s22, 2
        // Predicated region
        $region73: #{tpu_custom_call.1} parent=71 // pred_check
          %p1503 = pneg %p271
        $region74: #{tpu_custom_call.1} parent=71 // pred_check_branch
          %1505 = sbr.rel (%p1503) target = $region76
        $region75: #{tpu_custom_call.1} parent=71 // pred_region
          %s1506 = sand.u32 %s256, 1
          %s1507 = scalar_lea.sflag [#allocation6], %s1506
          %s1508 = sand.u32 %s256, 1
          %s1509 = smul.addr %s1508, 8
          %s1510 = scalar_lea.vmem [#allocation7], %s1509
          %1511 = dma.done %s1507, 128
        $region76: #{tpu_custom_call.1} parent=71 // pred_fallthru
          _
      $region72: #{tpu_custom_call.1} parent=5 // pred_fallthru
        _
    $region6: #{tpu_custom_call.1} parent=1 // loop_footer
      %s26 = sadd.s32 1, %s22
    $region7: #{tpu_custom_call.1} parent=1 // loop_footer_branch
      %21 = sbr.rel target = $region3
    $region8: #{tpu_custom_call.1} parent=1 // loop_exit
      _
    %1512 = vsyncpa [#allocation5], 1
    %s1513 = scalar_lea.sflag [#allocation5], 1
    %1514 = vsyncpa %s1513, 1
    %1515 = vsyncpa [#allocation6], 1
    %s1516 = scalar_lea.sflag [#allocation6], 1
    %1517 = vsyncpa %s1516, 1

</llo_original>
